<compile_context>
chip_gen: v7x
topology: tpu7x:2x2x1
jax: 0.10.0
libtpu: 0.0.40
codegen_flags: <defaults>
</compile_context>

<pallas_src>
import jax
import jax.numpy as jnp
import numpy as np
from jax import lax
from jax.experimental import pallas as pl
from jax.experimental.pallas import tpu as pltpu

COORDS_WEIGHT = 1.0


# ----------------------------- Pallas kernel --------------------------------
def egcl_vel_kernel(
    # per-edge-tile index inputs
    row_g_ref, colN_g_ref, row_s_ref,
    # resident node-side inputs
    slab_ref, h_ref, coord_ext_ref, vel_ext_ref, invdeg_ref,
    # edge_mlp params (layer-1 weights were pushed through the gather; only the
    # radial column, biases and layer-2 remain — zero-extended to the fused layout)
    w1r_ref, b1_ref, w2_ref, b2_ref,
    # coord_mlp params
    wc1_ref, bc1_ref, wc2_ref,
    # coord_mlp_vel params (finalize, f32)
    wv1_ref, bv1_ref, wv2_ref, bv2_ref,
    # node_mlp params (finalize, f32)
    wn1h_ref, wn1a_ref, bn1_ref, wn2_ref, bn2_ref,
    # outputs
    h_out_ref, coord_out_ref,
    # scratch: persistent (N, Wp) f32 accumulator across edge tiles
    acc_ref,
):
    f32, bf16 = jnp.float32, jnp.bfloat16
    e = pl.program_id(0)
    n_tiles = pl.num_programs(0)

    N2, Wp = slab_ref.shape          # Wp = 3 + hidden ; N2 = 2 * N
    N = N2 // 2
    TE = row_g_ref.shape[0]

    @pl.when(e == 0)
    def _init():
        acc_ref[...] = jnp.zeros_like(acc_ref)

    # ---- fused gather + coord_diff + edge-MLP-layer-1 in ONE MXU pass ----
    # two-hot: +1 at row (first slab half, [coord | h@W1s]) and +1 at N+col
    # (second half, [-coord | h@W1t]).  Sentinel index 2N matches nothing.
    row_g = row_g_ref[...]                                    # (TE, 1) int32
    colN_g = colN_g_ref[...]                                  # (TE, 1) int32, already +N
    iota_g = lax.broadcasted_iota(jnp.int32, (TE, N2), 1)
    oh = ((iota_g == row_g) | (iota_g == colN_g)).astype(bf16)   # (TE, 2N)

    g = jnp.dot(oh, slab_ref[...], preferred_element_type=f32)   # (TE, Wp)

    lane = lax.broadcasted_iota(jnp.int32, (TE, Wp), 1)
    cmask = (lane < 3).astype(f32)
    diff_c = g * cmask                                        # coord_diff in lanes [0,3)
    radial = jnp.sum(diff_c * diff_c, axis=1, keepdims=True)  # (TE, 1)

    # edge MLP layer 1: the W1 contraction already happened inside the gather, so only
    # the radial term + bias + ReLU remain.  Lanes [0,3) hold coord garbage — harmless,
    # because w2's corresponding rows are zero.
    e1 = jnp.maximum(g + radial * w1r_ref[...] + b1_ref[...], 0.0)
    # layer 2 emits edge_feat already placed at lanes [3, Wp) of a (TE, Wp) slab
    ef_ext = jnp.maximum(
        jnp.dot(e1.astype(bf16), w2_ref[...], preferred_element_type=f32) + b2_ref[...], 0.0)

    # ---- coord MLP ----
    c1 = jnp.maximum(
        jnp.dot(ef_ext.astype(bf16), wc1_ref[...], preferred_element_type=f32) + bc1_ref[...], 0.0)
    coord_scalar = jnp.dot(c1.astype(bf16), wc2_ref[...], preferred_element_type=f32)  # (TE, 1)
    trans_ext = jnp.clip(diff_c * coord_scalar, -100.0, 100.0)    # trans in coord lanes, 0 elsewhere

    # ---- fused scatter-add: one bf16 MXU pass accumulates [trans | edge_feat] ----
    row_s = row_s_ref[...]                                    # (1, TE) int32
    iota_s = lax.broadcasted_iota(jnp.int32, (N, TE), 0)
    scat = (iota_s == row_s).astype(bf16)                     # (N, TE), sentinel 2N -> zero col
    payload = (trans_ext + ef_ext).astype(bf16)               # (TE, Wp)
    acc_ref[...] += jnp.dot(scat, payload, preferred_element_type=f32)

    # ---- node-side finalize on the last edge tile (once per call, f32) ----
    @pl.when(e == n_tiles - 1)
    def _finalize():
        agg = acc_ref[...]                                    # (N, Wp) f32
        h_f = h_ref[...]

        # coord += segment_mean(trans) * coords_weight + vel * coord_mlp_vel(h)
        v1 = jnp.maximum(
            jnp.dot(h_f, wv1_ref[...], preferred_element_type=f32) + bv1_ref[...], 0.0)
        vel_scalar = jnp.dot(v1, wv2_ref[...], preferred_element_type=f32) + bv2_ref[...]  # (N,1)
        lane_n = lax.broadcasted_iota(jnp.int32, (N, Wp), 1)
        cmask_n = (lane_n < 3).astype(f32)
        coord_out_ref[...] = (coord_ext_ref[...]
                              + (agg * cmask_n) * invdeg_ref[...] * COORDS_WEIGHT
                              + vel_ext_ref[...] * vel_scalar)

        # h = h + node_mlp([h, segment_sum(edge_feat)])   (wn1a zero-extended -> no slice)
        n1 = jnp.maximum(
            jnp.dot(h_f, wn1h_ref[...], preferred_element_type=f32)
            + jnp.dot(agg, wn1a_ref[...], preferred_element_type=f32)
            + bn1_ref[...], 0.0)
        h_out_ref[...] = h_f + jnp.dot(n1, wn2_ref[...], preferred_element_type=f32) + bn2_ref[...]


# ------------------------------- wrapper -------------------------------------
def e_gcl_vel_forward(params, h, edge_index, coord, vel, *, edge_tile=128):
    """Returns (h_out (N, out_nf), coord_out (N, 3, 1), edge_attr=None)."""
    f32, bf16 = jnp.float32, jnp.bfloat16
    row, col = edge_index
    N, nf = h.shape
    E = int(row.shape[0])
    H = params["w2"].shape[0]
    out_nf = params["wn2"].shape[1]
    Wp = 3 + H                   # fused lane layout: [ coord / trans (3) | hidden (H) ]
    # TODO(synk): for very large N the dense one-hot gather/scatter should switch to a
    # manual-DMA gather (memory_space=pl.ANY) instead of (TE, 2N) / (N, TE) one-hots.

    TE = edge_tile               # multiple of 128; 256-512 is better for large graphs
    n_tiles = int(max(1, pl.cdiv(E, TE)))
    E_pad = n_tiles * TE
    pad = E_pad - E

    # padded edges use sentinel index 2N: out of range for both halves of the fused
    # gather two-hot AND for the scatter one-hot -> they contribute exactly nothing.
    row_i = row.astype(jnp.int32)
    col_i = col.astype(jnp.int32)
    sent = jnp.full((pad,), 2 * N, jnp.int32)
    row_p = jnp.concatenate([row_i, sent])
    colN_p = jnp.concatenate([col_i + N, sent])
    row_g = row_p.reshape(E_pad, 1)      # edge-major: gather two-hot (row half)
    colN_g = colN_p.reshape(E_pad, 1)    # edge-major: gather two-hot (col half, pre-offset)
    row_s = row_p.reshape(1, E_pad)      # lane-major: scatter matrix (no in-kernel transpose)

    # node degree reciprocal precomputed outside the hot path (static function of edges)
    deg = jnp.zeros((N,), f32).at[row_i].add(1.0)
    inv_deg = (1.0 / jnp.maximum(deg, 1.0)).reshape(N, 1)

    # Push edge-MLP layer-1 through the gather: h[row] @ W1s == onehot_row @ (h @ W1s).
    # These per-node projections are E-independent, so they live here in XLA.
    A = h @ params["w1s"]                                     # (N, H)
    B = h @ params["w1t"]                                     # (N, H)
    slab = jnp.concatenate(
        [jnp.concatenate([coord, A], axis=1),                 # row half:  [ coord | h@W1s ]
         jnp.concatenate([-coord, B], axis=1)],               # col half:  [-coord | h@W1t ]
        axis=0).astype(bf16)                                  # (2N, Wp) bf16

    zero_H = jnp.zeros((N, H), f32)
    coord_ext = jnp.concatenate([coord, zero_H], axis=1)      # (N, Wp) f32
    vel_ext = jnp.concatenate([vel, zero_H], axis=1)          # (N, Wp) f32

    # zero-extended weights so fused operands feed the MLPs with no in-kernel slicing
    z13 = jnp.zeros((1, 3), f32)
    z3H = jnp.zeros((3, H), f32)
    w1r_x = jnp.concatenate([z13, params["w1r"]], axis=1)                         # (1, Wp)
    b1_x = jnp.concatenate([z13, params["b1"]], axis=1)                           # (1, Wp)
    w2_x = jnp.concatenate(
        [jnp.zeros((3, Wp), f32),
         jnp.concatenate([jnp.zeros((H, 3), f32), params["w2"]], axis=1)],
        axis=0).astype(bf16)                                                      # (Wp, Wp)
    b2_x = jnp.concatenate([z13, params["b2"]], axis=1)                           # (1, Wp)
    wc1_x = jnp.concatenate([z3H, params["wc1"]], axis=0).astype(bf16)            # (Wp, H)
    wn1a_x = jnp.concatenate([z3H, params["wn1a"]], axis=0)                       # (Wp, H) f32

    args = (
        row_g, colN_g, row_s,
        slab, h.astype(f32), coord_ext, vel_ext, inv_deg,
        w1r_x, b1_x, w2_x, b2_x,
        wc1_x, params["bc1"], params["wc2"].astype(bf16),
        params["wv1"], params["bv1"], params["wv2"], params["bv2"],
        params["wn1h"], wn1a_x, params["bn1"], params["wn2"], params["bn2"],
    )

    edge_spec_g = pl.BlockSpec((TE, 1), lambda e: (e, 0))
    edge_spec_s = pl.BlockSpec((1, TE), lambda e: (0, e))
    resident = [pl.BlockSpec(a.shape, lambda e: (0, 0)) for a in args[3:]]
    in_specs = [edge_spec_g, edge_spec_g, edge_spec_s] + resident

    # TODO(synk): add a second 'parallel' grid axis (disjoint edge halves with per-core
    # accumulators reduced in finalize) to use both v7x TensorCores.
    h_out, coord_full = pl.pallas_call(
        egcl_vel_kernel,
        out_shape=(
            jax.ShapeDtypeStruct((N, out_nf), f32),
            jax.ShapeDtypeStruct((N, Wp), f32),
        ),
        grid_spec=pltpu.PrefetchScalarGridSpec(
            num_scalar_prefetch=0,
            grid=(n_tiles,),
            in_specs=in_specs,
            out_specs=(
                pl.BlockSpec((N, out_nf), lambda e: (0, 0)),
                pl.BlockSpec((N, Wp), lambda e: (0, 0)),
            ),
            scratch_shapes=[pltpu.VMEM((N, Wp), jnp.float32)],
        ),
        compiler_params=pltpu.CompilerParams(
            dimension_semantics=("arbitrary",),        # edge axis carries the accumulator
            vmem_limit_bytes=48 * 1024 * 1024,         # below physical on all of v5e/v6e/v7x
        ),
    )(*args)

    coord_out = coord_full[:, :3]                      # cheap XLA slice, outside the kernel
    # PyTorch returns coord of shape (N, 3, num_vectors_out=1)
    return h_out, coord_out[:, :, None], None


# --------------------------- parameter init -----------------------------------
def init_params(key, input_nf, output_nf, hidden_dim):
    ks = jax.random.split(key, 16)
    s = 0.1
    p = {}
    # edge_mlp: Linear(2*nf + 1, H), ReLU, Linear(H, H), ReLU
    p["w1s"] = jax.random.normal(ks[0], (input_nf, hidden_dim), jnp.float32) * s
    p["w1t"] = jax.random.normal(ks[1], (input_nf, hidden_dim), jnp.float32) * s
    p["w1r"] = jax.random.normal(ks[2], (1, hidden_dim), jnp.float32) * s
    p["b1"] = jax.random.normal(ks[3], (1, hidden_dim), jnp.float32) * s
    p["w2"] = jax.random.normal(ks[4], (hidden_dim, hidden_dim), jnp.float32) * s
    p["b2"] = jax.random.normal(ks[5], (1, hidden_dim), jnp.float32) * s
    # coord_mlp: Linear(H, H), ReLU, Linear(H, 1, bias=False) (xavier, gain=0.001)
    p["wc1"] = jax.random.normal(ks[6], (hidden_dim, hidden_dim), jnp.float32) * s
    p["bc1"] = jax.random.normal(ks[7], (1, hidden_dim), jnp.float32) * s
    xav = 0.001 * np.sqrt(6.0 / (hidden_dim + 1))
    p["wc2"] = jax.random.uniform(ks[8], (hidden_dim, 1), jnp.float32, -xav, xav)
    # coord_mlp_vel: Linear(nf, H), ReLU, Linear(H, 1)
    p["wv1"] = jax.random.normal(ks[9], (input_nf, hidden_dim), jnp.float32) * s
    p["bv1"] = jax.random.normal(ks[10], (1, hidden_dim), jnp.float32) * s
    p["wv2"] = jax.random.normal(ks[11], (hidden_dim, 1), jnp.float32) * s
    p["bv2"] = jax.random.normal(ks[12], (1, 1), jnp.float32) * s
    # node_mlp: Linear(H + nf, H), ReLU, Linear(H, out_nf)
    p["wn1h"] = jax.random.normal(ks[13], (input_nf, hidden_dim), jnp.float32) * s
    p["wn1a"] = jax.random.normal(ks[14], (hidden_dim, hidden_dim), jnp.float32) * s
    p["bn1"] = jnp.zeros((1, hidden_dim), jnp.float32)
    p["wn2"] = jax.random.normal(ks[15], (hidden_dim, output_nf), jnp.float32) * s
    p["bn2"] = jnp.zeros((1, output_nf), jnp.float32)
    return p


# -------------------------- pure-JAX f32 reference ----------------------------
def ref_forward(params, h, edge_index, coord, vel):
    row, col = edge_index
    N = h.shape[0]
    coord_diff = coord[row] - coord[col]
    radial = jnp.sum(coord_diff ** 2, axis=1, keepdims=True)
    src, tgt = h[row], h[col]
    e1 = jax.nn.relu(src @ params["w1s"] + tgt @ params["w1t"]
                     + radial * params["w1r"] + params["b1"])
    edge_feat = jax.nn.relu(e1 @ params["w2"] + params["b2"])
    c1 = jax.nn.relu(edge_feat @ params["wc1"] + params["bc1"])
    coord_scalar = c1 @ params["wc2"]
    trans = jnp.clip(coord_diff * coord_scalar, -100.0, 100.0)
    agg_sum = jnp.zeros((N, 3), jnp.float32).at[row].add(trans)
    counts = jnp.zeros((N, 1), jnp.float32).at[row].add(jnp.ones((row.shape[0], 1)))
    agg_mean = agg_sum / jnp.maximum(counts, 1.0)
    coord_new = coord + agg_mean * COORDS_WEIGHT
    v1 = jax.nn.relu(h @ params["wv1"] + params["bv1"])
    vel_scalar = v1 @ params["wv2"] + params["bv2"]
    coord_new = coord_new + vel * vel_scalar
    agg_edge = jnp.zeros((N, edge_feat.shape[1]), jnp.float32).at[row].add(edge_feat)
    n1 = jax.nn.relu(h @ params["wn1h"] + agg_edge @ params["wn1a"] + params["bn1"])
    h_out = h + (n1 @ params["wn2"] + params["bn2"])
    return h_out, coord_new[:, :, None]


# --------------------------------- main ---------------------------------------
if __name__ == "__main__":
    input_nf = output_nf = hidden_dim = 32
    n_nodes = 16  # fully connected -> E = 240 edges -> 2 edge tiles of 128 (16 padded edges)

    key = jax.random.PRNGKey(0)
    kp, kh, kc, kv = jax.random.split(key, 4)
    params = init_params(kp, input_nf, output_nf, hidden_dim)

    h = jax.random.normal(kh, (n_nodes, input_nf), jnp.float32)
    coord = jax.random.normal(kc, (n_nodes, 3), jnp.float32)
    vel = jax.random.normal(kv, (n_nodes, 3), jnp.float32)

    rows, cols = [], []
    for i in range(n_nodes):
        for j in range(n_nodes):
            if i != j:
                rows.append(i)
                cols.append(j)
    row = jnp.asarray(rows, jnp.int32)
    col = jnp.asarray(cols, jnp.int32)
    edge_index = (row, col)

    fwd = jax.jit(e_gcl_vel_forward)
    h_out, coord_out, _ = fwd(params, h, edge_index, coord, vel)
    jax.block_until_ready((h_out, coord_out))

    h_ref, coord_ref = ref_forward(params, h, edge_index, coord, vel)
    # The hot path (gather/scatter + edge/coord MLPs) runs on the bf16 MXU with f32
    # accumulation, so compare against the f32 reference at bf16-appropriate tolerance.
    np.testing.assert_allclose(np.asarray(h_out), np.asarray(h_ref), rtol=3e-2, atol=3e-2)
    np.testing.assert_allclose(np.asarray(coord_out), np.asarray(coord_ref), rtol=1e-3, atol=1e-3)

    print("KERNEL_OK")
</pallas_src>

<mosaic_0001>
module attributes {stable_mosaic.version = 11 : i64} {
  func.func private @main(%arg0: i32) attributes {dimension_semantics = [#tpu.dimension_semantics<core_parallel>], iteration_bounds = array<i64: 2>, tpu.core_type = #tpu.core_type<sc_scalar_subcore>, window_params = []} {
    return
  }
}

module attributes {stable_mosaic.version = 11 : i64} {
  func.func private @main(%arg0: i32) attributes {dimension_semantics = [#tpu.dimension_semantics<core_parallel>], iteration_bounds = array<i64: 2>, tpu.core_type = #tpu.core_type<sc_scalar_subcore>, window_params = []} {
    return
  }
}

module attributes {stable_mosaic.version = 11 : i64} {
  func.func @egcl_vel_kernel(%arg0: i32, %arg1: memref<128x1xi32, #tpu.memory_space<vmem>>, %arg2: memref<128x1xi32, #tpu.memory_space<vmem>>, %arg3: memref<1x128xi32, #tpu.memory_space<vmem>>, %arg4: memref<32x35xbf16, #tpu.memory_space<vmem>>, %arg5: memref<16x32xf32, #tpu.memory_space<vmem>>, %arg6: memref<16x35xf32, #tpu.memory_space<vmem>>, %arg7: memref<16x35xf32, #tpu.memory_space<vmem>>, %arg8: memref<16x1xf32, #tpu.memory_space<vmem>>, %arg9: memref<1x35xf32, #tpu.memory_space<vmem>>, %arg10: memref<1x35xf32, #tpu.memory_space<vmem>>, %arg11: memref<35x35xbf16, #tpu.memory_space<vmem>>, %arg12: memref<1x35xf32, #tpu.memory_space<vmem>>, %arg13: memref<35x32xbf16, #tpu.memory_space<vmem>>, %arg14: memref<1x32xf32, #tpu.memory_space<vmem>>, %arg15: memref<32x1xbf16, #tpu.memory_space<vmem>>, %arg16: memref<32x32xf32, #tpu.memory_space<vmem>>, %arg17: memref<1x32xf32, #tpu.memory_space<vmem>>, %arg18: memref<32x1xf32, #tpu.memory_space<vmem>>, %arg19: memref<1x1xf32, #tpu.memory_space<vmem>>, %arg20: memref<32x32xf32, #tpu.memory_space<vmem>>, %arg21: memref<35x32xf32, #tpu.memory_space<vmem>>, %arg22: memref<1x32xf32, #tpu.memory_space<vmem>>, %arg23: memref<32x32xf32, #tpu.memory_space<vmem>>, %arg24: memref<1x32xf32, #tpu.memory_space<vmem>>, %arg25: memref<16x32xf32, #tpu.memory_space<vmem>>, %arg26: memref<16x35xf32, #tpu.memory_space<vmem>>, %arg27: memref<16x35xf32, #tpu.memory_space<vmem>>) attributes {dimension_semantics = [#tpu.dimension_semantics<arbitrary>], iteration_bounds = array<i64: 2>, scalar_prefetch = 0 : i64, scratch_operands = 1 : i64, tpu.core_type = #tpu.core_type<tc>, window_params = [{transform_indices = @transform_0, window_bounds = array<i64: 128, 1>}, {transform_indices = @transform_1, window_bounds = array<i64: 128, 1>}, {transform_indices = @transform_2, window_bounds = array<i64: 1, 128>}, {pipeline_mode = #tpu.pipeline_mode<synchronous>, transform_indices = @transform_3, window_bounds = array<i64: 32, 35>}, {pipeline_mode = #tpu.pipeline_mode<synchronous>, transform_indices = @transform_4, window_bounds = array<i64: 16, 32>}, {pipeline_mode = #tpu.pipeline_mode<synchronous>, transform_indices = @transform_5, window_bounds = array<i64: 16, 35>}, {pipeline_mode = #tpu.pipeline_mode<synchronous>, transform_indices = @transform_6, window_bounds = array<i64: 16, 35>}, {pipeline_mode = #tpu.pipeline_mode<synchronous>, transform_indices = @transform_7, window_bounds = array<i64: 16, 1>}, {pipeline_mode = #tpu.pipeline_mode<synchronous>, transform_indices = @transform_8, window_bounds = array<i64: 1, 35>}, {pipeline_mode = #tpu.pipeline_mode<synchronous>, transform_indices = @transform_9, window_bounds = array<i64: 1, 35>}, {pipeline_mode = #tpu.pipeline_mode<synchronous>, transform_indices = @transform_10, window_bounds = array<i64: 35, 35>}, {pipeline_mode = #tpu.pipeline_mode<synchronous>, transform_indices = @transform_11, window_bounds = array<i64: 1, 35>}, {pipeline_mode = #tpu.pipeline_mode<synchronous>, transform_indices = @transform_12, window_bounds = array<i64: 35, 32>}, {pipeline_mode = #tpu.pipeline_mode<synchronous>, transform_indices = @transform_13, window_bounds = array<i64: 1, 32>}, {pipeline_mode = #tpu.pipeline_mode<synchronous>, transform_indices = @transform_14, window_bounds = array<i64: 32, 1>}, {pipeline_mode = #tpu.pipeline_mode<synchronous>, transform_indices = @transform_15, window_bounds = array<i64: 32, 32>}, {pipeline_mode = #tpu.pipeline_mode<synchronous>, transform_indices = @transform_16, window_bounds = array<i64: 1, 32>}, {pipeline_mode = #tpu.pipeline_mode<synchronous>, transform_indices = @transform_17, window_bounds = array<i64: 32, 1>}, {pipeline_mode = #tpu.pipeline_mode<synchronous>, transform_indices = @transform_18, window_bounds = array<i64: 1, 1>}, {pipeline_mode = #tpu.pipeline_mode<synchronous>, transform_indices = @transform_19, window_bounds = array<i64: 32, 32>}, {pipeline_mode = #tpu.pipeline_mode<synchronous>, transform_indices = @transform_20, window_bounds = array<i64: 35, 32>}, {pipeline_mode = #tpu.pipeline_mode<synchronous>, transform_indices = @transform_21, window_bounds = array<i64: 1, 32>}, {pipeline_mode = #tpu.pipeline_mode<synchronous>, transform_indices = @transform_22, window_bounds = array<i64: 32, 32>}, {pipeline_mode = #tpu.pipeline_mode<synchronous>, transform_indices = @transform_23, window_bounds = array<i64: 1, 32>}, {pipeline_mode = #tpu.pipeline_mode<synchronous>, transform_indices = @transform_24, window_bounds = array<i64: 16, 32>}, {pipeline_mode = #tpu.pipeline_mode<synchronous>, transform_indices = @transform_25, window_bounds = array<i64: 16, 35>}]} {
    %c0_i32 = arith.constant 0 : i32
    %0 = arith.cmpi eq, %arg0, %c0_i32 : i32
    %1 = arith.extui %0 : i1 to i32
    %c0_i32_0 = arith.constant 0 : i32
    %2 = arith.cmpi ne, %1, %c0_i32_0 : i32
    scf.if %2 {
      %cst_37 = arith.constant 0.000000e+00 : f32
      %76 = vector.broadcast %cst_37 : f32 to vector<16x35xf32>
      %c0_38 = arith.constant 0 : index
      %c0_39 = arith.constant 0 : index
      %77 = vector.load %arg27[%c0_38, %c0_39] : memref<16x35xf32, #tpu.memory_space<vmem>>, vector<16x35xf32>
      tpu.vector_store %arg27[%c0_38, %c0_39], %76 {strides = array<i32>} : memref<16x35xf32, #tpu.memory_space<vmem>>, vector<16x35xf32>,
    } else {
    }
    %c0 = arith.constant 0 : index
    %c0_1 = arith.constant 0 : index
    %3 = vector.load %arg1[%c0, %c0_1] : memref<128x1xi32, #tpu.memory_space<vmem>>, vector<128x1xi32>
    %c0_2 = arith.constant 0 : index
    %c0_3 = arith.constant 0 : index
    %4 = vector.load %arg2[%c0_2, %c0_3] : memref<128x1xi32, #tpu.memory_space<vmem>>, vector<128x1xi32>
    %5 = tpu.iota {dimensions = array<i32: 1>} : vector<128x32xi32>
    %6 = vector.broadcast %3 : vector<128x1xi32> to vector<128x32xi32>
    %7 = arith.cmpi eq, %5, %6 : vector<128x32xi32>
    %8 = vector.broadcast %4 : vector<128x1xi32> to vector<128x32xi32>
    %9 = arith.cmpi eq, %5, %8 : vector<128x32xi32>
    %10 = arith.ori %7, %9 : vector<128x32xi1>
    %11 = arith.extui %10 : vector<128x32xi1> to vector<128x32xi32>
    %12 = arith.sitofp %11 : vector<128x32xi32> to vector<128x32xf32>
    %13 = arith.truncf %12 : vector<128x32xf32> to vector<128x32xbf16>
    %c0_4 = arith.constant 0 : index
    %c0_5 = arith.constant 0 : index
    %14 = vector.load %arg4[%c0_4, %c0_5] : memref<32x35xbf16, #tpu.memory_space<vmem>>, vector<32x35xbf16>
    %cst = arith.constant dense<0.000000e+00> : vector<128x35xf32>
    %15 = tpu.matmul %13, %14, %cst {dimension_numbers = #tpu.dot_dimension_numbers<[1], [0], [0], [1], [0, 0, 1, 1], [], []>} : vector<128x32xbf16>, vector<32x35xbf16>, vector<128x35xf32> -> vector<128x35xf32>
    %16 = tpu.iota {dimensions = array<i32: 1>} : vector<128x35xi32>
    %c3_i32 = arith.constant 3 : i32
    %17 = vector.broadcast %c3_i32 : i32 to vector<128x35xi32>
    %18 = arith.cmpi slt, %16, %17 : vector<128x35xi32>
    %19 = arith.extui %18 : vector<128x35xi1> to vector<128x35xi32>
    %20 = arith.sitofp %19 : vector<128x35xi32> to vector<128x35xf32>
    %21 = arith.mulf %15, %20 : vector<128x35xf32>
    %22 = arith.mulf %21, %21 : vector<128x35xf32>
    %cst_6 = arith.constant dense<0.000000e+00> : vector<128xf32>
    %23 = vector.multi_reduction <add>, %22, %cst_6 [1] : vector<128x35xf32> to vector<128xf32>
    %24 = vector.shape_cast %23 : vector<128xf32> to vector<128x1xf32>
    %c0_7 = arith.constant 0 : index
    %c0_8 = arith.constant 0 : index
    %25 = vector.load %arg9[%c0_7, %c0_8] : memref<1x35xf32, #tpu.memory_space<vmem>>, vector<1x35xf32>
    %26 = vector.broadcast %24 : vector<128x1xf32> to vector<128x35xf32>
    %27 = vector.broadcast %25 : vector<1x35xf32> to vector<128x35xf32>
    %28 = arith.mulf %26, %27 : vector<128x35xf32>
    %29 = arith.addf %15, %28 : vector<128x35xf32>
    %c0_9 = arith.constant 0 : index
    %c0_10 = arith.constant 0 : index
    %30 = vector.load %arg10[%c0_9, %c0_10] : memref<1x35xf32, #tpu.memory_space<vmem>>, vector<1x35xf32>
    %31 = vector.broadcast %30 : vector<1x35xf32> to vector<128x35xf32>
    %32 = arith.addf %29, %31 : vector<128x35xf32>
    %cst_11 = arith.constant 0.000000e+00 : f32
    %33 = vector.broadcast %cst_11 : f32 to vector<128x35xf32>
    %34 = arith.maximumf %32, %33 : vector<128x35xf32>
    %35 = arith.truncf %34 : vector<128x35xf32> to vector<128x35xbf16>
    %c0_12 = arith.constant 0 : index
    %c0_13 = arith.constant 0 : index
    %36 = vector.load %arg11[%c0_12, %c0_13] : memref<35x35xbf16, #tpu.memory_space<vmem>>, vector<35x35xbf16>
    %cst_14 = arith.constant dense<0.000000e+00> : vector<128x35xf32>
    %37 = tpu.matmul %35, %36, %cst_14 {dimension_numbers = #tpu.dot_dimension_numbers<[1], [0], [0], [1], [0, 0, 1, 1], [], []>} : vector<128x35xbf16>, vector<35x35xbf16>, vector<128x35xf32> -> vector<128x35xf32>
    %c0_15 = arith.constant 0 : index
    %c0_16 = arith.constant 0 : index
    %38 = vector.load %arg12[%c0_15, %c0_16] : memref<1x35xf32, #tpu.memory_space<vmem>>, vector<1x35xf32>
    %39 = vector.broadcast %38 : vector<1x35xf32> to vector<128x35xf32>
    %40 = arith.addf %37, %39 : vector<128x35xf32>
    %cst_17 = arith.constant 0.000000e+00 : f32
    %41 = vector.broadcast %cst_17 : f32 to vector<128x35xf32>
    %42 = arith.maximumf %40, %41 : vector<128x35xf32>
    %43 = arith.truncf %42 : vector<128x35xf32> to vector<128x35xbf16>
    %c0_18 = arith.constant 0 : index
    %c0_19 = arith.constant 0 : index
    %44 = vector.load %arg13[%c0_18, %c0_19] : memref<35x32xbf16, #tpu.memory_space<vmem>>, vector<35x32xbf16>
    %cst_20 = arith.constant dense<0.000000e+00> : vector<128x32xf32>
    %45 = tpu.matmul %43, %44, %cst_20 {dimension_numbers = #tpu.dot_dimension_numbers<[1], [0], [0], [1], [0, 0, 1, 1], [], []>} : vector<128x35xbf16>, vector<35x32xbf16>, vector<128x32xf32> -> vector<128x32xf32>
    %c0_21 = arith.constant 0 : index
    %c0_22 = arith.constant 0 : index
    %46 = vector.load %arg14[%c0_21, %c0_22] : memref<1x32xf32, #tpu.memory_space<vmem>>, vector<1x32xf32>
    %47 = vector.broadcast %46 : vector<1x32xf32> to vector<128x32xf32>
    %48 = arith.addf %45, %47 : vector<128x32xf32>
    %cst_23 = arith.constant 0.000000e+00 : f32
    %49 = vector.broadcast %cst_23 : f32 to vector<128x32xf32>
    %50 = arith.maximumf %48, %49 : vector<128x32xf32>
    %51 = arith.truncf %50 : vector<128x32xf32> to vector<128x32xbf16>
    %c0_24 = arith.constant 0 : index
    %c0_25 = arith.constant 0 : index
    %52 = vector.load %arg15[%c0_24, %c0_25] : memref<32x1xbf16, #tpu.memory_space<vmem>>, vector<32x1xbf16>
    %cst_26 = arith.constant dense<0.000000e+00> : vector<128x1xf32>
    %53 = tpu.matmul %51, %52, %cst_26 {dimension_numbers = #tpu.dot_dimension_numbers<[1], [0], [0], [1], [0, 0, 1, 1], [], []>} : vector<128x32xbf16>, vector<32x1xbf16>, vector<128x1xf32> -> vector<128x1xf32>
    %54 = vector.broadcast %53 : vector<128x1xf32> to vector<128x35xf32>
    %55 = arith.mulf %21, %54 : vector<128x35xf32>
    %cst_27 = arith.constant -1.000000e+02 : f32
    %cst_28 = arith.constant 1.000000e+02 : f32
    %56 = vector.broadcast %cst_27 : f32 to vector<128x35xf32>
    %57 = arith.maximumf %56, %55 : vector<128x35xf32>
    %58 = vector.broadcast %cst_28 : f32 to vector<128x35xf32>
    %59 = arith.minimumf %58, %57 : vector<128x35xf32>
    %c0_29 = arith.constant 0 : index
    %c0_30 = arith.constant 0 : index
    %60 = vector.load %arg3[%c0_29, %c0_30] : memref<1x128xi32, #tpu.memory_space<vmem>>, vector<1x128xi32>
    %61 = tpu.iota {dimensions = array<i32: 0>} : vector<16x128xi32>
    %62 = vector.broadcast %60 : vector<1x128xi32> to vector<16x128xi32>
    %63 = arith.cmpi eq, %61, %62 : vector<16x128xi32>
    %64 = arith.extui %63 : vector<16x128xi1> to vector<16x128xi32>
    %65 = arith.sitofp %64 : vector<16x128xi32> to vector<16x128xf32>
    %66 = arith.truncf %65 : vector<16x128xf32> to vector<16x128xbf16>
    %67 = arith.addf %59, %42 : vector<128x35xf32>
    %68 = arith.truncf %67 : vector<128x35xf32> to vector<128x35xbf16>
    %c0_31 = arith.constant 0 : index
    %c0_32 = arith.constant 0 : index
    %69 = vector.load %arg27[%c0_31, %c0_32] : memref<16x35xf32, #tpu.memory_space<vmem>>, vector<16x35xf32>
    %cst_33 = arith.constant dense<0.000000e+00> : vector<16x35xf32>
    %70 = tpu.matmul %66, %68, %cst_33 {dimension_numbers = #tpu.dot_dimension_numbers<[1], [0], [0], [1], [0, 0, 1, 1], [], []>} : vector<16x128xbf16>, vector<128x35xbf16>, vector<16x35xf32> -> vector<16x35xf32>
    %71 = arith.addf %69, %70 : vector<16x35xf32>
    %c0_34 = arith.constant 0 : index
    %c0_35 = arith.constant 0 : index
    %72 = vector.load %arg27[%c0_34, %c0_35] : memref<16x35xf32, #tpu.memory_space<vmem>>, vector<16x35xf32>
    tpu.vector_store %arg27[%c0_34, %c0_35], %71 {strides = array<i32>} : memref<16x35xf32, #tpu.memory_space<vmem>>, vector<16x35xf32>,
    %c1_i32 = arith.constant 1 : i32
    %73 = arith.cmpi eq, %arg0, %c1_i32 : i32
    %74 = arith.extui %73 : i1 to i32
    %c0_i32_36 = arith.constant 0 : i32
    %75 = arith.cmpi ne, %74, %c0_i32_36 : i32
    scf.if %75 {
      %c0_37 = arith.constant 0 : index
      %c0_38 = arith.constant 0 : index
      %76 = vector.load %arg27[%c0_37, %c0_38] : memref<16x35xf32, #tpu.memory_space<vmem>>, vector<16x35xf32>
      %c0_39 = arith.constant 0 : index
      %c0_40 = arith.constant 0 : index
      %77 = vector.load %arg5[%c0_39, %c0_40] : memref<16x32xf32, #tpu.memory_space<vmem>>, vector<16x32xf32>
      %c0_41 = arith.constant 0 : index
      %c0_42 = arith.constant 0 : index
      %78 = vector.load %arg16[%c0_41, %c0_42] : memref<32x32xf32, #tpu.memory_space<vmem>>, vector<32x32xf32>
      %cst_43 = arith.constant dense<0.000000e+00> : vector<16x32xf32>
      %79 = tpu.matmul %77, %78, %cst_43 {dimension_numbers = #tpu.dot_dimension_numbers<[1], [0], [0], [1], [0, 0, 1, 1], [], []>} : vector<16x32xf32>, vector<32x32xf32>, vector<16x32xf32> -> vector<16x32xf32>
      %c0_44 = arith.constant 0 : index
      %c0_45 = arith.constant 0 : index
      %80 = vector.load %arg17[%c0_44, %c0_45] : memref<1x32xf32, #tpu.memory_space<vmem>>, vector<1x32xf32>
      %81 = vector.broadcast %80 : vector<1x32xf32> to vector<16x32xf32>
      %82 = arith.addf %79, %81 : vector<16x32xf32>
      %cst_46 = arith.constant 0.000000e+00 : f32
      %83 = vector.broadcast %cst_46 : f32 to vector<16x32xf32>
      %84 = arith.maximumf %82, %83 : vector<16x32xf32>
      %c0_47 = arith.constant 0 : index
      %c0_48 = arith.constant 0 : index
      %85 = vector.load %arg18[%c0_47, %c0_48] : memref<32x1xf32, #tpu.memory_space<vmem>>, vector<32x1xf32>
      %cst_49 = arith.constant dense<0.000000e+00> : vector<16x1xf32>
      %86 = tpu.matmul %84, %85, %cst_49 {dimension_numbers = #tpu.dot_dimension_numbers<[1], [0], [0], [1], [0, 0, 1, 1], [], []>} : vector<16x32xf32>, vector<32x1xf32>, vector<16x1xf32> -> vector<16x1xf32>
      %c0_50 = arith.constant 0 : index
      %c0_51 = arith.constant 0 : index
      %87 = vector.load %arg19[%c0_50, %c0_51] : memref<1x1xf32, #tpu.memory_space<vmem>>, vector<1x1xf32>
      %88 = vector.broadcast %87 : vector<1x1xf32> to vector<16x1xf32>
      %89 = arith.addf %86, %88 : vector<16x1xf32>
      %90 = tpu.iota {dimensions = array<i32: 1>} : vector<16x35xi32>
      %c3_i32_52 = arith.constant 3 : i32
      %91 = vector.broadcast %c3_i32_52 : i32 to vector<16x35xi32>
      %92 = arith.cmpi slt, %90, %91 : vector<16x35xi32>
      %93 = arith.extui %92 : vector<16x35xi1> to vector<16x35xi32>
      %94 = arith.sitofp %93 : vector<16x35xi32> to vector<16x35xf32>
      %c0_53 = arith.constant 0 : index
      %c0_54 = arith.constant 0 : index
      %95 = vector.load %arg6[%c0_53, %c0_54] : memref<16x35xf32, #tpu.memory_space<vmem>>, vector<16x35xf32>
      %96 = arith.mulf %76, %94 : vector<16x35xf32>
      %c0_55 = arith.constant 0 : index
      %c0_56 = arith.constant 0 : index
      %97 = vector.load %arg8[%c0_55, %c0_56] : memref<16x1xf32, #tpu.memory_space<vmem>>, vector<16x1xf32>
      %98 = vector.broadcast %97 : vector<16x1xf32> to vector<16x35xf32>
      %99 = arith.mulf %96, %98 : vector<16x35xf32>
      %cst_57 = arith.constant 1.000000e+00 : f32
      %100 = vector.broadcast %cst_57 : f32 to vector<16x35xf32>
      %101 = arith.mulf %99, %100 : vector<16x35xf32>
      %102 = arith.addf %95, %101 : vector<16x35xf32>
      %c0_58 = arith.constant 0 : index
      %c0_59 = arith.constant 0 : index
      %103 = vector.load %arg7[%c0_58, %c0_59] : memref<16x35xf32, #tpu.memory_space<vmem>>, vector<16x35xf32>
      %104 = vector.broadcast %89 : vector<16x1xf32> to vector<16x35xf32>
      %105 = arith.mulf %103, %104 : vector<16x35xf32>
      %106 = arith.addf %102, %105 : vector<16x35xf32>
      %c0_60 = arith.constant 0 : index
      %c0_61 = arith.constant 0 : index
      %107 = vector.load %arg26[%c0_60, %c0_61] : memref<16x35xf32, #tpu.memory_space<vmem>>, vector<16x35xf32>
      tpu.vector_store %arg26[%c0_60, %c0_61], %106 {strides = array<i32>} : memref<16x35xf32, #tpu.memory_space<vmem>>, vector<16x35xf32>,
      %c0_62 = arith.constant 0 : index
      %c0_63 = arith.constant 0 : index
      %108 = vector.load %arg20[%c0_62, %c0_63] : memref<32x32xf32, #tpu.memory_space<vmem>>, vector<32x32xf32>
      %cst_64 = arith.constant dense<0.000000e+00> : vector<16x32xf32>
      %109 = tpu.matmul %77, %108, %cst_64 {dimension_numbers = #tpu.dot_dimension_numbers<[1], [0], [0], [1], [0, 0, 1, 1], [], []>} : vector<16x32xf32>, vector<32x32xf32>, vector<16x32xf32> -> vector<16x32xf32>
      %c0_65 = arith.constant 0 : index
      %c0_66 = arith.constant 0 : index
      %110 = vector.load %arg21[%c0_65, %c0_66] : memref<35x32xf32, #tpu.memory_space<vmem>>, vector<35x32xf32>
      %cst_67 = arith.constant dense<0.000000e+00> : vector<16x32xf32>
      %111 = tpu.matmul %76, %110, %cst_67 {dimension_numbers = #tpu.dot_dimension_numbers<[1], [0], [0], [1], [0, 0, 1, 1], [], []>} : vector<16x35xf32>, vector<35x32xf32>, vector<16x32xf32> -> vector<16x32xf32>
      %112 = arith.addf %109, %111 : vector<16x32xf32>
      %c0_68 = arith.constant 0 : index
      %c0_69 = arith.constant 0 : index
      %113 = vector.load %arg22[%c0_68, %c0_69] : memref<1x32xf32, #tpu.memory_space<vmem>>, vector<1x32xf32>
      %114 = vector.broadcast %113 : vector<1x32xf32> to vector<16x32xf32>
      %115 = arith.addf %112, %114 : vector<16x32xf32>
      %cst_70 = arith.constant 0.000000e+00 : f32
      %116 = vector.broadcast %cst_70 : f32 to vector<16x32xf32>
      %117 = arith.maximumf %115, %116 : vector<16x32xf32>
      %c0_71 = arith.constant 0 : index
      %c0_72 = arith.constant 0 : index
      %118 = vector.load %arg23[%c0_71, %c0_72] : memref<32x32xf32, #tpu.memory_space<vmem>>, vector<32x32xf32>
      %cst_73 = arith.constant dense<0.000000e+00> : vector<16x32xf32>
      %119 = tpu.matmul %117, %118, %cst_73 {dimension_numbers = #tpu.dot_dimension_numbers<[1], [0], [0], [1], [0, 0, 1, 1], [], []>} : vector<16x32xf32>, vector<32x32xf32>, vector<16x32xf32> -> vector<16x32xf32>
      %120 = arith.addf %77, %119 : vector<16x32xf32>
      %c0_74 = arith.constant 0 : index
      %c0_75 = arith.constant 0 : index
      %121 = vector.load %arg24[%c0_74, %c0_75] : memref<1x32xf32, #tpu.memory_space<vmem>>, vector<1x32xf32>
      %122 = vector.broadcast %121 : vector<1x32xf32> to vector<16x32xf32>
      %123 = arith.addf %120, %122 : vector<16x32xf32>
      %c0_76 = arith.constant 0 : index
      %c0_77 = arith.constant 0 : index
      %124 = vector.load %arg25[%c0_76, %c0_77] : memref<16x32xf32, #tpu.memory_space<vmem>>, vector<16x32xf32>
      tpu.vector_store %arg25[%c0_76, %c0_77], %123 {strides = array<i32>} : memref<16x32xf32, #tpu.memory_space<vmem>>, vector<16x32xf32>,
    } else {
    }
    return
  }
  func.func @transform_0(%arg0: i32) -> (i32, i32) {
    %c0_i32 = arith.constant 0 : i32
    %c0_i32_0 = arith.constant 0 : i32
    return %arg0, %c0_i32 : i32, i32
  }
  func.func @transform_1(%arg0: i32) -> (i32, i32) {
    %c0_i32 = arith.constant 0 : i32
    %c0_i32_0 = arith.constant 0 : i32
    return %arg0, %c0_i32 : i32, i32
  }
  func.func @transform_2(%arg0: i32) -> (i32, i32) {
    %c0_i32 = arith.constant 0 : i32
    %c0_i32_0 = arith.constant 0 : i32
    return %c0_i32, %arg0 : i32, i32
  }
  func.func @transform_3(%arg0: i32) -> (i32, i32) {
    %c0_i32 = arith.constant 0 : i32
    %c0_i32_0 = arith.constant 0 : i32
    %c0_i32_1 = arith.constant 0 : i32
    return %c0_i32, %c0_i32_0 : i32, i32
  }
  func.func @transform_4(%arg0: i32) -> (i32, i32) {
    %c0_i32 = arith.constant 0 : i32
    %c0_i32_0 = arith.constant 0 : i32
    %c0_i32_1 = arith.constant 0 : i32
    return %c0_i32, %c0_i32_0 : i32, i32
  }
  func.func @transform_5(%arg0: i32) -> (i32, i32) {
    %c0_i32 = arith.constant 0 : i32
    %c0_i32_0 = arith.constant 0 : i32
    %c0_i32_1 = arith.constant 0 : i32
    return %c0_i32, %c0_i32_0 : i32, i32
  }
  func.func @transform_6(%arg0: i32) -> (i32, i32) {
    %c0_i32 = arith.constant 0 : i32
    %c0_i32_0 = arith.constant 0 : i32
    %c0_i32_1 = arith.constant 0 : i32
    return %c0_i32, %c0_i32_0 : i32, i32
  }
  func.func @transform_7(%arg0: i32) -> (i32, i32) {
    %c0_i32 = arith.constant 0 : i32
    %c0_i32_0 = arith.constant 0 : i32
    %c0_i32_1 = arith.constant 0 : i32
    return %c0_i32, %c0_i32_0 : i32, i32
  }
  func.func @transform_8(%arg0: i32) -> (i32, i32) {
    %c0_i32 = arith.constant 0 : i32
    %c0_i32_0 = arith.constant 0 : i32
    %c0_i32_1 = arith.constant 0 : i32
    return %c0_i32, %c0_i32_0 : i32, i32
  }
  func.func @transform_9(%arg0: i32) -> (i32, i32) {
    %c0_i32 = arith.constant 0 : i32
    %c0_i32_0 = arith.constant 0 : i32
    %c0_i32_1 = arith.constant 0 : i32
    return %c0_i32, %c0_i32_0 : i32, i32
  }
  func.func @transform_10(%arg0: i32) -> (i32, i32) {
    %c0_i32 = arith.constant 0 : i32
    %c0_i32_0 = arith.constant 0 : i32
    %c0_i32_1 = arith.constant 0 : i32
    return %c0_i32, %c0_i32_0 : i32, i32
  }
  func.func @transform_11(%arg0: i32) -> (i32, i32) {
    %c0_i32 = arith.constant 0 : i32
    %c0_i32_0 = arith.constant 0 : i32
    %c0_i32_1 = arith.constant 0 : i32
    return %c0_i32, %c0_i32_0 : i32, i32
  }
  func.func @transform_12(%arg0: i32) -> (i32, i32) {
    %c0_i32 = arith.constant 0 : i32
    %c0_i32_0 = arith.constant 0 : i32
    %c0_i32_1 = arith.constant 0 : i32
    return %c0_i32, %c0_i32_0 : i32, i32
  }
  func.func @transform_13(%arg0: i32) -> (i32, i32) {
    %c0_i32 = arith.constant 0 : i32
    %c0_i32_0 = arith.constant 0 : i32
    %c0_i32_1 = arith.constant 0 : i32
    return %c0_i32, %c0_i32_0 : i32, i32
  }
  func.func @transform_14(%arg0: i32) -> (i32, i32) {
    %c0_i32 = arith.constant 0 : i32
    %c0_i32_0 = arith.constant 0 : i32
    %c0_i32_1 = arith.constant 0 : i32
    return %c0_i32, %c0_i32_0 : i32, i32
  }
  func.func @transform_15(%arg0: i32) -> (i32, i32) {
    %c0_i32 = arith.constant 0 : i32
    %c0_i32_0 = arith.constant 0 : i32
    %c0_i32_1 = arith.constant 0 : i32
    return %c0_i32, %c0_i32_0 : i32, i32
  }
  func.func @transform_16(%arg0: i32) -> (i32, i32) {
    %c0_i32 = arith.constant 0 : i32
    %c0_i32_0 = arith.constant 0 : i32
    %c0_i32_1 = arith.constant 0 : i32
    return %c0_i32, %c0_i32_0 : i32, i32
  }
  func.func @transform_17(%arg0: i32) -> (i32, i32) {
    %c0_i32 = arith.constant 0 : i32
    %c0_i32_0 = arith.constant 0 : i32
    %c0_i32_1 = arith.constant 0 : i32
    return %c0_i32, %c0_i32_0 : i32, i32
  }
  func.func @transform_18(%arg0: i32) -> (i32, i32) {
    %c0_i32 = arith.constant 0 : i32
    %c0_i32_0 = arith.constant 0 : i32
    %c0_i32_1 = arith.constant 0 : i32
    return %c0_i32, %c0_i32_0 : i32, i32
  }
  func.func @transform_19(%arg0: i32) -> (i32, i32) {
    %c0_i32 = arith.constant 0 : i32
    %c0_i32_0 = arith.constant 0 : i32
    %c0_i32_1 = arith.constant 0 : i32
    return %c0_i32, %c0_i32_0 : i32, i32
  }
  func.func @transform_20(%arg0: i32) -> (i32, i32) {
    %c0_i32 = arith.constant 0 : i32
    %c0_i32_0 = arith.constant 0 : i32
    %c0_i32_1 = arith.constant 0 : i32
    return %c0_i32, %c0_i32_0 : i32, i32
  }
  func.func @transform_21(%arg0: i32) -> (i32, i32) {
    %c0_i32 = arith.constant 0 : i32
    %c0_i32_0 = arith.constant 0 : i32
    %c0_i32_1 = arith.constant 0 : i32
    return %c0_i32, %c0_i32_0 : i32, i32
  }
  func.func @transform_22(%arg0: i32) -> (i32, i32) {
    %c0_i32 = arith.constant 0 : i32
    %c0_i32_0 = arith.constant 0 : i32
    %c0_i32_1 = arith.constant 0 : i32
    return %c0_i32, %c0_i32_0 : i32, i32
  }
  func.func @transform_23(%arg0: i32) -> (i32, i32) {
    %c0_i32 = arith.constant 0 : i32
    %c0_i32_0 = arith.constant 0 : i32
    %c0_i32_1 = arith.constant 0 : i32
    return %c0_i32, %c0_i32_0 : i32, i32
  }
  func.func @transform_24(%arg0: i32) -> (i32, i32) {
    %c0_i32 = arith.constant 0 : i32
    %c0_i32_0 = arith.constant 0 : i32
    %c0_i32_1 = arith.constant 0 : i32
    return %c0_i32, %c0_i32_0 : i32, i32
  }
  func.func @transform_25(%arg0: i32) -> (i32, i32) {
    %c0_i32 = arith.constant 0 : i32
    %c0_i32_0 = arith.constant 0 : i32
    %c0_i32_1 = arith.constant 0 : i32
    return %c0_i32, %c0_i32_0 : i32, i32
  }
}

</mosaic_0001>

<llo_original>
// kernel: neg.1
$region0: #{neg.1}
  #allocation0 [shape = 's32[1]{0}', space=sflag, size = 0x4, scoped, tag = 'scoped memory for neg.1']
  %s0 = inlined_call_operand.vmem [shape: f32[16,3], index: 0, kind: input, shape index: {}]
  %s1 = inlined_call_operand.vmem [shape: bf16[16,3], index: 1, kind: output, shape index: {}]
  %v2 = vld [vmem:[%s0] sm:$0x7]
  %3 = xla_tuple %v2
  %4 = xla_tuple %3
  %v5 = vxor.u32 %v2, 2147483648
  %6 = xla_tuple %v5
  %v7 = vpack.c.bf16 0.0, %v5
  %8 = vst [vmem:[%s1] sm:$0x3] %v7

// kernel: e_gcl_vel_forward.1
$region0: #{e_gcl_vel_forward.1}
  #allocation0 [shape = 'u32[]', space=smem, size = 0x4, offset = 0x4, fixed_abs, tag = 'smem constant byte address 0x4 - core index']
  #allocation1 [shape = 'u32[144,128]{1,0:T(1,128)}', space=vmem, size = 0x12000, scoped, tag = 'internal scratch']
  #allocation2 [shape = 'f32[16,35]{1,0:T(8,128)}', space=vmem, size = 0x2000, scoped, tag = 'scratch operand']
  #allocation3 [shape = 'f32[1,1]{1,0:T(1,128)S(1)}', space=vmem, size = 0x200, scoped, tag = 'scoped memory for e_gcl_vel_forward.1']
  %s0 = inlined_call_operand.vmem [shape: s32[256,1], index: 0, kind: input, shape index: {}]
  %s1 = inlined_call_operand.vmem [shape: s32[256,1], index: 1, kind: input, shape index: {}]
  %s2 = inlined_call_operand.vmem [shape: s32[1,256], index: 2, kind: input, shape index: {}]
  %s3 = inlined_call_operand.vmem [shape: bf16[32,35], index: 3, kind: input, shape index: {}]
  %s4 = inlined_call_operand.vmem [shape: f32[16,32], index: 4, kind: input, shape index: {}]
  %s5 = inlined_call_operand.vmem [shape: f32[16,35], index: 5, kind: input, shape index: {}]
  %s6 = inlined_call_operand.vmem [shape: f32[16,35], index: 6, kind: input, shape index: {}]
  %s7 = inlined_call_operand.vmem [shape: f32[16,1], index: 7, kind: input, shape index: {}]
  %s8 = inlined_call_operand.vmem [shape: f32[1,35], index: 8, kind: input, shape index: {}]
  %s9 = inlined_call_operand.vmem [shape: f32[1,35], index: 9, kind: input, shape index: {}]
  %s10 = inlined_call_operand.vmem [shape: bf16[35,35], index: 10, kind: input, shape index: {}]
  %s11 = inlined_call_operand.vmem [shape: f32[1,35], index: 11, kind: input, shape index: {}]
  %s12 = inlined_call_operand.vmem [shape: bf16[35,32], index: 12, kind: input, shape index: {}]
  %s13 = inlined_call_operand.vmem [shape: f32[1,32], index: 13, kind: input, shape index: {}]
  %s14 = inlined_call_operand.vmem [shape: bf16[32,1], index: 14, kind: input, shape index: {}]
  %s15 = inlined_call_operand.vmem [shape: f32[32,32], index: 15, kind: input, shape index: {}]
  %s16 = inlined_call_operand.vmem [shape: f32[1,32], index: 16, kind: input, shape index: {}]
  %s17 = inlined_call_operand.vmem [shape: f32[32,1], index: 17, kind: input, shape index: {}]
  %s18 = inlined_call_operand.<no memory space> [shape: f32[1,1], index: 18, kind: input, shape index: {}]
  %s19 = inlined_call_operand.vmem [shape: f32[32,32], index: 19, kind: input, shape index: {}]
  %s20 = inlined_call_operand.vmem [shape: f32[35,32], index: 20, kind: input, shape index: {}]
  %s21 = inlined_call_operand.vmem [shape: f32[1,32], index: 21, kind: input, shape index: {}]
  %s22 = inlined_call_operand.vmem [shape: f32[32,32], index: 22, kind: input, shape index: {}]
  %s23 = inlined_call_operand.vmem [shape: f32[1,32], index: 23, kind: input, shape index: {}]
  %s24 = inlined_call_operand.hbm [shape: f32[16,32], index: 24, kind: output, shape index: {0}]
  %s25 = inlined_call_operand.vmem [shape: f32[16,35], index: 25, kind: output, shape index: {1}]
  %26 = xla_tuple %s24, %s25
  %s27 = sld [smem:[#allocation0]]
  $region145: #{e_gcl_vel_forward.1} parent=0
    _
  %s29 = ssub.s32 1, %s27
  %s30 = scalar_select 0, %s29, %s27
  %v31 = vstv %s18
  %32 = vst [vmem:[#allocation3] sm:$0x1] %v31
  $region1: #{e_gcl_vel_forward.1} parent=0
    #allocation4 [shape = 'u8[8192]{0}', space=vmem, size = 0x2000, scoped, tag = 'output window, operand 0, single buffered']
    #allocation5 [shape = 's32[2]{0}', space=sflag, size = 0x8, scoped, tag = 'scoped memory for e_gcl_vel_forward.1']
    %33 = vsyncpa [#allocation5], 0
    loop: start=0, step=1, limit=4
    $region2: #{e_gcl_vel_forward.1} parent=1 // loop_pre_header
      _
    $region3: #{e_gcl_vel_forward.1} parent=1 // loop_header
      %s35 = sphi 0, %s39
      %p36 = scmp.ge.s32.totalorder %s35, 4
      %s45 = sphi 0, %s47
      %s48 = sphi 0, %s45
      %s49 = sphi 0, %s48
      %s65 = sphi 0, %s49
      %s71 = sphi 0, %s73
      %s74 = sphi 0, %s71
      %s75 = sphi 0, %s74
      %s91 = sphi 0, %s75
      %s97 = sphi 0, %s99
      %s100 = sphi 0, %s97
      %s101 = sphi 0, %s100
      %s117 = sphi 0, %s101
      %s121 = sphi 0, %s121
      %s123 = sphi 0, %s121
      %s124 = sphi 0, %s123
      %s138 = sphi 0, %s124
      %s142 = sphi 0, %s142
      %s144 = sphi 0, %s142
      %s145 = sphi 0, %s144
      %s159 = sphi 0, %s145
      %s163 = sphi 0, %s163
      %s165 = sphi 0, %s163
      %s166 = sphi 0, %s165
      %s180 = sphi 0, %s166
      %s184 = sphi 0, %s184
      %s186 = sphi 0, %s184
      %s187 = sphi 0, %s186
      %s201 = sphi 0, %s187
      %s205 = sphi 0, %s205
      %s207 = sphi 0, %s205
      %s208 = sphi 0, %s207
      %s222 = sphi 0, %s208
      %s226 = sphi 0, %s226
      %s228 = sphi 0, %s226
      %s229 = sphi 0, %s228
      %s243 = sphi 0, %s229
      %s247 = sphi 0, %s247
      %s249 = sphi 0, %s247
      %s250 = sphi 0, %s249
      %s264 = sphi 0, %s250
      %s268 = sphi 0, %s268
      %s270 = sphi 0, %s268
      %s271 = sphi 0, %s270
      %s285 = sphi 0, %s271
      %s289 = sphi 0, %s289
      %s291 = sphi 0, %s289
      %s292 = sphi 0, %s291
      %s306 = sphi 0, %s292
      %s310 = sphi 0, %s310
      %s312 = sphi 0, %s310
      %s313 = sphi 0, %s312
      %s327 = sphi 0, %s313
      %s331 = sphi 0, %s331
      %s333 = sphi 0, %s331
      %s334 = sphi 0, %s333
      %s348 = sphi 0, %s334
      %s352 = sphi 0, %s352
      %s354 = sphi 0, %s352
      %s355 = sphi 0, %s354
      %s369 = sphi 0, %s355
      %s373 = sphi 0, %s373
      %s375 = sphi 0, %s373
      %s376 = sphi 0, %s375
      %s390 = sphi 0, %s376
      %s394 = sphi 0, %s394
      %s396 = sphi 0, %s394
      %s397 = sphi 0, %s396
      %s411 = sphi 0, %s397
      %s415 = sphi 0, %s415
      %s417 = sphi 0, %s415
      %s418 = sphi 0, %s417
      %s432 = sphi 0, %s418
      %s436 = sphi 0, %s436
      %s438 = sphi 0, %s436
      %s439 = sphi 0, %s438
      %s453 = sphi 0, %s439
      %s457 = sphi 0, %s457
      %s459 = sphi 0, %s457
      %s460 = sphi 0, %s459
      %s474 = sphi 0, %s460
      %s478 = sphi 0, %s478
      %s480 = sphi 0, %s478
      %s481 = sphi 0, %s480
      %s495 = sphi 0, %s481
      %s499 = sphi 0, %s499
      %s501 = sphi 0, %s499
      %s502 = sphi 0, %s501
      %s516 = sphi 0, %s502
      %s520 = sphi 0, %s520
      %s522 = sphi 0, %s520
      %s523 = sphi 0, %s522
      %s537 = sphi 0, %s523
      %s541 = sphi 0, %s541
      %s543 = sphi 0, %s541
      %s544 = sphi 0, %s543
      %s558 = sphi 0, %s544
      %s562 = sphi 0, %s562
      %s564 = sphi 0, %s562
      %s565 = sphi 0, %s564
      %s579 = sphi 0, %s565
      %s583 = sphi 0, %s583
      %s585 = sphi 0, %s583
      %s586 = sphi 0, %s585
      %s600 = sphi 0, %s586
    $region4: #{e_gcl_vel_forward.1} parent=1 // loop_header_branch
      %38 = sbr.rel (%p36) target = $region8
    $region5: #{e_gcl_vel_forward.1} parent=1 // loop_body
      %s40 = ssub.s32 %s35, 1
      %s41 = ssub.s32 %s35, 2
      %s42 = sadd.s32 %s35, 1
      %s43 = ssub.s32 %s35, %s42
      %p44 = scmp.eq.s32.totalorder %s43, 0
      %s46 = sadd.s32 %s45, 1
      %s47 = scalar_select %p44, %s45, %s46
      %p50 = pneg %p44
      %p51 = scmp.eq.s32.totalorder %s35, 1
      %p52 = por %p50, %p51
      %p53 = scmp.ne.s32.totalorder %s45, %s48
      %p54 = scmp.eq.s32.totalorder %s35, 0
      %p55 = por %p53, %p54
      %p56 = scmp.ne.s32.totalorder %s45, %s48
      %p57 = scmp.eq.s32.totalorder %s40, 1
      %p58 = por %p56, %p57
      %p59 = scmp.ne.s32.totalorder %s48, %s49
      %p60 = scmp.eq.s32.totalorder %s40, 0
      %p61 = por %p59, %p60
      %p62 = scmp.ne.s32.totalorder %s48, %s49
      %p63 = scmp.eq.s32.totalorder %s41, 1
      %p64 = por %p62, %p63
      %p66 = scmp.ne.s32.totalorder %s49, %s65
      %p67 = scmp.eq.s32.totalorder %s41, 0
      %p68 = por %p66, %p67
      %s69 = ssub.s32 %s35, %s42
      %p70 = scmp.eq.s32.totalorder %s69, 0
      %s72 = sadd.s32 %s71, 1
      %s73 = scalar_select %p70, %s71, %s72
      %p76 = pneg %p70
      %p77 = scmp.eq.s32.totalorder %s35, 1
      %p78 = por %p76, %p77
      %p79 = scmp.ne.s32.totalorder %s71, %s74
      %p80 = scmp.eq.s32.totalorder %s35, 0
      %p81 = por %p79, %p80
      %p82 = scmp.ne.s32.totalorder %s71, %s74
      %p83 = scmp.eq.s32.totalorder %s40, 1
      %p84 = por %p82, %p83
      %p85 = scmp.ne.s32.totalorder %s74, %s75
      %p86 = scmp.eq.s32.totalorder %s40, 0
      %p87 = por %p85, %p86
      %p88 = scmp.ne.s32.totalorder %s74, %s75
      %p89 = scmp.eq.s32.totalorder %s41, 1
      %p90 = por %p88, %p89
      %p92 = scmp.ne.s32.totalorder %s75, %s91
      %p93 = scmp.eq.s32.totalorder %s41, 0
      %p94 = por %p92, %p93
      %s95 = ssub.s32 %s35, %s42
      %p96 = scmp.eq.s32.totalorder %s95, 0
      %s98 = sadd.s32 %s97, 1
      %s99 = scalar_select %p96, %s97, %s98
      %p102 = pneg %p96
      %p103 = scmp.eq.s32.totalorder %s35, 1
      %p104 = por %p102, %p103
      %p105 = scmp.ne.s32.totalorder %s97, %s100
      %p106 = scmp.eq.s32.totalorder %s35, 0
      %p107 = por %p105, %p106
      %p108 = scmp.ne.s32.totalorder %s97, %s100
      %p109 = scmp.eq.s32.totalorder %s40, 1
      %p110 = por %p108, %p109
      %p111 = scmp.ne.s32.totalorder %s100, %s101
      %p112 = scmp.eq.s32.totalorder %s40, 0
      %p113 = por %p111, %p112
      %p114 = scmp.ne.s32.totalorder %s100, %s101
      %p115 = scmp.eq.s32.totalorder %s41, 1
      %p116 = por %p114, %p115
      %p118 = scmp.ne.s32.totalorder %s101, %s117
      %p119 = scmp.eq.s32.totalorder %s41, 0
      %p120 = por %p118, %p119
      %s122 = sadd.s32 %s121, 1
      %p125 = scmp.eq.s32.totalorder %s35, 1
      %p126 = scmp.ne.s32.totalorder %s121, %s123
      %p127 = scmp.eq.s32.totalorder %s35, 0
      %p128 = por %p126, %p127
      %p129 = scmp.ne.s32.totalorder %s121, %s123
      %p130 = scmp.eq.s32.totalorder %s40, 1
      %p131 = por %p129, %p130
      %p132 = scmp.ne.s32.totalorder %s123, %s124
      %p133 = scmp.eq.s32.totalorder %s40, 0
      %p134 = por %p132, %p133
      %p135 = scmp.ne.s32.totalorder %s123, %s124
      %p136 = scmp.eq.s32.totalorder %s41, 1
      %p137 = por %p135, %p136
      %p139 = scmp.ne.s32.totalorder %s124, %s138
      %p140 = scmp.eq.s32.totalorder %s41, 0
      %p141 = por %p139, %p140
      %s143 = sadd.s32 %s142, 1
      %p146 = scmp.eq.s32.totalorder %s35, 1
      %p147 = scmp.ne.s32.totalorder %s142, %s144
      %p148 = scmp.eq.s32.totalorder %s35, 0
      %p149 = por %p147, %p148
      %p150 = scmp.ne.s32.totalorder %s142, %s144
      %p151 = scmp.eq.s32.totalorder %s40, 1
      %p152 = por %p150, %p151
      %p153 = scmp.ne.s32.totalorder %s144, %s145
      %p154 = scmp.eq.s32.totalorder %s40, 0
      %p155 = por %p153, %p154
      %p156 = scmp.ne.s32.totalorder %s144, %s145
      %p157 = scmp.eq.s32.totalorder %s41, 1
      %p158 = por %p156, %p157
      %p160 = scmp.ne.s32.totalorder %s145, %s159
      %p161 = scmp.eq.s32.totalorder %s41, 0
      %p162 = por %p160, %p161
      %s164 = sadd.s32 %s163, 1
      %p167 = scmp.eq.s32.totalorder %s35, 1
      %p168 = scmp.ne.s32.totalorder %s163, %s165
      %p169 = scmp.eq.s32.totalorder %s35, 0
      %p170 = por %p168, %p169
      %p171 = scmp.ne.s32.totalorder %s163, %s165
      %p172 = scmp.eq.s32.totalorder %s40, 1
      %p173 = por %p171, %p172
      %p174 = scmp.ne.s32.totalorder %s165, %s166
      %p175 = scmp.eq.s32.totalorder %s40, 0
      %p176 = por %p174, %p175
      %p177 = scmp.ne.s32.totalorder %s165, %s166
      %p178 = scmp.eq.s32.totalorder %s41, 1
      %p179 = por %p177, %p178
      %p181 = scmp.ne.s32.totalorder %s166, %s180
      %p182 = scmp.eq.s32.totalorder %s41, 0
      %p183 = por %p181, %p182
      %s185 = sadd.s32 %s184, 1
      %p188 = scmp.eq.s32.totalorder %s35, 1
      %p189 = scmp.ne.s32.totalorder %s184, %s186
      %p190 = scmp.eq.s32.totalorder %s35, 0
      %p191 = por %p189, %p190
      %p192 = scmp.ne.s32.totalorder %s184, %s186
      %p193 = scmp.eq.s32.totalorder %s40, 1
      %p194 = por %p192, %p193
      %p195 = scmp.ne.s32.totalorder %s186, %s187
      %p196 = scmp.eq.s32.totalorder %s40, 0
      %p197 = por %p195, %p196
      %p198 = scmp.ne.s32.totalorder %s186, %s187
      %p199 = scmp.eq.s32.totalorder %s41, 1
      %p200 = por %p198, %p199
      %p202 = scmp.ne.s32.totalorder %s187, %s201
      %p203 = scmp.eq.s32.totalorder %s41, 0
      %p204 = por %p202, %p203
      %s206 = sadd.s32 %s205, 1
      %p209 = scmp.eq.s32.totalorder %s35, 1
      %p210 = scmp.ne.s32.totalorder %s205, %s207
      %p211 = scmp.eq.s32.totalorder %s35, 0
      %p212 = por %p210, %p211
      %p213 = scmp.ne.s32.totalorder %s205, %s207
      %p214 = scmp.eq.s32.totalorder %s40, 1
      %p215 = por %p213, %p214
      %p216 = scmp.ne.s32.totalorder %s207, %s208
      %p217 = scmp.eq.s32.totalorder %s40, 0
      %p218 = por %p216, %p217
      %p219 = scmp.ne.s32.totalorder %s207, %s208
      %p220 = scmp.eq.s32.totalorder %s41, 1
      %p221 = por %p219, %p220
      %p223 = scmp.ne.s32.totalorder %s208, %s222
      %p224 = scmp.eq.s32.totalorder %s41, 0
      %p225 = por %p223, %p224
      %s227 = sadd.s32 %s226, 1
      %p230 = scmp.eq.s32.totalorder %s35, 1
      %p231 = scmp.ne.s32.totalorder %s226, %s228
      %p232 = scmp.eq.s32.totalorder %s35, 0
      %p233 = por %p231, %p232
      %p234 = scmp.ne.s32.totalorder %s226, %s228
      %p235 = scmp.eq.s32.totalorder %s40, 1
      %p236 = por %p234, %p235
      %p237 = scmp.ne.s32.totalorder %s228, %s229
      %p238 = scmp.eq.s32.totalorder %s40, 0
      %p239 = por %p237, %p238
      %p240 = scmp.ne.s32.totalorder %s228, %s229
      %p241 = scmp.eq.s32.totalorder %s41, 1
      %p242 = por %p240, %p241
      %p244 = scmp.ne.s32.totalorder %s229, %s243
      %p245 = scmp.eq.s32.totalorder %s41, 0
      %p246 = por %p244, %p245
      %s248 = sadd.s32 %s247, 1
      %p251 = scmp.eq.s32.totalorder %s35, 1
      %p252 = scmp.ne.s32.totalorder %s247, %s249
      %p253 = scmp.eq.s32.totalorder %s35, 0
      %p254 = por %p252, %p253
      %p255 = scmp.ne.s32.totalorder %s247, %s249
      %p256 = scmp.eq.s32.totalorder %s40, 1
      %p257 = por %p255, %p256
      %p258 = scmp.ne.s32.totalorder %s249, %s250
      %p259 = scmp.eq.s32.totalorder %s40, 0
      %p260 = por %p258, %p259
      %p261 = scmp.ne.s32.totalorder %s249, %s250
      %p262 = scmp.eq.s32.totalorder %s41, 1
      %p263 = por %p261, %p262
      %p265 = scmp.ne.s32.totalorder %s250, %s264
      %p266 = scmp.eq.s32.totalorder %s41, 0
      %p267 = por %p265, %p266
      %s269 = sadd.s32 %s268, 1
      %p272 = scmp.eq.s32.totalorder %s35, 1
      %p273 = scmp.ne.s32.totalorder %s268, %s270
      %p274 = scmp.eq.s32.totalorder %s35, 0
      %p275 = por %p273, %p274
      %p276 = scmp.ne.s32.totalorder %s268, %s270
      %p277 = scmp.eq.s32.totalorder %s40, 1
      %p278 = por %p276, %p277
      %p279 = scmp.ne.s32.totalorder %s270, %s271
      %p280 = scmp.eq.s32.totalorder %s40, 0
      %p281 = por %p279, %p280
      %p282 = scmp.ne.s32.totalorder %s270, %s271
      %p283 = scmp.eq.s32.totalorder %s41, 1
      %p284 = por %p282, %p283
      %p286 = scmp.ne.s32.totalorder %s271, %s285
      %p287 = scmp.eq.s32.totalorder %s41, 0
      %p288 = por %p286, %p287
      %s290 = sadd.s32 %s289, 1
      %p293 = scmp.eq.s32.totalorder %s35, 1
      %p294 = scmp.ne.s32.totalorder %s289, %s291
      %p295 = scmp.eq.s32.totalorder %s35, 0
      %p296 = por %p294, %p295
      %p297 = scmp.ne.s32.totalorder %s289, %s291
      %p298 = scmp.eq.s32.totalorder %s40, 1
      %p299 = por %p297, %p298
      %p300 = scmp.ne.s32.totalorder %s291, %s292
      %p301 = scmp.eq.s32.totalorder %s40, 0
      %p302 = por %p300, %p301
      %p303 = scmp.ne.s32.totalorder %s291, %s292
      %p304 = scmp.eq.s32.totalorder %s41, 1
      %p305 = por %p303, %p304
      %p307 = scmp.ne.s32.totalorder %s292, %s306
      %p308 = scmp.eq.s32.totalorder %s41, 0
      %p309 = por %p307, %p308
      %s311 = sadd.s32 %s310, 1
      %p314 = scmp.eq.s32.totalorder %s35, 1
      %p315 = scmp.ne.s32.totalorder %s310, %s312
      %p316 = scmp.eq.s32.totalorder %s35, 0
      %p317 = por %p315, %p316
      %p318 = scmp.ne.s32.totalorder %s310, %s312
      %p319 = scmp.eq.s32.totalorder %s40, 1
      %p320 = por %p318, %p319
      %p321 = scmp.ne.s32.totalorder %s312, %s313
      %p322 = scmp.eq.s32.totalorder %s40, 0
      %p323 = por %p321, %p322
      %p324 = scmp.ne.s32.totalorder %s312, %s313
      %p325 = scmp.eq.s32.totalorder %s41, 1
      %p326 = por %p324, %p325
      %p328 = scmp.ne.s32.totalorder %s313, %s327
      %p329 = scmp.eq.s32.totalorder %s41, 0
      %p330 = por %p328, %p329
      %s332 = sadd.s32 %s331, 1
      %p335 = scmp.eq.s32.totalorder %s35, 1
      %p336 = scmp.ne.s32.totalorder %s331, %s333
      %p337 = scmp.eq.s32.totalorder %s35, 0
      %p338 = por %p336, %p337
      %p339 = scmp.ne.s32.totalorder %s331, %s333
      %p340 = scmp.eq.s32.totalorder %s40, 1
      %p341 = por %p339, %p340
      %p342 = scmp.ne.s32.totalorder %s333, %s334
      %p343 = scmp.eq.s32.totalorder %s40, 0
      %p344 = por %p342, %p343
      %p345 = scmp.ne.s32.totalorder %s333, %s334
      %p346 = scmp.eq.s32.totalorder %s41, 1
      %p347 = por %p345, %p346
      %p349 = scmp.ne.s32.totalorder %s334, %s348
      %p350 = scmp.eq.s32.totalorder %s41, 0
      %p351 = por %p349, %p350
      %s353 = sadd.s32 %s352, 1
      %p356 = scmp.eq.s32.totalorder %s35, 1
      %p357 = scmp.ne.s32.totalorder %s352, %s354
      %p358 = scmp.eq.s32.totalorder %s35, 0
      %p359 = por %p357, %p358
      %p360 = scmp.ne.s32.totalorder %s352, %s354
      %p361 = scmp.eq.s32.totalorder %s40, 1
      %p362 = por %p360, %p361
      %p363 = scmp.ne.s32.totalorder %s354, %s355
      %p364 = scmp.eq.s32.totalorder %s40, 0
      %p365 = por %p363, %p364
      %p366 = scmp.ne.s32.totalorder %s354, %s355
      %p367 = scmp.eq.s32.totalorder %s41, 1
      %p368 = por %p366, %p367
      %p370 = scmp.ne.s32.totalorder %s355, %s369
      %p371 = scmp.eq.s32.totalorder %s41, 0
      %p372 = por %p370, %p371
      %s374 = sadd.s32 %s373, 1
      %p377 = scmp.eq.s32.totalorder %s35, 1
      %p378 = scmp.ne.s32.totalorder %s373, %s375
      %p379 = scmp.eq.s32.totalorder %s35, 0
      %p380 = por %p378, %p379
      %p381 = scmp.ne.s32.totalorder %s373, %s375
      %p382 = scmp.eq.s32.totalorder %s40, 1
      %p383 = por %p381, %p382
      %p384 = scmp.ne.s32.totalorder %s375, %s376
      %p385 = scmp.eq.s32.totalorder %s40, 0
      %p386 = por %p384, %p385
      %p387 = scmp.ne.s32.totalorder %s375, %s376
      %p388 = scmp.eq.s32.totalorder %s41, 1
      %p389 = por %p387, %p388
      %p391 = scmp.ne.s32.totalorder %s376, %s390
      %p392 = scmp.eq.s32.totalorder %s41, 0
      %p393 = por %p391, %p392
      %s395 = sadd.s32 %s394, 1
      %p398 = scmp.eq.s32.totalorder %s35, 1
      %p399 = scmp.ne.s32.totalorder %s394, %s396
      %p400 = scmp.eq.s32.totalorder %s35, 0
      %p401 = por %p399, %p400
      %p402 = scmp.ne.s32.totalorder %s394, %s396
      %p403 = scmp.eq.s32.totalorder %s40, 1
      %p404 = por %p402, %p403
      %p405 = scmp.ne.s32.totalorder %s396, %s397
      %p406 = scmp.eq.s32.totalorder %s40, 0
      %p407 = por %p405, %p406
      %p408 = scmp.ne.s32.totalorder %s396, %s397
      %p409 = scmp.eq.s32.totalorder %s41, 1
      %p410 = por %p408, %p409
      %p412 = scmp.ne.s32.totalorder %s397, %s411
      %p413 = scmp.eq.s32.totalorder %s41, 0
      %p414 = por %p412, %p413
      %s416 = sadd.s32 %s415, 1
      %p419 = scmp.eq.s32.totalorder %s35, 1
      %p420 = scmp.ne.s32.totalorder %s415, %s417
      %p421 = scmp.eq.s32.totalorder %s35, 0
      %p422 = por %p420, %p421
      %p423 = scmp.ne.s32.totalorder %s415, %s417
      %p424 = scmp.eq.s32.totalorder %s40, 1
      %p425 = por %p423, %p424
      %p426 = scmp.ne.s32.totalorder %s417, %s418
      %p427 = scmp.eq.s32.totalorder %s40, 0
      %p428 = por %p426, %p427
      %p429 = scmp.ne.s32.totalorder %s417, %s418
      %p430 = scmp.eq.s32.totalorder %s41, 1
      %p431 = por %p429, %p430
      %p433 = scmp.ne.s32.totalorder %s418, %s432
      %p434 = scmp.eq.s32.totalorder %s41, 0
      %p435 = por %p433, %p434
      %s437 = sadd.s32 %s436, 1
      %p440 = scmp.eq.s32.totalorder %s35, 1
      %p441 = scmp.ne.s32.totalorder %s436, %s438
      %p442 = scmp.eq.s32.totalorder %s35, 0
      %p443 = por %p441, %p442
      %p444 = scmp.ne.s32.totalorder %s436, %s438
      %p445 = scmp.eq.s32.totalorder %s40, 1
      %p446 = por %p444, %p445
      %p447 = scmp.ne.s32.totalorder %s438, %s439
      %p448 = scmp.eq.s32.totalorder %s40, 0
      %p449 = por %p447, %p448
      %p450 = scmp.ne.s32.totalorder %s438, %s439
      %p451 = scmp.eq.s32.totalorder %s41, 1
      %p452 = por %p450, %p451
      %p454 = scmp.ne.s32.totalorder %s439, %s453
      %p455 = scmp.eq.s32.totalorder %s41, 0
      %p456 = por %p454, %p455
      %s458 = sadd.s32 %s457, 1
      %p461 = scmp.eq.s32.totalorder %s35, 1
      %p462 = scmp.ne.s32.totalorder %s457, %s459
      %p463 = scmp.eq.s32.totalorder %s35, 0
      %p464 = por %p462, %p463
      %p465 = scmp.ne.s32.totalorder %s457, %s459
      %p466 = scmp.eq.s32.totalorder %s40, 1
      %p467 = por %p465, %p466
      %p468 = scmp.ne.s32.totalorder %s459, %s460
      %p469 = scmp.eq.s32.totalorder %s40, 0
      %p470 = por %p468, %p469
      %p471 = scmp.ne.s32.totalorder %s459, %s460
      %p472 = scmp.eq.s32.totalorder %s41, 1
      %p473 = por %p471, %p472
      %p475 = scmp.ne.s32.totalorder %s460, %s474
      %p476 = scmp.eq.s32.totalorder %s41, 0
      %p477 = por %p475, %p476
      %s479 = sadd.s32 %s478, 1
      %p482 = scmp.eq.s32.totalorder %s35, 1
      %p483 = scmp.ne.s32.totalorder %s478, %s480
      %p484 = scmp.eq.s32.totalorder %s35, 0
      %p485 = por %p483, %p484
      %p486 = scmp.ne.s32.totalorder %s478, %s480
      %p487 = scmp.eq.s32.totalorder %s40, 1
      %p488 = por %p486, %p487
      %p489 = scmp.ne.s32.totalorder %s480, %s481
      %p490 = scmp.eq.s32.totalorder %s40, 0
      %p491 = por %p489, %p490
      %p492 = scmp.ne.s32.totalorder %s480, %s481
      %p493 = scmp.eq.s32.totalorder %s41, 1
      %p494 = por %p492, %p493
      %p496 = scmp.ne.s32.totalorder %s481, %s495
      %p497 = scmp.eq.s32.totalorder %s41, 0
      %p498 = por %p496, %p497
      %s500 = sadd.s32 %s499, 1
      %p503 = scmp.eq.s32.totalorder %s35, 1
      %p504 = scmp.ne.s32.totalorder %s499, %s501
      %p505 = scmp.eq.s32.totalorder %s35, 0
      %p506 = por %p504, %p505
      %p507 = scmp.ne.s32.totalorder %s499, %s501
      %p508 = scmp.eq.s32.totalorder %s40, 1
      %p509 = por %p507, %p508
      %p510 = scmp.ne.s32.totalorder %s501, %s502
      %p511 = scmp.eq.s32.totalorder %s40, 0
      %p512 = por %p510, %p511
      %p513 = scmp.ne.s32.totalorder %s501, %s502
      %p514 = scmp.eq.s32.totalorder %s41, 1
      %p515 = por %p513, %p514
      %p517 = scmp.ne.s32.totalorder %s502, %s516
      %p518 = scmp.eq.s32.totalorder %s41, 0
      %p519 = por %p517, %p518
      %s521 = sadd.s32 %s520, 1
      %p524 = scmp.eq.s32.totalorder %s35, 1
      %p525 = scmp.ne.s32.totalorder %s520, %s522
      %p526 = scmp.eq.s32.totalorder %s35, 0
      %p527 = por %p525, %p526
      %p528 = scmp.ne.s32.totalorder %s520, %s522
      %p529 = scmp.eq.s32.totalorder %s40, 1
      %p530 = por %p528, %p529
      %p531 = scmp.ne.s32.totalorder %s522, %s523
      %p532 = scmp.eq.s32.totalorder %s40, 0
      %p533 = por %p531, %p532
      %p534 = scmp.ne.s32.totalorder %s522, %s523
      %p535 = scmp.eq.s32.totalorder %s41, 1
      %p536 = por %p534, %p535
      %p538 = scmp.ne.s32.totalorder %s523, %s537
      %p539 = scmp.eq.s32.totalorder %s41, 0
      %p540 = por %p538, %p539
      %s542 = sadd.s32 %s541, 1
      %p545 = scmp.eq.s32.totalorder %s35, 1
      %p546 = scmp.ne.s32.totalorder %s541, %s543
      %p547 = scmp.eq.s32.totalorder %s35, 0
      %p548 = por %p546, %p547
      %p549 = scmp.ne.s32.totalorder %s541, %s543
      %p550 = scmp.eq.s32.totalorder %s40, 1
      %p551 = por %p549, %p550
      %p552 = scmp.ne.s32.totalorder %s543, %s544
      %p553 = scmp.eq.s32.totalorder %s40, 0
      %p554 = por %p552, %p553
      %p555 = scmp.ne.s32.totalorder %s543, %s544
      %p556 = scmp.eq.s32.totalorder %s41, 1
      %p557 = por %p555, %p556
      %p559 = scmp.ne.s32.totalorder %s544, %s558
      %p560 = scmp.eq.s32.totalorder %s41, 0
      %p561 = por %p559, %p560
      %s563 = sadd.s32 %s562, 1
      %p566 = scmp.eq.s32.totalorder %s35, 1
      %p567 = scmp.ne.s32.totalorder %s562, %s564
      %p568 = scmp.eq.s32.totalorder %s35, 0
      %p569 = por %p567, %p568
      %p570 = scmp.ne.s32.totalorder %s562, %s564
      %p571 = scmp.eq.s32.totalorder %s40, 1
      %p572 = por %p570, %p571
      %p573 = scmp.ne.s32.totalorder %s564, %s565
      %p574 = scmp.eq.s32.totalorder %s40, 0
      %p575 = por %p573, %p574
      %p576 = scmp.ne.s32.totalorder %s564, %s565
      %p577 = scmp.eq.s32.totalorder %s41, 1
      %p578 = por %p576, %p577
      %p580 = scmp.ne.s32.totalorder %s565, %s579
      %p581 = scmp.eq.s32.totalorder %s41, 0
      %p582 = por %p580, %p581
      %s584 = sadd.s32 %s583, 1
      %p587 = scmp.eq.s32.totalorder %s35, 1
      %p588 = scmp.ne.s32.totalorder %s583, %s585
      %p589 = scmp.eq.s32.totalorder %s35, 0
      %p590 = por %p588, %p589
      %p591 = scmp.ne.s32.totalorder %s583, %s585
      %p592 = scmp.eq.s32.totalorder %s40, 1
      %p593 = por %p591, %p592
      %p594 = scmp.ne.s32.totalorder %s585, %s586
      %p595 = scmp.eq.s32.totalorder %s40, 0
      %p596 = por %p594, %p595
      %p597 = scmp.ne.s32.totalorder %s585, %s586
      %p598 = scmp.eq.s32.totalorder %s41, 1
      %p599 = por %p597, %p598
      %p601 = scmp.ne.s32.totalorder %s586, %s600
      %p602 = scmp.eq.s32.totalorder %s41, 0
      %p603 = por %p601, %p602
      %p604 = scmp.le.s32.totalorder 1, %s35
      %p605 = scmp.lt.s32.totalorder %s35, 3
      %p606 = pnand %p604, %p605
      %p607 = pneg %p606
      // Predicated region
      $region9: #{e_gcl_vel_forward.1} parent=5 // pred_check
        _
      $region10: #{e_gcl_vel_forward.1} parent=5 // pred_check_branch
        %609 = sbr.rel (%p606) target = $region12
      $region11: #{e_gcl_vel_forward.1} parent=5 // pred_region
        %s610 = ssub.s32 %s35, 1
        // Predicated region
        $region13: #{e_gcl_vel_forward.1} parent=11 // pred_check
          %p611 = pneg %p134
        $region14: #{e_gcl_vel_forward.1} parent=11 // pred_check_branch
          %613 = sbr.rel (%p611) target = $region16
        $region15: #{e_gcl_vel_forward.1} parent=11 // pred_region
          _
        $region16: #{e_gcl_vel_forward.1} parent=11 // pred_fallthru
          _
        // Predicated region
        $region17: #{e_gcl_vel_forward.1} parent=11 // pred_check
          %p614 = pneg %p155
        $region18: #{e_gcl_vel_forward.1} parent=11 // pred_check_branch
          %616 = sbr.rel (%p614) target = $region20
        $region19: #{e_gcl_vel_forward.1} parent=11 // pred_region
          _
        $region20: #{e_gcl_vel_forward.1} parent=11 // pred_fallthru
          _
        // Predicated region
        $region21: #{e_gcl_vel_forward.1} parent=11 // pred_check
          %p617 = pneg %p176
        $region22: #{e_gcl_vel_forward.1} parent=11 // pred_check_branch
          %619 = sbr.rel (%p617) target = $region24
        $region23: #{e_gcl_vel_forward.1} parent=11 // pred_region
          _
        $region24: #{e_gcl_vel_forward.1} parent=11 // pred_fallthru
          _
        // Predicated region
        $region25: #{e_gcl_vel_forward.1} parent=11 // pred_check
          %p620 = pneg %p197
        $region26: #{e_gcl_vel_forward.1} parent=11 // pred_check_branch
          %622 = sbr.rel (%p620) target = $region28
        $region27: #{e_gcl_vel_forward.1} parent=11 // pred_region
          _
        $region28: #{e_gcl_vel_forward.1} parent=11 // pred_fallthru
          _
        // Predicated region
        $region29: #{e_gcl_vel_forward.1} parent=11 // pred_check
          %p623 = pneg %p218
        $region30: #{e_gcl_vel_forward.1} parent=11 // pred_check_branch
          %625 = sbr.rel (%p623) target = $region32
        $region31: #{e_gcl_vel_forward.1} parent=11 // pred_region
          _
        $region32: #{e_gcl_vel_forward.1} parent=11 // pred_fallthru
          _
        // Predicated region
        $region33: #{e_gcl_vel_forward.1} parent=11 // pred_check
          %p626 = pneg %p239
        $region34: #{e_gcl_vel_forward.1} parent=11 // pred_check_branch
          %628 = sbr.rel (%p626) target = $region36
        $region35: #{e_gcl_vel_forward.1} parent=11 // pred_region
          _
        $region36: #{e_gcl_vel_forward.1} parent=11 // pred_fallthru
          _
        // Predicated region
        $region37: #{e_gcl_vel_forward.1} parent=11 // pred_check
          %p629 = pneg %p260
        $region38: #{e_gcl_vel_forward.1} parent=11 // pred_check_branch
          %631 = sbr.rel (%p629) target = $region40
        $region39: #{e_gcl_vel_forward.1} parent=11 // pred_region
          _
        $region40: #{e_gcl_vel_forward.1} parent=11 // pred_fallthru
          _
        // Predicated region
        $region41: #{e_gcl_vel_forward.1} parent=11 // pred_check
          %p632 = pneg %p281
        $region42: #{e_gcl_vel_forward.1} parent=11 // pred_check_branch
          %634 = sbr.rel (%p632) target = $region44
        $region43: #{e_gcl_vel_forward.1} parent=11 // pred_region
          _
        $region44: #{e_gcl_vel_forward.1} parent=11 // pred_fallthru
          _
        // Predicated region
        $region45: #{e_gcl_vel_forward.1} parent=11 // pred_check
          %p635 = pneg %p302
        $region46: #{e_gcl_vel_forward.1} parent=11 // pred_check_branch
          %637 = sbr.rel (%p635) target = $region48
        $region47: #{e_gcl_vel_forward.1} parent=11 // pred_region
          _
        $region48: #{e_gcl_vel_forward.1} parent=11 // pred_fallthru
          _
        // Predicated region
        $region49: #{e_gcl_vel_forward.1} parent=11 // pred_check
          %p638 = pneg %p323
        $region50: #{e_gcl_vel_forward.1} parent=11 // pred_check_branch
          %640 = sbr.rel (%p638) target = $region52
        $region51: #{e_gcl_vel_forward.1} parent=11 // pred_region
          _
        $region52: #{e_gcl_vel_forward.1} parent=11 // pred_fallthru
          _
        // Predicated region
        $region53: #{e_gcl_vel_forward.1} parent=11 // pred_check
          %p641 = pneg %p344
        $region54: #{e_gcl_vel_forward.1} parent=11 // pred_check_branch
          %643 = sbr.rel (%p641) target = $region56
        $region55: #{e_gcl_vel_forward.1} parent=11 // pred_region
          _
        $region56: #{e_gcl_vel_forward.1} parent=11 // pred_fallthru
          _
        // Predicated region
        $region57: #{e_gcl_vel_forward.1} parent=11 // pred_check
          %p644 = pneg %p365
        $region58: #{e_gcl_vel_forward.1} parent=11 // pred_check_branch
          %646 = sbr.rel (%p644) target = $region60
        $region59: #{e_gcl_vel_forward.1} parent=11 // pred_region
          _
        $region60: #{e_gcl_vel_forward.1} parent=11 // pred_fallthru
          _
        // Predicated region
        $region61: #{e_gcl_vel_forward.1} parent=11 // pred_check
          %p647 = pneg %p386
        $region62: #{e_gcl_vel_forward.1} parent=11 // pred_check_branch
          %649 = sbr.rel (%p647) target = $region64
        $region63: #{e_gcl_vel_forward.1} parent=11 // pred_region
          _
        $region64: #{e_gcl_vel_forward.1} parent=11 // pred_fallthru
          _
        // Predicated region
        $region65: #{e_gcl_vel_forward.1} parent=11 // pred_check
          %p650 = pneg %p407
        $region66: #{e_gcl_vel_forward.1} parent=11 // pred_check_branch
          %652 = sbr.rel (%p650) target = $region68
        $region67: #{e_gcl_vel_forward.1} parent=11 // pred_region
          _
        $region68: #{e_gcl_vel_forward.1} parent=11 // pred_fallthru
          _
        // Predicated region
        $region69: #{e_gcl_vel_forward.1} parent=11 // pred_check
          %p653 = pneg %p428
        $region70: #{e_gcl_vel_forward.1} parent=11 // pred_check_branch
          %655 = sbr.rel (%p653) target = $region72
        $region71: #{e_gcl_vel_forward.1} parent=11 // pred_region
          _
        $region72: #{e_gcl_vel_forward.1} parent=11 // pred_fallthru
          _
        // Predicated region
        $region73: #{e_gcl_vel_forward.1} parent=11 // pred_check
          %p656 = pneg %p449
        $region74: #{e_gcl_vel_forward.1} parent=11 // pred_check_branch
          %658 = sbr.rel (%p656) target = $region76
        $region75: #{e_gcl_vel_forward.1} parent=11 // pred_region
          _
        $region76: #{e_gcl_vel_forward.1} parent=11 // pred_fallthru
          _
        // Predicated region
        $region77: #{e_gcl_vel_forward.1} parent=11 // pred_check
          %p659 = pneg %p470
        $region78: #{e_gcl_vel_forward.1} parent=11 // pred_check_branch
          %661 = sbr.rel (%p659) target = $region80
        $region79: #{e_gcl_vel_forward.1} parent=11 // pred_region
          _
        $region80: #{e_gcl_vel_forward.1} parent=11 // pred_fallthru
          _
        // Predicated region
        $region81: #{e_gcl_vel_forward.1} parent=11 // pred_check
          %p662 = pneg %p491
        $region82: #{e_gcl_vel_forward.1} parent=11 // pred_check_branch
          %664 = sbr.rel (%p662) target = $region84
        $region83: #{e_gcl_vel_forward.1} parent=11 // pred_region
          _
        $region84: #{e_gcl_vel_forward.1} parent=11 // pred_fallthru
          _
        // Predicated region
        $region85: #{e_gcl_vel_forward.1} parent=11 // pred_check
          %p665 = pneg %p512
        $region86: #{e_gcl_vel_forward.1} parent=11 // pred_check_branch
          %667 = sbr.rel (%p665) target = $region88
        $region87: #{e_gcl_vel_forward.1} parent=11 // pred_region
          _
        $region88: #{e_gcl_vel_forward.1} parent=11 // pred_fallthru
          _
        // Predicated region
        $region89: #{e_gcl_vel_forward.1} parent=11 // pred_check
          %p668 = pneg %p533
        $region90: #{e_gcl_vel_forward.1} parent=11 // pred_check_branch
          %670 = sbr.rel (%p668) target = $region92
        $region91: #{e_gcl_vel_forward.1} parent=11 // pred_region
          _
        $region92: #{e_gcl_vel_forward.1} parent=11 // pred_fallthru
          _
        // Predicated region
        $region93: #{e_gcl_vel_forward.1} parent=11 // pred_check
          %p671 = pneg %p554
        $region94: #{e_gcl_vel_forward.1} parent=11 // pred_check_branch
          %673 = sbr.rel (%p671) target = $region96
        $region95: #{e_gcl_vel_forward.1} parent=11 // pred_region
          _
        $region96: #{e_gcl_vel_forward.1} parent=11 // pred_fallthru
          _
      $region12: #{e_gcl_vel_forward.1} parent=5 // pred_fallthru
        _
      %p674 = scmp.lt.s32.totalorder %s35, 2
      // Predicated region
      $region97: #{e_gcl_vel_forward.1} parent=5 // pred_check
        %p675 = pneg %p674
      $region98: #{e_gcl_vel_forward.1} parent=5 // pred_check_branch
        %677 = sbr.rel (%p675) target = $region100
      $region99: #{e_gcl_vel_forward.1} parent=5 // pred_region
        // Predicated region
        $region101: #{e_gcl_vel_forward.1} parent=99 // pred_check
          %p678 = pneg %p55
        $region102: #{e_gcl_vel_forward.1} parent=99 // pred_check_branch
          %680 = sbr.rel (%p678) target = $region104
        $region103: #{e_gcl_vel_forward.1} parent=99 // pred_region
          %s681 = smul.u32 16, %s35
          %p682 = scmp.lt.s32.totalorder %s681, 31
          %s683 = scalar_select %p682, %s681, 31
          %s684 = smul.addr %s683, 8
          %s685 = scalar_lea.vmem %s0, %s684
          %s686 = smul.u32 16, %s35
        $region104: #{e_gcl_vel_forward.1} parent=99 // pred_fallthru
          _
        // Predicated region
        $region105: #{e_gcl_vel_forward.1} parent=99 // pred_check
          %p687 = pneg %p81
        $region106: #{e_gcl_vel_forward.1} parent=99 // pred_check_branch
          %689 = sbr.rel (%p687) target = $region108
        $region107: #{e_gcl_vel_forward.1} parent=99 // pred_region
          %s690 = smul.u32 16, %s35
          %p691 = scmp.lt.s32.totalorder %s690, 31
          %s692 = scalar_select %p691, %s690, 31
          %s693 = smul.addr %s692, 8
          %s694 = scalar_lea.vmem %s1, %s693
          %s695 = smul.u32 16, %s35
        $region108: #{e_gcl_vel_forward.1} parent=99 // pred_fallthru
          _
        // Predicated region
        $region109: #{e_gcl_vel_forward.1} parent=99 // pred_check
          %p696 = pneg %p107
        $region110: #{e_gcl_vel_forward.1} parent=99 // pred_check_branch
          %698 = sbr.rel (%p696) target = $region112
        $region111: #{e_gcl_vel_forward.1} parent=99 // pred_region
          %p699 = scmp.lt.s32.totalorder %s35, 1
          %s700 = scalar_select %p699, %s35, 1
          %s701 = scalar_lea.vmem %s2, %s700
        $region112: #{e_gcl_vel_forward.1} parent=99 // pred_fallthru
          _
      $region100: #{e_gcl_vel_forward.1} parent=5 // pred_fallthru
        _
      %p702 = scmp.le.s32.totalorder 1, %s35
      %p703 = scmp.lt.s32.totalorder %s35, 3
      %p704 = pnand %p702, %p703
      %p705 = pneg %p704
      // Predicated region
      $region113: #{e_gcl_vel_forward.1} parent=5 // pred_check
        _
      $region114: #{e_gcl_vel_forward.1} parent=5 // pred_check_branch
        %707 = sbr.rel (%p704) target = $region116
      $region115: #{e_gcl_vel_forward.1} parent=5 // pred_region
        %s708 = ssub.s32 %s35, 1
        %s709 = smul.u32 16, %s40
        %p710 = scmp.lt.s32.totalorder %s709, 31
        %s711 = scalar_select %p710, %s709, 31
        %s712 = smul.addr %s711, 8
        %s713 = scalar_lea.vmem %s0, %s712
        %p714 = pneg %p61
        %p715 = pneg %p58
        %s716 = smul.u32 16, %s40
        %p717 = scmp.lt.s32.totalorder %s716, 31
        %s718 = scalar_select %p717, %s716, 31
        %s719 = smul.addr %s718, 8
        %s720 = scalar_lea.vmem %s1, %s719
        %p721 = pneg %p87
        %p722 = pneg %p84
        %p723 = scmp.lt.s32.totalorder %s40, 1
        %s724 = scalar_select %p723, %s40, 1
        %s725 = scalar_lea.vmem %s2, %s724
        %p726 = pneg %p113
        %p727 = pneg %p110
        %p728 = pneg %p134
        %p729 = pneg %p131
        %p730 = pneg %p155
        %p731 = pneg %p152
        %p732 = pneg %p176
        %p733 = pneg %p173
        %p734 = pneg %p197
        %p735 = pneg %p194
        %p736 = pneg %p218
        %p737 = pneg %p215
        %p738 = pneg %p239
        %p739 = pneg %p236
        %p740 = pneg %p260
        %p741 = pneg %p257
        %p742 = pneg %p281
        %p743 = pneg %p278
        %p744 = pneg %p302
        %p745 = pneg %p299
        %p746 = pneg %p323
        %p747 = pneg %p320
        %p748 = pneg %p344
        %p749 = pneg %p341
        %p750 = pneg %p365
        %p751 = pneg %p362
        %p752 = pneg %p386
        %p753 = pneg %p383
        %p754 = pneg %p407
        %p755 = pneg %p404
        %p756 = pneg %p428
        %p757 = pneg %p425
        %p758 = pneg %p449
        %p759 = pneg %p446
        %p760 = pneg %p470
        %p761 = pneg %p467
        %p762 = pneg %p491
        %p763 = pneg %p488
        %p764 = pneg %p512
        %p765 = pneg %p509
        %p766 = pneg %p533
        %p767 = pneg %p530
        %p768 = pneg %p554
        %p769 = pneg %p551
        %p770 = pneg %p575
        %p771 = pneg %p572
        %p772 = pneg %p596
        %p773 = pneg %p593
        %s774 = smul.u32 16, %s40
        %p775 = scmp.lt.s32.totalorder %s774, 31
        %s776 = scalar_select %p775, %s774, 31
        %s777 = smul.addr %s776, 8
        %s778 = scalar_lea.vmem %s0, %s777
        %s779 = smul.u32 16, %s40
        %s780 = smul.u32 16, %s40
        %p781 = scmp.lt.s32.totalorder %s780, 31
        %s782 = scalar_select %p781, %s780, 31
        %s783 = smul.addr %s782, 8
        %s784 = scalar_lea.vmem %s1, %s783
        %s785 = smul.u32 16, %s40
        %p786 = scmp.lt.s32.totalorder %s40, 1
        %s787 = scalar_select %p786, %s40, 1
        %s788 = scalar_lea.vmem %s2, %s787
        %p790 = scmp.eq.s32.totalorder %s40, 0
        // Predicated region
        $region117: #{e_gcl_vel_forward.1} parent=115 // pred_check
          %p791 = pneg %p790
        $region118: #{e_gcl_vel_forward.1} parent=115 // pred_check_branch
          %793 = sbr.rel (%p791) target = $region120
        $region119: #{e_gcl_vel_forward.1} parent=115 // pred_region
          %vm794 = vcmask 285696
          %795 = vst.msk [vmem:[#allocation2] sm:$0xff] %vm794, 0.0
          %796 = vst.msk [vmem:[#allocation2 + $0x8] sm:$0xff] %vm794, 0.0
        $region120: #{e_gcl_vel_forward.1} parent=115 // pred_fallthru
          _
        %v797 = vld [vmem:[%s778] sm:$0xff]
        %v798 = vld [vmem:[%s778 + $0x8] sm:$0xff]
        %v799 = vld [vmem:[%s778 + $0x10] sm:$0xff]
        %v800 = vld [vmem:[%s778 + $0x18] sm:$0xff]
        %v801 = vld [vmem:[%s778 + $0x20] sm:$0xff]
        %v802 = vld [vmem:[%s778 + $0x28] sm:$0xff]
        %v803 = vld [vmem:[%s778 + $0x30] sm:$0xff]
        %v804 = vld [vmem:[%s778 + $0x38] sm:$0xff]
        %v805 = vld [vmem:[%s778 + $0x40] sm:$0xff]
        %v806 = vld [vmem:[%s778 + $0x48] sm:$0xff]
        %v807 = vld [vmem:[%s778 + $0x50] sm:$0xff]
        %v808 = vld [vmem:[%s778 + $0x58] sm:$0xff]
        %v809 = vld [vmem:[%s778 + $0x60] sm:$0xff]
        %v810 = vld [vmem:[%s778 + $0x68] sm:$0xff]
        %v811 = vld [vmem:[%s778 + $0x70] sm:$0xff]
        %v812 = vld [vmem:[%s778 + $0x78] sm:$0xff]
        %v813 = vld [vmem:[%s784] sm:$0xff]
        %v814 = vld [vmem:[%s784 + $0x8] sm:$0xff]
        %v815 = vld [vmem:[%s784 + $0x10] sm:$0xff]
        %v816 = vld [vmem:[%s784 + $0x18] sm:$0xff]
        %v817 = vld [vmem:[%s784 + $0x20] sm:$0xff]
        %v818 = vld [vmem:[%s784 + $0x28] sm:$0xff]
        %v819 = vld [vmem:[%s784 + $0x30] sm:$0xff]
        %v820 = vld [vmem:[%s784 + $0x38] sm:$0xff]
        %v821 = vld [vmem:[%s784 + $0x40] sm:$0xff]
        %v822 = vld [vmem:[%s784 + $0x48] sm:$0xff]
        %v823 = vld [vmem:[%s784 + $0x50] sm:$0xff]
        %v824 = vld [vmem:[%s784 + $0x58] sm:$0xff]
        %v825 = vld [vmem:[%s784 + $0x60] sm:$0xff]
        %v826 = vld [vmem:[%s784 + $0x68] sm:$0xff]
        %v827 = vld [vmem:[%s784 + $0x70] sm:$0xff]
        %v828 = vld [vmem:[%s784 + $0x78] sm:$0xff]
        %v829 = vlaneseq
        %v830 = vand.u32 %v829, 127
        %831 = vset.pattern.permute.xlu0 0
        %832 = vperm.xlu0 %831, %v797
        %v833 = vpop.permute.xlu0 %832
        %834 = vset.pattern.permute.xlu0 0
        %835 = vperm.xlu0 %834, %v798
        %v836 = vpop.permute.xlu0 %835
        %837 = vset.pattern.permute.xlu0 0
        %838 = vperm.xlu0 %837, %v799
        %v839 = vpop.permute.xlu0 %838
        %840 = vset.pattern.permute.xlu0 0
        %841 = vperm.xlu0 %840, %v800
        %v842 = vpop.permute.xlu0 %841
        %843 = vset.pattern.permute.xlu0 0
        %844 = vperm.xlu0 %843, %v801
        %v845 = vpop.permute.xlu0 %844
        %846 = vset.pattern.permute.xlu0 0
        %847 = vperm.xlu0 %846, %v802
        %v848 = vpop.permute.xlu0 %847
        %849 = vset.pattern.permute.xlu0 0
        %850 = vperm.xlu0 %849, %v803
        %v851 = vpop.permute.xlu0 %850
        %852 = vset.pattern.permute.xlu0 0
        %853 = vperm.xlu0 %852, %v804
        %v854 = vpop.permute.xlu0 %853
        %855 = vset.pattern.permute.xlu0 0
        %856 = vperm.xlu0 %855, %v805
        %v857 = vpop.permute.xlu0 %856
        %858 = vset.pattern.permute.xlu0 0
        %859 = vperm.xlu0 %858, %v806
        %v860 = vpop.permute.xlu0 %859
        %861 = vset.pattern.permute.xlu0 0
        %862 = vperm.xlu0 %861, %v807
        %v863 = vpop.permute.xlu0 %862
        %864 = vset.pattern.permute.xlu0 0
        %865 = vperm.xlu0 %864, %v808
        %v866 = vpop.permute.xlu0 %865
        %867 = vset.pattern.permute.xlu0 0
        %868 = vperm.xlu0 %867, %v809
        %v869 = vpop.permute.xlu0 %868
        %870 = vset.pattern.permute.xlu0 0
        %871 = vperm.xlu0 %870, %v810
        %v872 = vpop.permute.xlu0 %871
        %873 = vset.pattern.permute.xlu0 0
        %874 = vperm.xlu0 %873, %v811
        %v875 = vpop.permute.xlu0 %874
        %876 = vset.pattern.permute.xlu0 0
        %877 = vperm.xlu0 %876, %v812
        %v878 = vpop.permute.xlu0 %877
        %vm879 = vcmp.eq.s32.totalorder %v830, %v833
        %vm880 = vcmp.eq.s32.totalorder %v830, %v836
        %vm881 = vcmp.eq.s32.totalorder %v830, %v839
        %vm882 = vcmp.eq.s32.totalorder %v830, %v842
        %vm883 = vcmp.eq.s32.totalorder %v830, %v845
        %vm884 = vcmp.eq.s32.totalorder %v830, %v848
        %vm885 = vcmp.eq.s32.totalorder %v830, %v851
        %vm886 = vcmp.eq.s32.totalorder %v830, %v854
        %vm887 = vcmp.eq.s32.totalorder %v830, %v857
        %vm888 = vcmp.eq.s32.totalorder %v830, %v860
        %vm889 = vcmp.eq.s32.totalorder %v830, %v863
        %vm890 = vcmp.eq.s32.totalorder %v830, %v866
        %vm891 = vcmp.eq.s32.totalorder %v830, %v869
        %vm892 = vcmp.eq.s32.totalorder %v830, %v872
        %vm893 = vcmp.eq.s32.totalorder %v830, %v875
        %vm894 = vcmp.eq.s32.totalorder %v830, %v878
        %895 = vset.pattern.permute.xlu0 0
        %896 = vperm.xlu0 %895, %v813
        %v897 = vpop.permute.xlu0 %896
        %898 = vset.pattern.permute.xlu0 0
        %899 = vperm.xlu0 %898, %v814
        %v900 = vpop.permute.xlu0 %899
        %901 = vset.pattern.permute.xlu0 0
        %902 = vperm.xlu0 %901, %v815
        %v903 = vpop.permute.xlu0 %902
        %904 = vset.pattern.permute.xlu0 0
        %905 = vperm.xlu0 %904, %v816
        %v906 = vpop.permute.xlu0 %905
        %907 = vset.pattern.permute.xlu0 0
        %908 = vperm.xlu0 %907, %v817
        %v909 = vpop.permute.xlu0 %908
        %910 = vset.pattern.permute.xlu0 0
        %911 = vperm.xlu0 %910, %v818
        %v912 = vpop.permute.xlu0 %911
        %913 = vset.pattern.permute.xlu0 0
        %914 = vperm.xlu0 %913, %v819
        %v915 = vpop.permute.xlu0 %914
        %916 = vset.pattern.permute.xlu0 0
        %917 = vperm.xlu0 %916, %v820
        %v918 = vpop.permute.xlu0 %917
        %919 = vset.pattern.permute.xlu0 0
        %920 = vperm.xlu0 %919, %v821
        %v921 = vpop.permute.xlu0 %920
        %922 = vset.pattern.permute.xlu0 0
        %923 = vperm.xlu0 %922, %v822
        %v924 = vpop.permute.xlu0 %923
        %925 = vset.pattern.permute.xlu0 0
        %926 = vperm.xlu0 %925, %v823
        %v927 = vpop.permute.xlu0 %926
        %928 = vset.pattern.permute.xlu0 0
        %929 = vperm.xlu0 %928, %v824
        %v930 = vpop.permute.xlu0 %929
        %931 = vset.pattern.permute.xlu0 0
        %932 = vperm.xlu0 %931, %v825
        %v933 = vpop.permute.xlu0 %932
        %934 = vset.pattern.permute.xlu0 0
        %935 = vperm.xlu0 %934, %v826
        %v936 = vpop.permute.xlu0 %935
        %937 = vset.pattern.permute.xlu0 0
        %938 = vperm.xlu0 %937, %v827
        %v939 = vpop.permute.xlu0 %938
        %940 = vset.pattern.permute.xlu0 0
        %941 = vperm.xlu0 %940, %v828
        %v942 = vpop.permute.xlu0 %941
        %vm943 = vcmp.eq.s32.totalorder %v830, %v897
        %vm944 = vcmp.eq.s32.totalorder %v830, %v900
        %vm945 = vcmp.eq.s32.totalorder %v830, %v903
        %vm946 = vcmp.eq.s32.totalorder %v830, %v906
        %vm947 = vcmp.eq.s32.totalorder %v830, %v909
        %vm948 = vcmp.eq.s32.totalorder %v830, %v912
        %vm949 = vcmp.eq.s32.totalorder %v830, %v915
        %vm950 = vcmp.eq.s32.totalorder %v830, %v918
        %vm951 = vcmp.eq.s32.totalorder %v830, %v921
        %vm952 = vcmp.eq.s32.totalorder %v830, %v924
        %vm953 = vcmp.eq.s32.totalorder %v830, %v927
        %vm954 = vcmp.eq.s32.totalorder %v830, %v930
        %vm955 = vcmp.eq.s32.totalorder %v830, %v933
        %vm956 = vcmp.eq.s32.totalorder %v830, %v936
        %vm957 = vcmp.eq.s32.totalorder %v830, %v939
        %vm958 = vcmp.eq.s32.totalorder %v830, %v942
        %vm959 = vmor %vm879, %vm943
        %vm960 = vmor %vm880, %vm944
        %vm961 = vmor %vm881, %vm945
        %vm962 = vmor %vm882, %vm946
        %vm963 = vmor %vm883, %vm947
        %vm964 = vmor %vm884, %vm948
        %vm965 = vmor %vm885, %vm949
        %vm966 = vmor %vm886, %vm950
        %vm967 = vmor %vm887, %vm951
        %vm968 = vmor %vm888, %vm952
        %vm969 = vmor %vm889, %vm953
        %vm970 = vmor %vm890, %vm954
        %vm971 = vmor %vm891, %vm955
        %vm972 = vmor %vm892, %vm956
        %vm973 = vmor %vm893, %vm957
        %vm974 = vmor %vm894, %vm958
        %v975 = vsel %vm959, 1, 0
        %v976 = vsel %vm960, 1, 0
        %v977 = vsel %vm961, 1, 0
        %v978 = vsel %vm962, 1, 0
        %v979 = vsel %vm963, 1, 0
        %v980 = vsel %vm964, 1, 0
        %v981 = vsel %vm965, 1, 0
        %v982 = vsel %vm966, 1, 0
        %v983 = vsel %vm967, 1, 0
        %v984 = vsel %vm968, 1, 0
        %v985 = vsel %vm969, 1, 0
        %v986 = vsel %vm970, 1, 0
        %v987 = vsel %vm971, 1, 0
        %v988 = vsel %vm972, 1, 0
        %v989 = vsel %vm973, 1, 0
        %v990 = vsel %vm974, 1, 0
        %v991 = vcvt.s32.f32 %v975
        %v992 = vcvt.s32.f32 %v976
        %v993 = vcvt.s32.f32 %v977
        %v994 = vcvt.s32.f32 %v978
        %v995 = vcvt.s32.f32 %v979
        %v996 = vcvt.s32.f32 %v980
        %v997 = vcvt.s32.f32 %v981
        %v998 = vcvt.s32.f32 %v982
        %v999 = vcvt.s32.f32 %v983
        %v1000 = vcvt.s32.f32 %v984
        %v1001 = vcvt.s32.f32 %v985
        %v1002 = vcvt.s32.f32 %v986
        %v1003 = vcvt.s32.f32 %v987
        %v1004 = vcvt.s32.f32 %v988
        %v1005 = vcvt.s32.f32 %v989
        %v1006 = vcvt.s32.f32 %v990
        %v1007 = vpack.c.bf16 %v992, %v991
        %v1008 = vpack.c.bf16 %v994, %v993
        %v1009 = vpack.c.bf16 %v996, %v995
        %v1010 = vpack.c.bf16 %v998, %v997
        %v1011 = vpack.c.bf16 %v1000, %v999
        %v1012 = vpack.c.bf16 %v1002, %v1001
        %v1013 = vpack.c.bf16 %v1004, %v1003
        %v1014 = vpack.c.bf16 %v1006, %v1005
        %v1015 = vld [vmem:[%s3] sm:$0xf]
        %v1016 = vld [vmem:[%s3 + $0x4] sm:$0xf]
        %v1017 = vld [vmem:[%s3 + $0x8] sm:$0xf]
        %v1018 = vld [vmem:[%s3 + $0xc] sm:$0xf]
        %v1023 = vunpack.c.l.b16 %v1015
        %v1024 = vunpack.c.l.b16 %v1016
        %v1025 = vunpack.c.l.b16 %v1017
        %v1026 = vunpack.c.l.b16 %v1018
        %v1027 = vpack.c.b16 %v1024, %v1023
        %v1028 = vpack.c.b16 %v1026, %v1025
        %vm1031 = vcmask 261120
        %v1033 = vsel %vm1031, %v1007, 0
        %v1036 = vsel %vm1031, %v1008, 0
        %v1039 = vsel %vm1031, %v1009, 0
        %v1042 = vsel %vm1031, %v1010, 0
        %v1045 = vsel %vm1031, %v1011, 0
        %v1048 = vsel %vm1031, %v1012, 0
        %v1051 = vsel %vm1031, %v1013, 0
        %v1054 = vsel %vm1031, %v1014, 0
        %1056 = vmatprep.subr.bf16.mxu0 0
        %1057 = vmatpush1.bf16.msra.mxu0 %v1027
        %1058 = vmatprep.subr.bf16.mxu0 0
        %1059 = vmatpush1.bf16.msra.mxu0 %v1028
        %1060 = vmatprep.subr.bf16.mxu0 0
        %1061 = vmatpush1.bf16.msra.mxu0 0
        %1062 = vmatprep.subr.bf16.mxu0 0
        %1063 = vmatpush1.bf16.msra.mxu0 0
        %1064 = vmatprep.subr.bf16.mxu0 0
        %1065 = vmatpush1.bf16.msra.mxu0 0
        %1066 = vmatprep.subr.bf16.mxu0 0
        %1067 = vmatpush1.bf16.msra.mxu0 0
        %1068 = vmatprep.subr.bf16.mxu0 0
        %1069 = vmatpush1.bf16.msra.mxu0 0
        %1070 = vmatprep.subr.bf16.mxu0 0
        %1071 = vmatpush1.bf16.msra.mxu0 0
        %1072 = vmatprep.subr.bf16.mxu0 0
        %1073 = vmatpush1.bf16.msra.mxu0 0
        %1074 = vmatprep.subr.bf16.mxu0 0
        %1075 = vmatpush1.bf16.msra.mxu0 0
        %1076 = vmatprep.subr.bf16.mxu0 0
        %1077 = vmatpush1.bf16.msra.mxu0 0
        %1078 = vmatprep.subr.bf16.mxu0 0
        %1079 = vmatpush1.bf16.msra.mxu0 0
        %1080 = vmatprep.subr.bf16.mxu0 0
        %1081 = vmatpush1.bf16.msra.mxu0 0
        %1082 = vmatprep.subr.bf16.mxu0 0
        %1083 = vmatpush1.bf16.msra.mxu0 0
        %1084 = vmatprep.subr.bf16.mxu0 0
        %1085 = vmatpush1.bf16.msra.mxu0 0
        %1086 = vmatprep.subr.bf16.mxu0 0
        %1087 = vmatpush1.bf16.msra.mxu0 0
        %1088 = vmatprep.mubr.bf16.mxu0 0
        %1089 = vmatmul.mubr.bf16.gmra.mrb[0].mxu0 %v1033
        %v1090 = vpop.f32.mrb[0].mxu0
        %v1091 = vadd.f32 0.0, %v1090
        %v1092 = vpop.f32.mrb[0].mxu0
        %v1093 = vpop.f32.mrb[0].mxu0
        %v1094 = vadd.f32 0.0, %v1093
        %v1095 = vpop.f32.mrb[0].mxu0
        %1096 = vmatprep.mubr.bf16.mxu0 0
        %1097 = vmatmul.mubr.bf16.gmra.mrb[0].mxu0 %v1036
        %v1098 = vpop.f32.mrb[0].mxu0
        %v1099 = vadd.f32 0.0, %v1098
        %v1100 = vpop.f32.mrb[0].mxu0
        %v1101 = vpop.f32.mrb[0].mxu0
        %v1102 = vadd.f32 0.0, %v1101
        %v1103 = vpop.f32.mrb[0].mxu0
        %1104 = vmatprep.mubr.bf16.mxu0 0
        %1105 = vmatmul.mubr.bf16.gmra.mrb[0].mxu0 %v1039
        %v1106 = vpop.f32.mrb[0].mxu0
        %v1107 = vadd.f32 0.0, %v1106
        %v1108 = vpop.f32.mrb[0].mxu0
        %v1109 = vpop.f32.mrb[0].mxu0
        %v1110 = vadd.f32 0.0, %v1109
        %v1111 = vpop.f32.mrb[0].mxu0
        %1112 = vmatprep.mubr.bf16.mxu0 0
        %1113 = vmatmul.mubr.bf16.gmra.mrb[0].mxu0 %v1042
        %v1114 = vpop.f32.mrb[0].mxu0
        %v1115 = vadd.f32 0.0, %v1114
        %v1116 = vpop.f32.mrb[0].mxu0
        %v1117 = vpop.f32.mrb[0].mxu0
        %v1118 = vadd.f32 0.0, %v1117
        %v1119 = vpop.f32.mrb[0].mxu0
        %1120 = vmatprep.mubr.bf16.mxu0 0
        %1121 = vmatmul.mubr.bf16.gmra.mrb[0].mxu0 %v1045
        %v1122 = vpop.f32.mrb[0].mxu0
        %v1123 = vadd.f32 0.0, %v1122
        %v1124 = vpop.f32.mrb[0].mxu0
        %v1125 = vpop.f32.mrb[0].mxu0
        %v1126 = vadd.f32 0.0, %v1125
        %v1127 = vpop.f32.mrb[0].mxu0
        %1128 = vmatprep.mubr.bf16.mxu0 0
        %1129 = vmatmul.mubr.bf16.gmra.mrb[0].mxu0 %v1048
        %v1130 = vpop.f32.mrb[0].mxu0
        %v1131 = vadd.f32 0.0, %v1130
        %v1132 = vpop.f32.mrb[0].mxu0
        %v1133 = vpop.f32.mrb[0].mxu0
        %v1134 = vadd.f32 0.0, %v1133
        %v1135 = vpop.f32.mrb[0].mxu0
        %1136 = vmatprep.mubr.bf16.mxu0 0
        %1137 = vmatmul.mubr.bf16.gmra.mrb[0].mxu0 %v1051
        %v1138 = vpop.f32.mrb[0].mxu0
        %v1139 = vadd.f32 0.0, %v1138
        %v1140 = vpop.f32.mrb[0].mxu0
        %v1141 = vpop.f32.mrb[0].mxu0
        %v1142 = vadd.f32 0.0, %v1141
        %v1143 = vpop.f32.mrb[0].mxu0
        %1144 = vmatprep.mubr.bf16.mxu0 0
        %1145 = vmatmul.mubr.bf16.gmra.mrb[0].mxu0 %v1054
        %v1146 = vpop.f32.mrb[0].mxu0
        %v1147 = vadd.f32 0.0, %v1146
        %v1148 = vpop.f32.mrb[0].mxu0
        %v1149 = vpop.f32.mrb[0].mxu0
        %v1150 = vadd.f32 0.0, %v1149
        %v1151 = vpop.f32.mrb[0].mxu0
        %1152 = vdwg.mxu0
        %vm1153 = vcmp.lt.s32.totalorder %v830, 3
        %v1154 = vsel %vm1153, 1, 0
        %v1155 = vcvt.s32.f32 %v1154
        %v1156 = vmul.f32 %v1091, %v1155
        %v1157 = vmul.f32 %v1094, %v1155
        %v1158 = vmul.f32 %v1099, %v1155
        %v1159 = vmul.f32 %v1102, %v1155
        %v1160 = vmul.f32 %v1107, %v1155
        %v1161 = vmul.f32 %v1110, %v1155
        %v1162 = vmul.f32 %v1115, %v1155
        %v1163 = vmul.f32 %v1118, %v1155
        %v1164 = vmul.f32 %v1123, %v1155
        %v1165 = vmul.f32 %v1126, %v1155
        %v1166 = vmul.f32 %v1131, %v1155
        %v1167 = vmul.f32 %v1134, %v1155
        %v1168 = vmul.f32 %v1139, %v1155
        %v1169 = vmul.f32 %v1142, %v1155
        %v1170 = vmul.f32 %v1147, %v1155
        %v1171 = vmul.f32 %v1150, %v1155
        %v1172 = vmul.f32 %v1156, %v1156
        %v1173 = vmul.f32 %v1157, %v1157
        %v1174 = vmul.f32 %v1158, %v1158
        %v1175 = vmul.f32 %v1159, %v1159
        %v1176 = vmul.f32 %v1160, %v1160
        %v1177 = vmul.f32 %v1161, %v1161
        %v1178 = vmul.f32 %v1162, %v1162
        %v1179 = vmul.f32 %v1163, %v1163
        %v1180 = vmul.f32 %v1164, %v1164
        %v1181 = vmul.f32 %v1165, %v1165
        %v1182 = vmul.f32 %v1166, %v1166
        %v1183 = vmul.f32 %v1167, %v1167
        %v1184 = vmul.f32 %v1168, %v1168
        %v1185 = vmul.f32 %v1169, %v1169
        %v1186 = vmul.f32 %v1170, %v1170
        %v1187 = vmul.f32 %v1171, %v1171
        %vm1188 = vcmask 285696
        %v1189 = vsel %vm1188, %v1172, 0.0
        %1190 = vadd.xlane.f32.xlu0 %v1189
        %v1191 = vpop.xlane.xlu0 %1190
        %v1192 = vsel %vm1188, %v1173, 0.0
        %1193 = vadd.xlane.f32.xlu0 %v1192
        %v1194 = vpop.xlane.xlu0 %1193
        %v1195 = vsel %vm1188, %v1174, 0.0
        %1196 = vadd.xlane.f32.xlu0 %v1195
        %v1197 = vpop.xlane.xlu0 %1196
        %v1198 = vsel %vm1188, %v1175, 0.0
        %1199 = vadd.xlane.f32.xlu0 %v1198
        %v1200 = vpop.xlane.xlu0 %1199
        %v1201 = vsel %vm1188, %v1176, 0.0
        %1202 = vadd.xlane.f32.xlu0 %v1201
        %v1203 = vpop.xlane.xlu0 %1202
        %v1204 = vsel %vm1188, %v1177, 0.0
        %1205 = vadd.xlane.f32.xlu0 %v1204
        %v1206 = vpop.xlane.xlu0 %1205
        %v1207 = vsel %vm1188, %v1178, 0.0
        %1208 = vadd.xlane.f32.xlu0 %v1207
        %v1209 = vpop.xlane.xlu0 %1208
        %v1210 = vsel %vm1188, %v1179, 0.0
        %1211 = vadd.xlane.f32.xlu0 %v1210
        %v1212 = vpop.xlane.xlu0 %1211
        %v1213 = vsel %vm1188, %v1180, 0.0
        %1214 = vadd.xlane.f32.xlu0 %v1213
        %v1215 = vpop.xlane.xlu0 %1214
        %v1216 = vsel %vm1188, %v1181, 0.0
        %1217 = vadd.xlane.f32.xlu0 %v1216
        %v1218 = vpop.xlane.xlu0 %1217
        %v1219 = vsel %vm1188, %v1182, 0.0
        %1220 = vadd.xlane.f32.xlu0 %v1219
        %v1221 = vpop.xlane.xlu0 %1220
        %v1222 = vsel %vm1188, %v1183, 0.0
        %1223 = vadd.xlane.f32.xlu0 %v1222
        %v1224 = vpop.xlane.xlu0 %1223
        %v1225 = vsel %vm1188, %v1184, 0.0
        %1226 = vadd.xlane.f32.xlu0 %v1225
        %v1227 = vpop.xlane.xlu0 %1226
        %v1228 = vsel %vm1188, %v1185, 0.0
        %1229 = vadd.xlane.f32.xlu0 %v1228
        %v1230 = vpop.xlane.xlu0 %1229
        %v1231 = vsel %vm1188, %v1186, 0.0
        %1232 = vadd.xlane.f32.xlu0 %v1231
        %v1233 = vpop.xlane.xlu0 %1232
        %v1234 = vsel %vm1188, %v1187, 0.0
        %1235 = vadd.xlane.f32.xlu0 %v1234
        %v1236 = vpop.xlane.xlu0 %1235
        %v1237 = vld [vmem:[%s8] sm:$0x1]
        %v1239 = vlaneseq
        %v1240 = vshrl.u32 %v1239, 7
        %v1241 = vsub.s32 0, %v1240
        %v1242 = vrot.slane %v1237, %v1241
        %v1244 = vmul.f32 %v1191, %v1242
        %v1245 = vmul.f32 %v1194, %v1242
        %v1246 = vmul.f32 %v1197, %v1242
        %v1247 = vmul.f32 %v1200, %v1242
        %v1248 = vmul.f32 %v1203, %v1242
        %v1249 = vmul.f32 %v1206, %v1242
        %v1250 = vmul.f32 %v1209, %v1242
        %v1251 = vmul.f32 %v1212, %v1242
        %v1252 = vmul.f32 %v1215, %v1242
        %v1253 = vmul.f32 %v1218, %v1242
        %v1254 = vmul.f32 %v1221, %v1242
        %v1255 = vmul.f32 %v1224, %v1242
        %v1256 = vmul.f32 %v1227, %v1242
        %v1257 = vmul.f32 %v1230, %v1242
        %v1258 = vmul.f32 %v1233, %v1242
        %v1259 = vmul.f32 %v1236, %v1242
        %v1260 = vadd.f32 %v1091, %v1244
        %v1261 = vadd.f32 %v1094, %v1245
        %v1262 = vadd.f32 %v1099, %v1246
        %v1263 = vadd.f32 %v1102, %v1247
        %v1264 = vadd.f32 %v1107, %v1248
        %v1265 = vadd.f32 %v1110, %v1249
        %v1266 = vadd.f32 %v1115, %v1250
        %v1267 = vadd.f32 %v1118, %v1251
        %v1268 = vadd.f32 %v1123, %v1252
        %v1269 = vadd.f32 %v1126, %v1253
        %v1270 = vadd.f32 %v1131, %v1254
        %v1271 = vadd.f32 %v1134, %v1255
        %v1272 = vadd.f32 %v1139, %v1256
        %v1273 = vadd.f32 %v1142, %v1257
        %v1274 = vadd.f32 %v1147, %v1258
        %v1275 = vadd.f32 %v1150, %v1259
        %v1276 = vld [vmem:[%s9] sm:$0x1]
        %v1278 = vlaneseq
        %v1279 = vshrl.u32 %v1278, 7
        %v1280 = vsub.s32 0, %v1279
        %v1281 = vrot.slane %v1276, %v1280
        %v1283 = vadd.f32 %v1260, %v1281
        %v1284 = vadd.f32 %v1261, %v1281
        %v1285 = vadd.f32 %v1262, %v1281
        %v1286 = vadd.f32 %v1263, %v1281
        %v1287 = vadd.f32 %v1264, %v1281
        %v1288 = vadd.f32 %v1265, %v1281
        %v1289 = vadd.f32 %v1266, %v1281
        %v1290 = vadd.f32 %v1267, %v1281
        %v1291 = vadd.f32 %v1268, %v1281
        %v1292 = vadd.f32 %v1269, %v1281
        %v1293 = vadd.f32 %v1270, %v1281
        %v1294 = vadd.f32 %v1271, %v1281
        %v1295 = vadd.f32 %v1272, %v1281
        %v1296 = vadd.f32 %v1273, %v1281
        %v1297 = vadd.f32 %v1274, %v1281
        %v1298 = vadd.f32 %v1275, %v1281
        %v1299 = vmax.f32 %v1283, 0.0
        %v1300 = vmax.f32 %v1284, 0.0
        %v1301 = vmax.f32 %v1285, 0.0
        %v1302 = vmax.f32 %v1286, 0.0
        %v1303 = vmax.f32 %v1287, 0.0
        %v1304 = vmax.f32 %v1288, 0.0
        %v1305 = vmax.f32 %v1289, 0.0
        %v1306 = vmax.f32 %v1290, 0.0
        %v1307 = vmax.f32 %v1291, 0.0
        %v1308 = vmax.f32 %v1292, 0.0
        %v1309 = vmax.f32 %v1293, 0.0
        %v1310 = vmax.f32 %v1294, 0.0
        %v1311 = vmax.f32 %v1295, 0.0
        %v1312 = vmax.f32 %v1296, 0.0
        %v1313 = vmax.f32 %v1297, 0.0
        %v1314 = vmax.f32 %v1298, 0.0
        %v1315 = vpack.c.bf16 %v1300, %v1299
        %v1316 = vpack.c.bf16 %v1302, %v1301
        %v1317 = vpack.c.bf16 %v1304, %v1303
        %v1318 = vpack.c.bf16 %v1306, %v1305
        %v1319 = vpack.c.bf16 %v1308, %v1307
        %v1320 = vpack.c.bf16 %v1310, %v1309
        %v1321 = vpack.c.bf16 %v1312, %v1311
        %v1322 = vpack.c.bf16 %v1314, %v1313
        %v1323 = vld [vmem:[%s10] sm:$0xf]
        %v1324 = vld [vmem:[%s10 + $0x4] sm:$0xf]
        %v1325 = vld [vmem:[%s10 + $0x8] sm:$0xf]
        %v1326 = vld [vmem:[%s10 + $0xc] sm:$0xf]
        %v1327 = vld [vmem:[%s10 + $0x10] sm:$0x3]
        %v1328 = vld [vmem:[%s11] sm:$0x1]
        %v1330 = vlaneseq
        %v1331 = vshrl.u32 %v1330, 7
        %v1332 = vsub.s32 0, %v1331
        %v1333 = vrot.slane %v1328, %v1332
        %v1340 = vunpack.c.l.b16 %v1323
        %v1341 = vunpack.c.l.b16 %v1324
        %v1342 = vunpack.c.l.b16 %v1325
        %v1343 = vunpack.c.l.b16 %v1326
        %v1344 = vunpack.c.l.b16 %v1327
        %v1345 = vpack.c.b16 %v1341, %v1340
        %v1346 = vpack.c.b16 %v1343, %v1342
        %v1347 = vpack.c.b16 %v1344, %v1344
        %v1351 = vsel %vm1188, %v1315, 0
        %v1354 = vsel %vm1188, %v1316, 0
        %v1357 = vsel %vm1188, %v1317, 0
        %v1360 = vsel %vm1188, %v1318, 0
        %v1363 = vsel %vm1188, %v1319, 0
        %v1366 = vsel %vm1188, %v1320, 0
        %v1369 = vsel %vm1188, %v1321, 0
        %v1372 = vsel %vm1188, %v1322, 0
        %vm1374 = vcmask 1040384
        %vm1375 = vcmask 1041408
        %v1376 = vsel %vm1374, 4294967295, 65535
        %v1377 = vsel %vm1375, %v1376, 0
        %v1379 = vand.u32 %v1347, %v1377
        %1381 = vmatprep.subr.bf16.mxu0 0
        %1382 = vmatpush1.bf16.msra.mxu0 %v1345
        %1383 = vmatprep.subr.bf16.mxu0 0
        %1384 = vmatpush1.bf16.msra.mxu0 %v1346
        %1385 = vmatprep.subr.bf16.mxu0 0
        %1386 = vmatpush1.bf16.msra.mxu0 %v1379
        %1387 = vmatprep.subr.bf16.mxu0 0
        %1388 = vmatpush1.bf16.msra.mxu0 0
        %1389 = vmatprep.subr.bf16.mxu0 0
        %1390 = vmatpush1.bf16.msra.mxu0 0
        %1391 = vmatprep.subr.bf16.mxu0 0
        %1392 = vmatpush1.bf16.msra.mxu0 0
        %1393 = vmatprep.subr.bf16.mxu0 0
        %1394 = vmatpush1.bf16.msra.mxu0 0
        %1395 = vmatprep.subr.bf16.mxu0 0
        %1396 = vmatpush1.bf16.msra.mxu0 0
        %1397 = vmatprep.subr.bf16.mxu0 0
        %1398 = vmatpush1.bf16.msra.mxu0 0
        %1399 = vmatprep.subr.bf16.mxu0 0
        %1400 = vmatpush1.bf16.msra.mxu0 0
        %1401 = vmatprep.subr.bf16.mxu0 0
        %1402 = vmatpush1.bf16.msra.mxu0 0
        %1403 = vmatprep.subr.bf16.mxu0 0
        %1404 = vmatpush1.bf16.msra.mxu0 0
        %1405 = vmatprep.subr.bf16.mxu0 0
        %1406 = vmatpush1.bf16.msra.mxu0 0
        %1407 = vmatprep.subr.bf16.mxu0 0
        %1408 = vmatpush1.bf16.msra.mxu0 0
        %1409 = vmatprep.subr.bf16.mxu0 0
        %1410 = vmatpush1.bf16.msra.mxu0 0
        %1411 = vmatprep.subr.bf16.mxu0 0
        %1412 = vmatpush1.bf16.msra.mxu0 0
        %1413 = vmatprep.mubr.bf16.mxu0 0
        %1414 = vmatmul.mubr.bf16.gmra.mrb[0].mxu0 %v1351
        %v1415 = vpop.f32.mrb[0].mxu0
        %v1416 = vadd.f32 %v1333, %v1415
        %v1417 = vpop.f32.mrb[0].mxu0
        %v1418 = vpop.f32.mrb[0].mxu0
        %v1419 = vadd.f32 %v1333, %v1418
        %v1420 = vpop.f32.mrb[0].mxu0
        %1421 = vmatprep.mubr.bf16.mxu0 0
        %1422 = vmatmul.mubr.bf16.gmra.mrb[0].mxu0 %v1354
        %v1423 = vpop.f32.mrb[0].mxu0
        %v1424 = vadd.f32 %v1333, %v1423
        %v1425 = vpop.f32.mrb[0].mxu0
        %v1426 = vpop.f32.mrb[0].mxu0
        %v1427 = vadd.f32 %v1333, %v1426
        %v1428 = vpop.f32.mrb[0].mxu0
        %1429 = vmatprep.mubr.bf16.mxu0 0
        %1430 = vmatmul.mubr.bf16.gmra.mrb[0].mxu0 %v1357
        %v1431 = vpop.f32.mrb[0].mxu0
        %v1432 = vadd.f32 %v1333, %v1431
        %v1433 = vpop.f32.mrb[0].mxu0
        %v1434 = vpop.f32.mrb[0].mxu0
        %v1435 = vadd.f32 %v1333, %v1434
        %v1436 = vpop.f32.mrb[0].mxu0
        %1437 = vmatprep.mubr.bf16.mxu0 0
        %1438 = vmatmul.mubr.bf16.gmra.mrb[0].mxu0 %v1360
        %v1439 = vpop.f32.mrb[0].mxu0
        %v1440 = vadd.f32 %v1333, %v1439
        %v1441 = vpop.f32.mrb[0].mxu0
        %v1442 = vpop.f32.mrb[0].mxu0
        %v1443 = vadd.f32 %v1333, %v1442
        %v1444 = vpop.f32.mrb[0].mxu0
        %1445 = vmatprep.mubr.bf16.mxu0 0
        %1446 = vmatmul.mubr.bf16.gmra.mrb[0].mxu0 %v1363
        %v1447 = vpop.f32.mrb[0].mxu0
        %v1448 = vadd.f32 %v1333, %v1447
        %v1449 = vpop.f32.mrb[0].mxu0
        %v1450 = vpop.f32.mrb[0].mxu0
        %v1451 = vadd.f32 %v1333, %v1450
        %v1452 = vpop.f32.mrb[0].mxu0
        %1453 = vmatprep.mubr.bf16.mxu0 0
        %1454 = vmatmul.mubr.bf16.gmra.mrb[0].mxu0 %v1366
        %v1455 = vpop.f32.mrb[0].mxu0
        %v1456 = vadd.f32 %v1333, %v1455
        %v1457 = vpop.f32.mrb[0].mxu0
        %v1458 = vpop.f32.mrb[0].mxu0
        %v1459 = vadd.f32 %v1333, %v1458
        %v1460 = vpop.f32.mrb[0].mxu0
        %1461 = vmatprep.mubr.bf16.mxu0 0
        %1462 = vmatmul.mubr.bf16.gmra.mrb[0].mxu0 %v1369
        %v1463 = vpop.f32.mrb[0].mxu0
        %v1464 = vadd.f32 %v1333, %v1463
        %v1465 = vpop.f32.mrb[0].mxu0
        %v1466 = vpop.f32.mrb[0].mxu0
        %v1467 = vadd.f32 %v1333, %v1466
        %v1468 = vpop.f32.mrb[0].mxu0
        %1469 = vmatprep.mubr.bf16.mxu0 0
        %1470 = vmatmul.mubr.bf16.gmra.mrb[0].mxu0 %v1372
        %v1471 = vpop.f32.mrb[0].mxu0
        %v1472 = vadd.f32 %v1333, %v1471
        %v1473 = vpop.f32.mrb[0].mxu0
        %v1474 = vpop.f32.mrb[0].mxu0
        %v1475 = vadd.f32 %v1333, %v1474
        %v1476 = vpop.f32.mrb[0].mxu0
        %1477 = vdwg.mxu0
        %v1478 = vmax.f32 %v1416, 0.0
        %v1479 = vmax.f32 %v1419, 0.0
        %v1480 = vmax.f32 %v1424, 0.0
        %v1481 = vmax.f32 %v1427, 0.0
        %v1482 = vmax.f32 %v1432, 0.0
        %v1483 = vmax.f32 %v1435, 0.0
        %v1484 = vmax.f32 %v1440, 0.0
        %v1485 = vmax.f32 %v1443, 0.0
        %v1486 = vmax.f32 %v1448, 0.0
        %v1487 = vmax.f32 %v1451, 0.0
        %v1488 = vmax.f32 %v1456, 0.0
        %v1489 = vmax.f32 %v1459, 0.0
        %v1490 = vmax.f32 %v1464, 0.0
        %v1491 = vmax.f32 %v1467, 0.0
        %v1492 = vmax.f32 %v1472, 0.0
        %v1493 = vmax.f32 %v1475, 0.0
        %v1494 = vpack.c.bf16 %v1479, %v1478
        %v1495 = vpack.c.bf16 %v1481, %v1480
        %v1496 = vpack.c.bf16 %v1483, %v1482
        %v1497 = vpack.c.bf16 %v1485, %v1484
        %v1498 = vpack.c.bf16 %v1487, %v1486
        %v1499 = vpack.c.bf16 %v1489, %v1488
        %v1500 = vpack.c.bf16 %v1491, %v1490
        %v1501 = vpack.c.bf16 %v1493, %v1492
        %v1502 = vld [vmem:[%s12] sm:$0xf]
        %v1503 = vld [vmem:[%s12 + $0x4] sm:$0xf]
        %v1504 = vld [vmem:[%s12 + $0x8] sm:$0xf]
        %v1505 = vld [vmem:[%s12 + $0xc] sm:$0xf]
        %v1506 = vld [vmem:[%s12 + $0x10] sm:$0x3]
        %v1507 = vld [vmem:[%s13] sm:$0x1]
        %v1509 = vlaneseq
        %v1510 = vshrl.u32 %v1509, 7
        %v1511 = vsub.s32 0, %v1510
        %v1512 = vrot.slane %v1507, %v1511
        %v1519 = vunpack.c.l.b16 %v1502
        %v1520 = vunpack.c.l.b16 %v1503
        %v1521 = vunpack.c.l.b16 %v1504
        %v1522 = vunpack.c.l.b16 %v1505
        %v1523 = vunpack.c.l.b16 %v1506
        %v1524 = vpack.c.b16 %v1520, %v1519
        %v1525 = vpack.c.b16 %v1522, %v1521
        %v1526 = vpack.c.b16 %v1523, %v1523
        %v1530 = vsel %vm1188, %v1494, 0
        %v1533 = vsel %vm1188, %v1495, 0
        %v1536 = vsel %vm1188, %v1496, 0
        %v1539 = vsel %vm1188, %v1497, 0
        %v1542 = vsel %vm1188, %v1498, 0
        %v1545 = vsel %vm1188, %v1499, 0
        %v1548 = vsel %vm1188, %v1500, 0
        %v1551 = vsel %vm1188, %v1501, 0
        %v1554 = vand.u32 %v1526, %v1377
        %1556 = vmatprep.subr.bf16.mxu0 0
        %1557 = vmatpush1.bf16.msra.mxu0 %v1524
        %1558 = vmatprep.subr.bf16.mxu0 0
        %1559 = vmatpush1.bf16.msra.mxu0 %v1525
        %1560 = vmatprep.subr.bf16.mxu0 0
        %1561 = vmatpush1.bf16.msra.mxu0 %v1554
        %1562 = vmatprep.subr.bf16.mxu0 0
        %1563 = vmatpush1.bf16.msra.mxu0 0
        %1564 = vmatprep.subr.bf16.mxu0 0
        %1565 = vmatpush1.bf16.msra.mxu0 0
        %1566 = vmatprep.subr.bf16.mxu0 0
        %1567 = vmatpush1.bf16.msra.mxu0 0
        %1568 = vmatprep.subr.bf16.mxu0 0
        %1569 = vmatpush1.bf16.msra.mxu0 0
        %1570 = vmatprep.subr.bf16.mxu0 0
        %1571 = vmatpush1.bf16.msra.mxu0 0
        %1572 = vmatprep.subr.bf16.mxu0 0
        %1573 = vmatpush1.bf16.msra.mxu0 0
        %1574 = vmatprep.subr.bf16.mxu0 0
        %1575 = vmatpush1.bf16.msra.mxu0 0
        %1576 = vmatprep.subr.bf16.mxu0 0
        %1577 = vmatpush1.bf16.msra.mxu0 0
        %1578 = vmatprep.subr.bf16.mxu0 0
        %1579 = vmatpush1.bf16.msra.mxu0 0
        %1580 = vmatprep.subr.bf16.mxu0 0
        %1581 = vmatpush1.bf16.msra.mxu0 0
        %1582 = vmatprep.subr.bf16.mxu0 0
        %1583 = vmatpush1.bf16.msra.mxu0 0
        %1584 = vmatprep.subr.bf16.mxu0 0
        %1585 = vmatpush1.bf16.msra.mxu0 0
        %1586 = vmatprep.subr.bf16.mxu0 0
        %1587 = vmatpush1.bf16.msra.mxu0 0
        %1588 = vmatprep.mubr.bf16.mxu0 0
        %1589 = vmatmul.mubr.bf16.gmra.mrb[0].mxu0 %v1530
        %v1590 = vpop.f32.mrb[0].mxu0
        %v1591 = vadd.f32 %v1512, %v1590
        %v1592 = vpop.f32.mrb[0].mxu0
        %v1593 = vpop.f32.mrb[0].mxu0
        %v1594 = vadd.f32 %v1512, %v1593
        %v1595 = vpop.f32.mrb[0].mxu0
        %1596 = vmatprep.mubr.bf16.mxu0 0
        %1597 = vmatmul.mubr.bf16.gmra.mrb[0].mxu0 %v1533
        %v1598 = vpop.f32.mrb[0].mxu0
        %v1599 = vadd.f32 %v1512, %v1598
        %v1600 = vpop.f32.mrb[0].mxu0
        %v1601 = vpop.f32.mrb[0].mxu0
        %v1602 = vadd.f32 %v1512, %v1601
        %v1603 = vpop.f32.mrb[0].mxu0
        %1604 = vmatprep.mubr.bf16.mxu0 0
        %1605 = vmatmul.mubr.bf16.gmra.mrb[0].mxu0 %v1536
        %v1606 = vpop.f32.mrb[0].mxu0
        %v1607 = vadd.f32 %v1512, %v1606
        %v1608 = vpop.f32.mrb[0].mxu0
        %v1609 = vpop.f32.mrb[0].mxu0
        %v1610 = vadd.f32 %v1512, %v1609
        %v1611 = vpop.f32.mrb[0].mxu0
        %1612 = vmatprep.mubr.bf16.mxu0 0
        %1613 = vmatmul.mubr.bf16.gmra.mrb[0].mxu0 %v1539
        %v1614 = vpop.f32.mrb[0].mxu0
        %v1615 = vadd.f32 %v1512, %v1614
        %v1616 = vpop.f32.mrb[0].mxu0
        %v1617 = vpop.f32.mrb[0].mxu0
        %v1618 = vadd.f32 %v1512, %v1617
        %v1619 = vpop.f32.mrb[0].mxu0
        %1620 = vmatprep.mubr.bf16.mxu0 0
        %1621 = vmatmul.mubr.bf16.gmra.mrb[0].mxu0 %v1542
        %v1622 = vpop.f32.mrb[0].mxu0
        %v1623 = vadd.f32 %v1512, %v1622
        %v1624 = vpop.f32.mrb[0].mxu0
        %v1625 = vpop.f32.mrb[0].mxu0
        %v1626 = vadd.f32 %v1512, %v1625
        %v1627 = vpop.f32.mrb[0].mxu0
        %1628 = vmatprep.mubr.bf16.mxu0 0
        %1629 = vmatmul.mubr.bf16.gmra.mrb[0].mxu0 %v1545
        %v1630 = vpop.f32.mrb[0].mxu0
        %v1631 = vadd.f32 %v1512, %v1630
        %v1632 = vpop.f32.mrb[0].mxu0
        %v1633 = vpop.f32.mrb[0].mxu0
        %v1634 = vadd.f32 %v1512, %v1633
        %v1635 = vpop.f32.mrb[0].mxu0
        %1636 = vmatprep.mubr.bf16.mxu0 0
        %1637 = vmatmul.mubr.bf16.gmra.mrb[0].mxu0 %v1548
        %v1638 = vpop.f32.mrb[0].mxu0
        %v1639 = vadd.f32 %v1512, %v1638
        %v1640 = vpop.f32.mrb[0].mxu0
        %v1641 = vpop.f32.mrb[0].mxu0
        %v1642 = vadd.f32 %v1512, %v1641
        %v1643 = vpop.f32.mrb[0].mxu0
        %1644 = vmatprep.mubr.bf16.mxu0 0
        %1645 = vmatmul.mubr.bf16.gmra.mrb[0].mxu0 %v1551
        %v1646 = vpop.f32.mrb[0].mxu0
        %v1647 = vadd.f32 %v1512, %v1646
        %v1648 = vpop.f32.mrb[0].mxu0
        %v1649 = vpop.f32.mrb[0].mxu0
        %v1650 = vadd.f32 %v1512, %v1649
        %v1651 = vpop.f32.mrb[0].mxu0
        %1652 = vdwg.mxu0
        %v1653 = vmax.f32 %v1591, 0.0
        %v1654 = vmax.f32 %v1594, 0.0
        %v1655 = vmax.f32 %v1599, 0.0
        %v1656 = vmax.f32 %v1602, 0.0
        %v1657 = vmax.f32 %v1607, 0.0
        %v1658 = vmax.f32 %v1610, 0.0
        %v1659 = vmax.f32 %v1615, 0.0
        %v1660 = vmax.f32 %v1618, 0.0
        %v1661 = vmax.f32 %v1623, 0.0
        %v1662 = vmax.f32 %v1626, 0.0
        %v1663 = vmax.f32 %v1631, 0.0
        %v1664 = vmax.f32 %v1634, 0.0
        %v1665 = vmax.f32 %v1639, 0.0
        %v1666 = vmax.f32 %v1642, 0.0
        %v1667 = vmax.f32 %v1647, 0.0
        %v1668 = vmax.f32 %v1650, 0.0
        %v1669 = vpack.c.bf16 %v1654, %v1653
        %v1670 = vpack.c.bf16 %v1656, %v1655
        %v1671 = vpack.c.bf16 %v1658, %v1657
        %v1672 = vpack.c.bf16 %v1660, %v1659
        %v1673 = vpack.c.bf16 %v1662, %v1661
        %v1674 = vpack.c.bf16 %v1664, %v1663
        %v1675 = vpack.c.bf16 %v1666, %v1665
        %v1676 = vpack.c.bf16 %v1668, %v1667
        %v1677 = vld [vmem:[%s14] sm:$0xf]
        %v1678 = vld [vmem:[%s14 + $0x4] sm:$0xf]
        %v1679 = vld [vmem:[%s14 + $0x8] sm:$0xf]
        %v1680 = vld [vmem:[%s14 + $0xc] sm:$0xf]
        %v1685 = vunpack.c.l.b16 %v1677
        %v1686 = vunpack.c.l.b16 %v1678
        %v1687 = vunpack.c.l.b16 %v1679
        %v1688 = vunpack.c.l.b16 %v1680
        %v1689 = vpack.c.b16 %v1686, %v1685
        %v1690 = vpack.c.b16 %v1688, %v1687
        %v1694 = vsel %vm1031, %v1669, 0
        %v1697 = vsel %vm1031, %v1670, 0
        %v1700 = vsel %vm1031, %v1671, 0
        %v1703 = vsel %vm1031, %v1672, 0
        %v1706 = vsel %vm1031, %v1673, 0
        %v1709 = vsel %vm1031, %v1674, 0
        %v1712 = vsel %vm1031, %v1675, 0
        %v1715 = vsel %vm1031, %v1676, 0
        %1717 = vmatprep.subr.bf16.mxu0 0
        %1718 = vmatpush1.bf16.msra.mxu0 %v1689
        %1719 = vmatprep.subr.bf16.mxu0 0
        %1720 = vmatpush1.bf16.msra.mxu0 %v1690
        %1721 = vmatprep.subr.bf16.mxu0 0
        %1722 = vmatpush1.bf16.msra.mxu0 0
        %1723 = vmatprep.subr.bf16.mxu0 0
        %1724 = vmatpush1.bf16.msra.mxu0 0
        %1725 = vmatprep.subr.bf16.mxu0 0
        %1726 = vmatpush1.bf16.msra.mxu0 0
        %1727 = vmatprep.subr.bf16.mxu0 0
        %1728 = vmatpush1.bf16.msra.mxu0 0
        %1729 = vmatprep.subr.bf16.mxu0 0
        %1730 = vmatpush1.bf16.msra.mxu0 0
        %1731 = vmatprep.subr.bf16.mxu0 0
        %1732 = vmatpush1.bf16.msra.mxu0 0
        %1733 = vmatprep.subr.bf16.mxu0 0
        %1734 = vmatpush1.bf16.msra.mxu0 0
        %1735 = vmatprep.subr.bf16.mxu0 0
        %1736 = vmatpush1.bf16.msra.mxu0 0
        %1737 = vmatprep.subr.bf16.mxu0 0
        %1738 = vmatpush1.bf16.msra.mxu0 0
        %1739 = vmatprep.subr.bf16.mxu0 0
        %1740 = vmatpush1.bf16.msra.mxu0 0
        %1741 = vmatprep.subr.bf16.mxu0 0
        %1742 = vmatpush1.bf16.msra.mxu0 0
        %1743 = vmatprep.subr.bf16.mxu0 0
        %1744 = vmatpush1.bf16.msra.mxu0 0
        %1745 = vmatprep.subr.bf16.mxu0 0
        %1746 = vmatpush1.bf16.msra.mxu0 0
        %1747 = vmatprep.subr.bf16.mxu0 0
        %1748 = vmatpush1.bf16.msra.mxu0 0
        %1749 = vmatprep.mubr.bf16.mxu0 0
        %1750 = vmatmul.mubr.bf16.gmra.mrb[0].mxu0 %v1694
        %v1751 = vpop.f32.mrb[0].mxu0
        %v1752 = vadd.f32 0.0, %v1751
        %v1753 = vpop.f32.mrb[0].mxu0
        %v1754 = vpop.f32.mrb[0].mxu0
        %v1755 = vadd.f32 0.0, %v1754
        %v1756 = vpop.f32.mrb[0].mxu0
        %1757 = vmatprep.mubr.bf16.mxu0 0
        %1758 = vmatmul.mubr.bf16.gmra.mrb[0].mxu0 %v1697
        %v1759 = vpop.f32.mrb[0].mxu0
        %v1760 = vadd.f32 0.0, %v1759
        %v1761 = vpop.f32.mrb[0].mxu0
        %v1762 = vpop.f32.mrb[0].mxu0
        %v1763 = vadd.f32 0.0, %v1762
        %v1764 = vpop.f32.mrb[0].mxu0
        %1765 = vmatprep.mubr.bf16.mxu0 0
        %1766 = vmatmul.mubr.bf16.gmra.mrb[0].mxu0 %v1700
        %v1767 = vpop.f32.mrb[0].mxu0
        %v1768 = vadd.f32 0.0, %v1767
        %v1769 = vpop.f32.mrb[0].mxu0
        %v1770 = vpop.f32.mrb[0].mxu0
        %v1771 = vadd.f32 0.0, %v1770
        %v1772 = vpop.f32.mrb[0].mxu0
        %1773 = vmatprep.mubr.bf16.mxu0 0
        %1774 = vmatmul.mubr.bf16.gmra.mrb[0].mxu0 %v1703
        %v1775 = vpop.f32.mrb[0].mxu0
        %v1776 = vadd.f32 0.0, %v1775
        %v1777 = vpop.f32.mrb[0].mxu0
        %v1778 = vpop.f32.mrb[0].mxu0
        %v1779 = vadd.f32 0.0, %v1778
        %v1780 = vpop.f32.mrb[0].mxu0
        %1781 = vmatprep.mubr.bf16.mxu0 0
        %1782 = vmatmul.mubr.bf16.gmra.mrb[0].mxu0 %v1706
        %v1783 = vpop.f32.mrb[0].mxu0
        %v1784 = vadd.f32 0.0, %v1783
        %v1785 = vpop.f32.mrb[0].mxu0
        %v1786 = vpop.f32.mrb[0].mxu0
        %v1787 = vadd.f32 0.0, %v1786
        %v1788 = vpop.f32.mrb[0].mxu0
        %1789 = vmatprep.mubr.bf16.mxu0 0
        %1790 = vmatmul.mubr.bf16.gmra.mrb[0].mxu0 %v1709
        %v1791 = vpop.f32.mrb[0].mxu0
        %v1792 = vadd.f32 0.0, %v1791
        %v1793 = vpop.f32.mrb[0].mxu0
        %v1794 = vpop.f32.mrb[0].mxu0
        %v1795 = vadd.f32 0.0, %v1794
        %v1796 = vpop.f32.mrb[0].mxu0
        %1797 = vmatprep.mubr.bf16.mxu0 0
        %1798 = vmatmul.mubr.bf16.gmra.mrb[0].mxu0 %v1712
        %v1799 = vpop.f32.mrb[0].mxu0
        %v1800 = vadd.f32 0.0, %v1799
        %v1801 = vpop.f32.mrb[0].mxu0
        %v1802 = vpop.f32.mrb[0].mxu0
        %v1803 = vadd.f32 0.0, %v1802
        %v1804 = vpop.f32.mrb[0].mxu0
        %1805 = vmatprep.mubr.bf16.mxu0 0
        %1806 = vmatmul.mubr.bf16.gmra.mrb[0].mxu0 %v1715
        %v1807 = vpop.f32.mrb[0].mxu0
        %v1808 = vadd.f32 0.0, %v1807
        %v1809 = vpop.f32.mrb[0].mxu0
        %v1810 = vpop.f32.mrb[0].mxu0
        %v1811 = vadd.f32 0.0, %v1810
        %v1812 = vpop.f32.mrb[0].mxu0
        %1813 = vdwg.mxu0
        %1815 = vset.pattern.permute.xlu0 0
        %1816 = vperm.xlu0 %1815, %v1752
        %v1817 = vpop.permute.xlu0 %1816
        %1820 = vset.pattern.permute.xlu0 0
        %1821 = vperm.xlu0 %1820, %v1755
        %v1822 = vpop.permute.xlu0 %1821
        %1825 = vset.pattern.permute.xlu0 0
        %1826 = vperm.xlu0 %1825, %v1760
        %v1827 = vpop.permute.xlu0 %1826
        %1830 = vset.pattern.permute.xlu0 0
        %1831 = vperm.xlu0 %1830, %v1763
        %v1832 = vpop.permute.xlu0 %1831
        %1835 = vset.pattern.permute.xlu0 0
        %1836 = vperm.xlu0 %1835, %v1768
        %v1837 = vpop.permute.xlu0 %1836
        %1840 = vset.pattern.permute.xlu0 0
        %1841 = vperm.xlu0 %1840, %v1771
        %v1842 = vpop.permute.xlu0 %1841
        %1845 = vset.pattern.permute.xlu0 0
        %1846 = vperm.xlu0 %1845, %v1776
        %v1847 = vpop.permute.xlu0 %1846
        %1850 = vset.pattern.permute.xlu0 0
        %1851 = vperm.xlu0 %1850, %v1779
        %v1852 = vpop.permute.xlu0 %1851
        %1855 = vset.pattern.permute.xlu0 0
        %1856 = vperm.xlu0 %1855, %v1784
        %v1857 = vpop.permute.xlu0 %1856
        %1860 = vset.pattern.permute.xlu0 0
        %1861 = vperm.xlu0 %1860, %v1787
        %v1862 = vpop.permute.xlu0 %1861
        %1865 = vset.pattern.permute.xlu0 0
        %1866 = vperm.xlu0 %1865, %v1792
        %v1867 = vpop.permute.xlu0 %1866
        %1870 = vset.pattern.permute.xlu0 0
        %1871 = vperm.xlu0 %1870, %v1795
        %v1872 = vpop.permute.xlu0 %1871
        %1875 = vset.pattern.permute.xlu0 0
        %1876 = vperm.xlu0 %1875, %v1800
        %v1877 = vpop.permute.xlu0 %1876
        %1880 = vset.pattern.permute.xlu0 0
        %1881 = vperm.xlu0 %1880, %v1803
        %v1882 = vpop.permute.xlu0 %1881
        %1885 = vset.pattern.permute.xlu0 0
        %1886 = vperm.xlu0 %1885, %v1808
        %v1887 = vpop.permute.xlu0 %1886
        %1890 = vset.pattern.permute.xlu0 0
        %1891 = vperm.xlu0 %1890, %v1811
        %v1892 = vpop.permute.xlu0 %1891
        %v1894 = vmul.f32 %v1156, %v1817
        %v1895 = vmul.f32 %v1157, %v1822
        %v1896 = vmul.f32 %v1158, %v1827
        %v1897 = vmul.f32 %v1159, %v1832
        %v1898 = vmul.f32 %v1160, %v1837
        %v1899 = vmul.f32 %v1161, %v1842
        %v1900 = vmul.f32 %v1162, %v1847
        %v1901 = vmul.f32 %v1163, %v1852
        %v1902 = vmul.f32 %v1164, %v1857
        %v1903 = vmul.f32 %v1165, %v1862
        %v1904 = vmul.f32 %v1166, %v1867
        %v1905 = vmul.f32 %v1167, %v1872
        %v1906 = vmul.f32 %v1168, %v1877
        %v1907 = vmul.f32 %v1169, %v1882
        %v1908 = vmul.f32 %v1170, %v1887
        %v1909 = vmul.f32 %v1171, %v1892
        %v1910 = vmax.f32 %v1894, -100.0
        %v1911 = vmax.f32 %v1895, -100.0
        %v1912 = vmax.f32 %v1896, -100.0
        %v1913 = vmax.f32 %v1897, -100.0
        %v1914 = vmax.f32 %v1898, -100.0
        %v1915 = vmax.f32 %v1899, -100.0
        %v1916 = vmax.f32 %v1900, -100.0
        %v1917 = vmax.f32 %v1901, -100.0
        %v1918 = vmax.f32 %v1902, -100.0
        %v1919 = vmax.f32 %v1903, -100.0
        %v1920 = vmax.f32 %v1904, -100.0
        %v1921 = vmax.f32 %v1905, -100.0
        %v1922 = vmax.f32 %v1906, -100.0
        %v1923 = vmax.f32 %v1907, -100.0
        %v1924 = vmax.f32 %v1908, -100.0
        %v1925 = vmax.f32 %v1909, -100.0
        %v1926 = vmin.f32 %v1910, 100.0
        %v1927 = vmin.f32 %v1911, 100.0
        %v1928 = vmin.f32 %v1912, 100.0
        %v1929 = vmin.f32 %v1913, 100.0
        %v1930 = vmin.f32 %v1914, 100.0
        %v1931 = vmin.f32 %v1915, 100.0
        %v1932 = vmin.f32 %v1916, 100.0
        %v1933 = vmin.f32 %v1917, 100.0
        %v1934 = vmin.f32 %v1918, 100.0
        %v1935 = vmin.f32 %v1919, 100.0
        %v1936 = vmin.f32 %v1920, 100.0
        %v1937 = vmin.f32 %v1921, 100.0
        %v1938 = vmin.f32 %v1922, 100.0
        %v1939 = vmin.f32 %v1923, 100.0
        %v1940 = vmin.f32 %v1924, 100.0
        %v1941 = vmin.f32 %v1925, 100.0
        %v1942 = vld [vmem:[%s788] sm:$0x1]
        %v1943 = vlaneseq
        %v1944 = vshrl.u32 %v1943, 7
        %v1945 = vadd.s32 %v1944, 8
        %v1946 = vlaneseq
        %v1947 = vshrl.u32 %v1946, 7
        %v1948 = vsub.s32 0, %v1947
        %v1949 = vrot.slane %v1942, %v1948
        %vm1950 = vcmp.eq.s32.totalorder %v1944, %v1949
        %vm1951 = vcmp.eq.s32.totalorder %v1945, %v1949
        %v1952 = vsel %vm1950, 1, 0
        %v1953 = vsel %vm1951, 1, 0
        %v1954 = vcvt.s32.f32 %v1952
        %v1955 = vcvt.s32.f32 %v1953
        %v1956 = vpack.c.bf16 %v1955, %v1954
        %v1957 = vadd.f32 %v1926, %v1478
        %v1958 = vadd.f32 %v1927, %v1479
        %v1959 = vadd.f32 %v1928, %v1480
        %v1960 = vadd.f32 %v1929, %v1481
        %v1961 = vadd.f32 %v1930, %v1482
        %v1962 = vadd.f32 %v1931, %v1483
        %v1963 = vadd.f32 %v1932, %v1484
        %v1964 = vadd.f32 %v1933, %v1485
        %v1965 = vadd.f32 %v1934, %v1486
        %v1966 = vadd.f32 %v1935, %v1487
        %v1967 = vadd.f32 %v1936, %v1488
        %v1968 = vadd.f32 %v1937, %v1489
        %v1969 = vadd.f32 %v1938, %v1490
        %v1970 = vadd.f32 %v1939, %v1491
        %v1971 = vadd.f32 %v1940, %v1492
        %v1972 = vadd.f32 %v1941, %v1493
        %v1973 = vpack.c.bf16 %v1958, %v1957
        %v1974 = vpack.c.bf16 %v1960, %v1959
        %v1975 = vpack.c.bf16 %v1962, %v1961
        %v1976 = vpack.c.bf16 %v1964, %v1963
        %v1977 = vpack.c.bf16 %v1966, %v1965
        %v1978 = vpack.c.bf16 %v1968, %v1967
        %v1979 = vpack.c.bf16 %v1970, %v1969
        %v1980 = vpack.c.bf16 %v1972, %v1971
        %v1981 = vld [vmem:[#allocation2] sm:$0xff]
        %v1982 = vld [vmem:[#allocation2 + $0x8] sm:$0xff]
        %1983 = vmatprep.subr.bf16.mxu0 0
        %1984 = vmatpush1.bf16.msra.mxu0 %v1973
        %1985 = vmatprep.subr.bf16.mxu0 0
        %1986 = vmatpush1.bf16.msra.mxu0 %v1974
        %1987 = vmatprep.subr.bf16.mxu0 0
        %1988 = vmatpush1.bf16.msra.mxu0 %v1975
        %1989 = vmatprep.subr.bf16.mxu0 0
        %1990 = vmatpush1.bf16.msra.mxu0 %v1976
        %1991 = vmatprep.subr.bf16.mxu0 0
        %1992 = vmatpush1.bf16.msra.mxu0 %v1977
        %1993 = vmatprep.subr.bf16.mxu0 0
        %1994 = vmatpush1.bf16.msra.mxu0 %v1978
        %1995 = vmatprep.subr.bf16.mxu0 0
        %1996 = vmatpush1.bf16.msra.mxu0 %v1979
        %1997 = vmatprep.subr.bf16.mxu0 0
        %1998 = vmatpush1.bf16.msra.mxu0 %v1980
        %1999 = vmatprep.subr.bf16.mxu0 0
        %2000 = vmatpush1.bf16.msra.mxu0 0
        %2001 = vmatprep.subr.bf16.mxu0 0
        %2002 = vmatpush1.bf16.msra.mxu0 0
        %2003 = vmatprep.subr.bf16.mxu0 0
        %2004 = vmatpush1.bf16.msra.mxu0 0
        %2005 = vmatprep.subr.bf16.mxu0 0
        %2006 = vmatpush1.bf16.msra.mxu0 0
        %2007 = vmatprep.subr.bf16.mxu0 0
        %2008 = vmatpush1.bf16.msra.mxu0 0
        %2009 = vmatprep.subr.bf16.mxu0 0
        %2010 = vmatpush1.bf16.msra.mxu0 0
        %2011 = vmatprep.subr.bf16.mxu0 0
        %2012 = vmatpush1.bf16.msra.mxu0 0
        %2013 = vmatprep.subr.bf16.mxu0 0
        %2014 = vmatpush1.bf16.msra.mxu0 0
        %2015 = vmatprep.mubr.bf16.mxu0 0
        %2016 = vmatmul.mubr.bf16.gmra.mrb[0].mxu0 %v1956
        %v2017 = vpop.f32.mrb[0].mxu0
        %v2018 = vadd.f32 0.0, %v2017
        %v2019 = vpop.f32.mrb[0].mxu0
        %v2020 = vpop.f32.mrb[0].mxu0
        %v2021 = vadd.f32 0.0, %v2020
        %v2022 = vpop.f32.mrb[0].mxu0
        %2023 = vdwg.mxu0
        %v2024 = vadd.f32 %v1981, %v2018
        %v2025 = vadd.f32 %v1982, %v2021
        %2026 = vst.msk [vmem:[#allocation2] sm:$0xff] %vm1188, %v2024
        %2027 = vst.msk [vmem:[#allocation2 + $0x8] sm:$0xff] %vm1188, %v2025
        %p2028 = scmp.eq.s32.totalorder %s40, 1
        // Predicated region
        $region121: #{e_gcl_vel_forward.1} parent=115 // pred_check
          %p2029 = pneg %p2028
        $region122: #{e_gcl_vel_forward.1} parent=115 // pred_check_branch
          %2031 = sbr.rel (%p2029) target = $region124
        $region123: #{e_gcl_vel_forward.1} parent=115 // pred_region
          %v2032 = vld [vmem:[#allocation2] sm:$0xff]
          %v2033 = vld [vmem:[#allocation2 + $0x8] sm:$0xff]
          %v2034 = vld [vmem:[%s4] sm:$0xff]
          %v2035 = vld [vmem:[%s4 + $0x8] sm:$0xff]
          %v2036 = vld [vmem:[%s15] sm:$0xff]
          %v2037 = vld [vmem:[%s15 + $0x8] sm:$0xff]
          %v2038 = vld [vmem:[%s15 + $0x10] sm:$0xff]
          %v2039 = vld [vmem:[%s15 + $0x18] sm:$0xff]
          %v2040 = vld [vmem:[%s16] sm:$0x1]
          %v2042 = vlaneseq
          %v2043 = vshrl.u32 %v2042, 7
          %v2044 = vsub.s32 0, %v2043
          %v2045 = vrot.slane %v2040, %v2044
          %v2048 = vsel %vm1031, %v2034, 0
          %v2051 = vsel %vm1031, %v2035, 0
          %2053 = vmatprep.subr.mxu0 0.0
          %2054 = vmatpush1.msra.mxu0 %v2036
          %2055 = vmatprep.subr.mxu0 0.0
          %2056 = vmatpush1.msra.mxu0 %v2037
          %2057 = vmatprep.subr.mxu0 0.0
          %2058 = vmatpush1.msra.mxu0 %v2038
          %2059 = vmatprep.subr.mxu0 0.0
          %2060 = vmatpush1.msra.mxu0 %v2039
          %2061 = vmatprep.subr.mxu0 0.0
          %2062 = vmatpush1.msra.mxu0 0.0
          %2063 = vmatprep.subr.mxu0 0.0
          %2064 = vmatpush1.msra.mxu0 0.0
          %2065 = vmatprep.subr.mxu0 0.0
          %2066 = vmatpush1.msra.mxu0 0.0
          %2067 = vmatprep.subr.mxu0 0.0
          %2068 = vmatpush1.msra.mxu0 0.0
          %2069 = vmatprep.subr.mxu0 0.0
          %2070 = vmatpush1.msra.mxu0 0.0
          %2071 = vmatprep.subr.mxu0 0.0
          %2072 = vmatpush1.msra.mxu0 0.0
          %2073 = vmatprep.subr.mxu0 0.0
          %2074 = vmatpush1.msra.mxu0 0.0
          %2075 = vmatprep.subr.mxu0 0.0
          %2076 = vmatpush1.msra.mxu0 0.0
          %2077 = vmatprep.subr.mxu0 0.0
          %2078 = vmatpush1.msra.mxu0 0.0
          %2079 = vmatprep.subr.mxu0 0.0
          %2080 = vmatpush1.msra.mxu0 0.0
          %2081 = vmatprep.subr.mxu0 0.0
          %2082 = vmatpush1.msra.mxu0 0.0
          %2083 = vmatprep.subr.mxu0 0.0
          %2084 = vmatpush1.msra.mxu0 0.0
          %2085 = vmatprep.subr.mxu0 0.0
          %2086 = vmatpush1.msra.mxu0 0.0
          %2087 = vmatprep.subr.mxu0 0.0
          %2088 = vmatpush1.msra.mxu0 0.0
          %2089 = vmatprep.subr.mxu0 0.0
          %2090 = vmatpush1.msra.mxu0 0.0
          %2091 = vmatprep.subr.mxu0 0.0
          %2092 = vmatpush1.msra.mxu0 0.0
          %2093 = vmatprep.subr.mxu0 0.0
          %2094 = vmatpush1.msra.mxu0 0.0
          %2095 = vmatprep.subr.mxu0 0.0
          %2096 = vmatpush1.msra.mxu0 0.0
          %2097 = vmatprep.subr.mxu0 0.0
          %2098 = vmatpush1.msra.mxu0 0.0
          %2099 = vmatprep.subr.mxu0 0.0
          %2100 = vmatpush1.msra.mxu0 0.0
          %2101 = vmatprep.subr.mxu0 0.0
          %2102 = vmatpush1.msra.mxu0 0.0
          %2103 = vmatprep.subr.mxu0 0.0
          %2104 = vmatpush1.msra.mxu0 0.0
          %2105 = vmatprep.subr.mxu0 0.0
          %2106 = vmatpush1.msra.mxu0 0.0
          %2107 = vmatprep.subr.mxu0 0.0
          %2108 = vmatpush1.msra.mxu0 0.0
          %2109 = vmatprep.subr.mxu0 0.0
          %2110 = vmatpush1.msra.mxu0 0.0
          %2111 = vmatprep.subr.mxu0 0.0
          %2112 = vmatpush1.msra.mxu0 0.0
          %2113 = vmatprep.subr.mxu0 0.0
          %2114 = vmatpush1.msra.mxu0 0.0
          %2115 = vmatprep.subr.mxu0 0.0
          %2116 = vmatpush1.msra.mxu0 0.0
          %2117 = vmatprep.mubr.f32.mxu0 0.0
          %2118 = vmatmul.mubr.f32.gmra.mrb[0].mxu0 %v2048
          %v2119 = vpop.f32.mrb[0].mxu0
          %v2120 = vadd.f32 %v2045, %v2119
          %v2121 = vpop.f32.mrb[0].mxu0
          %2122 = vmatprep.mubr.f32.mxu0 0.0
          %2123 = vmatmul.mubr.f32.gmra.mrb[0].mxu0 %v2051
          %v2124 = vpop.f32.mrb[0].mxu0
          %v2125 = vadd.f32 %v2045, %v2124
          %v2126 = vpop.f32.mrb[0].mxu0
          %2127 = vdwg.mxu0
          %v2128 = vmax.f32 %v2120, 0.0
          %v2129 = vmax.f32 %v2125, 0.0
          %v2130 = vld [vmem:[%s17] sm:$0xff]
          %v2131 = vld [vmem:[%s17 + $0x8] sm:$0xff]
          %v2132 = vld [vmem:[%s17 + $0x10] sm:$0xff]
          %v2133 = vld [vmem:[%s17 + $0x18] sm:$0xff]
          %v2134 = vld [vmem:[#allocation3] sm:$0x1]
          %v2136 = vlaneseq
          %v2137 = vshrl.u32 %v2136, 7
          %v2138 = vsub.s32 0, %v2137
          %v2139 = vrot.slane %v2134, %v2138
          %v2142 = vsel %vm1031, %v2128, 0
          %v2145 = vsel %vm1031, %v2129, 0
          %2147 = vmatprep.subr.mxu0 0.0
          %2148 = vmatpush1.msra.mxu0 %v2130
          %2149 = vmatprep.subr.mxu0 0.0
          %2150 = vmatpush1.msra.mxu0 %v2131
          %2151 = vmatprep.subr.mxu0 0.0
          %2152 = vmatpush1.msra.mxu0 %v2132
          %2153 = vmatprep.subr.mxu0 0.0
          %2154 = vmatpush1.msra.mxu0 %v2133
          %2155 = vmatprep.subr.mxu0 0.0
          %2156 = vmatpush1.msra.mxu0 0.0
          %2157 = vmatprep.subr.mxu0 0.0
          %2158 = vmatpush1.msra.mxu0 0.0
          %2159 = vmatprep.subr.mxu0 0.0
          %2160 = vmatpush1.msra.mxu0 0.0
          %2161 = vmatprep.subr.mxu0 0.0
          %2162 = vmatpush1.msra.mxu0 0.0
          %2163 = vmatprep.subr.mxu0 0.0
          %2164 = vmatpush1.msra.mxu0 0.0
          %2165 = vmatprep.subr.mxu0 0.0
          %2166 = vmatpush1.msra.mxu0 0.0
          %2167 = vmatprep.subr.mxu0 0.0
          %2168 = vmatpush1.msra.mxu0 0.0
          %2169 = vmatprep.subr.mxu0 0.0
          %2170 = vmatpush1.msra.mxu0 0.0
          %2171 = vmatprep.subr.mxu0 0.0
          %2172 = vmatpush1.msra.mxu0 0.0
          %2173 = vmatprep.subr.mxu0 0.0
          %2174 = vmatpush1.msra.mxu0 0.0
          %2175 = vmatprep.subr.mxu0 0.0
          %2176 = vmatpush1.msra.mxu0 0.0
          %2177 = vmatprep.subr.mxu0 0.0
          %2178 = vmatpush1.msra.mxu0 0.0
          %2179 = vmatprep.subr.mxu0 0.0
          %2180 = vmatpush1.msra.mxu0 0.0
          %2181 = vmatprep.subr.mxu0 0.0
          %2182 = vmatpush1.msra.mxu0 0.0
          %2183 = vmatprep.subr.mxu0 0.0
          %2184 = vmatpush1.msra.mxu0 0.0
          %2185 = vmatprep.subr.mxu0 0.0
          %2186 = vmatpush1.msra.mxu0 0.0
          %2187 = vmatprep.subr.mxu0 0.0
          %2188 = vmatpush1.msra.mxu0 0.0
          %2189 = vmatprep.subr.mxu0 0.0
          %2190 = vmatpush1.msra.mxu0 0.0
          %2191 = vmatprep.subr.mxu0 0.0
          %2192 = vmatpush1.msra.mxu0 0.0
          %2193 = vmatprep.subr.mxu0 0.0
          %2194 = vmatpush1.msra.mxu0 0.0
          %2195 = vmatprep.subr.mxu0 0.0
          %2196 = vmatpush1.msra.mxu0 0.0
          %2197 = vmatprep.subr.mxu0 0.0
          %2198 = vmatpush1.msra.mxu0 0.0
          %2199 = vmatprep.subr.mxu0 0.0
          %2200 = vmatpush1.msra.mxu0 0.0
          %2201 = vmatprep.subr.mxu0 0.0
          %2202 = vmatpush1.msra.mxu0 0.0
          %2203 = vmatprep.subr.mxu0 0.0
          %2204 = vmatpush1.msra.mxu0 0.0
          %2205 = vmatprep.subr.mxu0 0.0
          %2206 = vmatpush1.msra.mxu0 0.0
          %2207 = vmatprep.subr.mxu0 0.0
          %2208 = vmatpush1.msra.mxu0 0.0
          %2209 = vmatprep.subr.mxu0 0.0
          %2210 = vmatpush1.msra.mxu0 0.0
          %2211 = vmatprep.mubr.f32.mxu0 0.0
          %2212 = vmatmul.mubr.f32.gmra.mrb[0].mxu0 %v2142
          %v2213 = vpop.f32.mrb[0].mxu0
          %v2214 = vadd.f32 %v2139, %v2213
          %v2215 = vpop.f32.mrb[0].mxu0
          %2216 = vmatprep.mubr.f32.mxu0 0.0
          %2217 = vmatmul.mubr.f32.gmra.mrb[0].mxu0 %v2145
          %v2218 = vpop.f32.mrb[0].mxu0
          %v2219 = vadd.f32 %v2139, %v2218
          %v2220 = vpop.f32.mrb[0].mxu0
          %2221 = vdwg.mxu0
          %v2222 = vld [vmem:[%s5] sm:$0xff]
          %v2223 = vld [vmem:[%s5 + $0x8] sm:$0xff]
          %v2224 = vmul.f32 %v2032, %v1155
          %v2225 = vmul.f32 %v2033, %v1155
          %v2226 = vld [vmem:[%s7] sm:$0xff]
          %v2227 = vld [vmem:[%s7 + $0x8] sm:$0xff]
          %2229 = vset.pattern.permute.xlu0 0
          %2230 = vperm.xlu0 %2229, %v2226
          %v2231 = vpop.permute.xlu0 %2230
          %2234 = vset.pattern.permute.xlu0 0
          %2235 = vperm.xlu0 %2234, %v2227
          %v2236 = vpop.permute.xlu0 %2235
          %v2238 = vmul.f32 %v2224, %v2231
          %v2239 = vmul.f32 %v2225, %v2236
          %v2240 = vadd.f32 %v2222, %v2238
          %v2241 = vadd.f32 %v2223, %v2239
          %v2242 = vld [vmem:[%s6] sm:$0xff]
          %v2243 = vld [vmem:[%s6 + $0x8] sm:$0xff]
          %2245 = vset.pattern.permute.xlu0 0
          %2246 = vperm.xlu0 %2245, %v2214
          %v2247 = vpop.permute.xlu0 %2246
          %2250 = vset.pattern.permute.xlu0 0
          %2251 = vperm.xlu0 %2250, %v2219
          %v2252 = vpop.permute.xlu0 %2251
          %v2254 = vmul.f32 %v2242, %v2247
          %v2255 = vmul.f32 %v2243, %v2252
          %v2256 = vadd.f32 %v2240, %v2254
          %v2257 = vadd.f32 %v2241, %v2255
          %2258 = vst.msk [vmem:[%s25] sm:$0xff] %vm1188, %v2256
          %2259 = vst.msk [vmem:[%s25 + $0x8] sm:$0xff] %vm1188, %v2257
          %v2260 = vld [vmem:[%s19] sm:$0xff]
          %v2261 = vld [vmem:[%s19 + $0x8] sm:$0xff]
          %v2262 = vld [vmem:[%s19 + $0x10] sm:$0xff]
          %v2263 = vld [vmem:[%s19 + $0x18] sm:$0xff]
          %v2264 = vld [vmem:[%s20] sm:$0xff]
          %v2265 = vld [vmem:[%s20 + $0x8] sm:$0xff]
          %v2266 = vld [vmem:[%s20 + $0x10] sm:$0xff]
          %v2267 = vld [vmem:[%s20 + $0x18] sm:$0xff]
          %v2268 = vld [vmem:[%s20 + $0x20] sm:$0x7]
          %v2270 = vsel %vm1188, %v2032, 0
          %v2273 = vsel %vm1188, %v2033, 0
          %vm2275 = vcmask 1042432
          %v2277 = vsel %vm2275, %v2268, 0
          %2279 = vmatprep.subr.mxu0 0.0
          %2280 = vmatpush1.msra.mxu0 %v2264
          %2281 = vmatprep.subr.mxu0 0.0
          %2282 = vmatpush1.msra.mxu0 %v2265
          %2283 = vmatprep.subr.mxu0 0.0
          %2284 = vmatpush1.msra.mxu0 %v2266
          %2285 = vmatprep.subr.mxu0 0.0
          %2286 = vmatpush1.msra.mxu0 %v2267
          %2287 = vmatprep.subr.mxu0 0.0
          %2288 = vmatpush1.msra.mxu0 %v2277
          %2289 = vmatprep.subr.mxu0 0.0
          %2290 = vmatpush1.msra.mxu0 0.0
          %2291 = vmatprep.subr.mxu0 0.0
          %2292 = vmatpush1.msra.mxu0 0.0
          %2293 = vmatprep.subr.mxu0 0.0
          %2294 = vmatpush1.msra.mxu0 0.0
          %2295 = vmatprep.subr.mxu0 0.0
          %2296 = vmatpush1.msra.mxu0 0.0
          %2297 = vmatprep.subr.mxu0 0.0
          %2298 = vmatpush1.msra.mxu0 0.0
          %2299 = vmatprep.subr.mxu0 0.0
          %2300 = vmatpush1.msra.mxu0 0.0
          %2301 = vmatprep.subr.mxu0 0.0
          %2302 = vmatpush1.msra.mxu0 0.0
          %2303 = vmatprep.subr.mxu0 0.0
          %2304 = vmatpush1.msra.mxu0 0.0
          %2305 = vmatprep.subr.mxu0 0.0
          %2306 = vmatpush1.msra.mxu0 0.0
          %2307 = vmatprep.subr.mxu0 0.0
          %2308 = vmatpush1.msra.mxu0 0.0
          %2309 = vmatprep.subr.mxu0 0.0
          %2310 = vmatpush1.msra.mxu0 0.0
          %2311 = vmatprep.subr.mxu0 0.0
          %2312 = vmatpush1.msra.mxu0 0.0
          %2313 = vmatprep.subr.mxu0 0.0
          %2314 = vmatpush1.msra.mxu0 0.0
          %2315 = vmatprep.subr.mxu0 0.0
          %2316 = vmatpush1.msra.mxu0 0.0
          %2317 = vmatprep.subr.mxu0 0.0
          %2318 = vmatpush1.msra.mxu0 0.0
          %2319 = vmatprep.subr.mxu0 0.0
          %2320 = vmatpush1.msra.mxu0 0.0
          %2321 = vmatprep.subr.mxu0 0.0
          %2322 = vmatpush1.msra.mxu0 0.0
          %2323 = vmatprep.subr.mxu0 0.0
          %2324 = vmatpush1.msra.mxu0 0.0
          %2325 = vmatprep.subr.mxu0 0.0
          %2326 = vmatpush1.msra.mxu0 0.0
          %2327 = vmatprep.subr.mxu0 0.0
          %2328 = vmatpush1.msra.mxu0 0.0
          %2329 = vmatprep.subr.mxu0 0.0
          %2330 = vmatpush1.msra.mxu0 0.0
          %2331 = vmatprep.subr.mxu0 0.0
          %2332 = vmatpush1.msra.mxu0 0.0
          %2333 = vmatprep.subr.mxu0 0.0
          %2334 = vmatpush1.msra.mxu0 0.0
          %2335 = vmatprep.subr.mxu0 0.0
          %2336 = vmatpush1.msra.mxu0 0.0
          %2337 = vmatprep.subr.mxu0 0.0
          %2338 = vmatpush1.msra.mxu0 0.0
          %2339 = vmatprep.subr.mxu0 0.0
          %2340 = vmatpush1.msra.mxu0 0.0
          %2341 = vmatprep.subr.mxu0 0.0
          %2342 = vmatpush1.msra.mxu0 0.0
          %2343 = vmatprep.mubr.f32.mxu0 0.0
          %2344 = vmatmul.mubr.f32.gmra.mrb[0].mxu0 %v2270
          %v2345 = vpop.f32.mrb[0].mxu0
          %v2346 = vadd.f32 0.0, %v2345
          %v2347 = vpop.f32.mrb[0].mxu0
          %2348 = vmatprep.mubr.f32.mxu0 0.0
          %2349 = vmatmul.mubr.f32.gmra.mrb[0].mxu0 %v2273
          %v2350 = vpop.f32.mrb[0].mxu0
          %v2351 = vadd.f32 0.0, %v2350
          %v2352 = vpop.f32.mrb[0].mxu0
          %2353 = vdwg.mxu0
          %2354 = vmatprep.subr.mxu0 0.0
          %2355 = vmatpush1.msra.mxu0 %v2260
          %2356 = vmatprep.subr.mxu0 0.0
          %2357 = vmatpush1.msra.mxu0 %v2261
          %2358 = vmatprep.subr.mxu0 0.0
          %2359 = vmatpush1.msra.mxu0 %v2262
          %2360 = vmatprep.subr.mxu0 0.0
          %2361 = vmatpush1.msra.mxu0 %v2263
          %2362 = vmatprep.subr.mxu0 0.0
          %2363 = vmatpush1.msra.mxu0 0.0
          %2364 = vmatprep.subr.mxu0 0.0
          %2365 = vmatpush1.msra.mxu0 0.0
          %2366 = vmatprep.subr.mxu0 0.0
          %2367 = vmatpush1.msra.mxu0 0.0
          %2368 = vmatprep.subr.mxu0 0.0
          %2369 = vmatpush1.msra.mxu0 0.0
          %2370 = vmatprep.subr.mxu0 0.0
          %2371 = vmatpush1.msra.mxu0 0.0
          %2372 = vmatprep.subr.mxu0 0.0
          %2373 = vmatpush1.msra.mxu0 0.0
          %2374 = vmatprep.subr.mxu0 0.0
          %2375 = vmatpush1.msra.mxu0 0.0
          %2376 = vmatprep.subr.mxu0 0.0
          %2377 = vmatpush1.msra.mxu0 0.0
          %2378 = vmatprep.subr.mxu0 0.0
          %2379 = vmatpush1.msra.mxu0 0.0
          %2380 = vmatprep.subr.mxu0 0.0
          %2381 = vmatpush1.msra.mxu0 0.0
          %2382 = vmatprep.subr.mxu0 0.0
          %2383 = vmatpush1.msra.mxu0 0.0
          %2384 = vmatprep.subr.mxu0 0.0
          %2385 = vmatpush1.msra.mxu0 0.0
          %2386 = vmatprep.subr.mxu0 0.0
          %2387 = vmatpush1.msra.mxu0 0.0
          %2388 = vmatprep.subr.mxu0 0.0
          %2389 = vmatpush1.msra.mxu0 0.0
          %2390 = vmatprep.subr.mxu0 0.0
          %2391 = vmatpush1.msra.mxu0 0.0
          %2392 = vmatprep.subr.mxu0 0.0
          %2393 = vmatpush1.msra.mxu0 0.0
          %2394 = vmatprep.subr.mxu0 0.0
          %2395 = vmatpush1.msra.mxu0 0.0
          %2396 = vmatprep.subr.mxu0 0.0
          %2397 = vmatpush1.msra.mxu0 0.0
          %2398 = vmatprep.subr.mxu0 0.0
          %2399 = vmatpush1.msra.mxu0 0.0
          %2400 = vmatprep.subr.mxu0 0.0
          %2401 = vmatpush1.msra.mxu0 0.0
          %2402 = vmatprep.subr.mxu0 0.0
          %2403 = vmatpush1.msra.mxu0 0.0
          %2404 = vmatprep.subr.mxu0 0.0
          %2405 = vmatpush1.msra.mxu0 0.0
          %2406 = vmatprep.subr.mxu0 0.0
          %2407 = vmatpush1.msra.mxu0 0.0
          %2408 = vmatprep.subr.mxu0 0.0
          %2409 = vmatpush1.msra.mxu0 0.0
          %2410 = vmatprep.subr.mxu0 0.0
          %2411 = vmatpush1.msra.mxu0 0.0
          %2412 = vmatprep.subr.mxu0 0.0
          %2413 = vmatpush1.msra.mxu0 0.0
          %2414 = vmatprep.subr.mxu0 0.0
          %2415 = vmatpush1.msra.mxu0 0.0
          %2416 = vmatprep.subr.mxu0 0.0
          %2417 = vmatpush1.msra.mxu0 0.0
          %2418 = vmatprep.mubr.f32.mxu0 0.0
          %2419 = vmatmul.mubr.f32.gmra.mrb[0].mxu0 %v2048
          %v2420 = vpop.f32.mrb[0].mxu0
          %v2421 = vadd.f32 %v2346, %v2420
          %v2422 = vpop.f32.mrb[0].mxu0
          %2423 = vmatprep.mubr.f32.mxu0 0.0
          %2424 = vmatmul.mubr.f32.gmra.mrb[0].mxu0 %v2051
          %v2425 = vpop.f32.mrb[0].mxu0
          %v2426 = vadd.f32 %v2351, %v2425
          %v2427 = vpop.f32.mrb[0].mxu0
          %2428 = vdwg.mxu0
          %v2429 = vld [vmem:[%s21] sm:$0x1]
          %v2431 = vlaneseq
          %v2432 = vshrl.u32 %v2431, 7
          %v2433 = vsub.s32 0, %v2432
          %v2434 = vrot.slane %v2429, %v2433
          %v2436 = vadd.f32 %v2421, %v2434
          %v2437 = vadd.f32 %v2426, %v2434
          %v2438 = vmax.f32 %v2436, 0.0
          %v2439 = vmax.f32 %v2437, 0.0
          %v2440 = vld [vmem:[%s22] sm:$0xff]
          %v2441 = vld [vmem:[%s22 + $0x8] sm:$0xff]
          %v2442 = vld [vmem:[%s22 + $0x10] sm:$0xff]
          %v2443 = vld [vmem:[%s22 + $0x18] sm:$0xff]
          %v2445 = vsel %vm1031, %v2438, 0
          %v2448 = vsel %vm1031, %v2439, 0
          %2450 = vmatprep.subr.mxu0 0.0
          %2451 = vmatpush1.msra.mxu0 %v2440
          %2452 = vmatprep.subr.mxu0 0.0
          %2453 = vmatpush1.msra.mxu0 %v2441
          %2454 = vmatprep.subr.mxu0 0.0
          %2455 = vmatpush1.msra.mxu0 %v2442
          %2456 = vmatprep.subr.mxu0 0.0
          %2457 = vmatpush1.msra.mxu0 %v2443
          %2458 = vmatprep.subr.mxu0 0.0
          %2459 = vmatpush1.msra.mxu0 0.0
          %2460 = vmatprep.subr.mxu0 0.0
          %2461 = vmatpush1.msra.mxu0 0.0
          %2462 = vmatprep.subr.mxu0 0.0
          %2463 = vmatpush1.msra.mxu0 0.0
          %2464 = vmatprep.subr.mxu0 0.0
          %2465 = vmatpush1.msra.mxu0 0.0
          %2466 = vmatprep.subr.mxu0 0.0
          %2467 = vmatpush1.msra.mxu0 0.0
          %2468 = vmatprep.subr.mxu0 0.0
          %2469 = vmatpush1.msra.mxu0 0.0
          %2470 = vmatprep.subr.mxu0 0.0
          %2471 = vmatpush1.msra.mxu0 0.0
          %2472 = vmatprep.subr.mxu0 0.0
          %2473 = vmatpush1.msra.mxu0 0.0
          %2474 = vmatprep.subr.mxu0 0.0
          %2475 = vmatpush1.msra.mxu0 0.0
          %2476 = vmatprep.subr.mxu0 0.0
          %2477 = vmatpush1.msra.mxu0 0.0
          %2478 = vmatprep.subr.mxu0 0.0
          %2479 = vmatpush1.msra.mxu0 0.0
          %2480 = vmatprep.subr.mxu0 0.0
          %2481 = vmatpush1.msra.mxu0 0.0
          %2482 = vmatprep.subr.mxu0 0.0
          %2483 = vmatpush1.msra.mxu0 0.0
          %2484 = vmatprep.subr.mxu0 0.0
          %2485 = vmatpush1.msra.mxu0 0.0
          %2486 = vmatprep.subr.mxu0 0.0
          %2487 = vmatpush1.msra.mxu0 0.0
          %2488 = vmatprep.subr.mxu0 0.0
          %2489 = vmatpush1.msra.mxu0 0.0
          %2490 = vmatprep.subr.mxu0 0.0
          %2491 = vmatpush1.msra.mxu0 0.0
          %2492 = vmatprep.subr.mxu0 0.0
          %2493 = vmatpush1.msra.mxu0 0.0
          %2494 = vmatprep.subr.mxu0 0.0
          %2495 = vmatpush1.msra.mxu0 0.0
          %2496 = vmatprep.subr.mxu0 0.0
          %2497 = vmatpush1.msra.mxu0 0.0
          %2498 = vmatprep.subr.mxu0 0.0
          %2499 = vmatpush1.msra.mxu0 0.0
          %2500 = vmatprep.subr.mxu0 0.0
          %2501 = vmatpush1.msra.mxu0 0.0
          %2502 = vmatprep.subr.mxu0 0.0
          %2503 = vmatpush1.msra.mxu0 0.0
          %2504 = vmatprep.subr.mxu0 0.0
          %2505 = vmatpush1.msra.mxu0 0.0
          %2506 = vmatprep.subr.mxu0 0.0
          %2507 = vmatpush1.msra.mxu0 0.0
          %2508 = vmatprep.subr.mxu0 0.0
          %2509 = vmatpush1.msra.mxu0 0.0
          %2510 = vmatprep.subr.mxu0 0.0
          %2511 = vmatpush1.msra.mxu0 0.0
          %2512 = vmatprep.subr.mxu0 0.0
          %2513 = vmatpush1.msra.mxu0 0.0
          %2514 = vmatprep.mubr.f32.mxu0 0.0
          %2515 = vmatmul.mubr.f32.gmra.mrb[0].mxu0 %v2445
          %v2516 = vpop.f32.mrb[0].mxu0
          %v2517 = vadd.f32 0.0, %v2516
          %v2518 = vpop.f32.mrb[0].mxu0
          %2519 = vmatprep.mubr.f32.mxu0 0.0
          %2520 = vmatmul.mubr.f32.gmra.mrb[0].mxu0 %v2448
          %v2521 = vpop.f32.mrb[0].mxu0
          %v2522 = vadd.f32 0.0, %v2521
          %v2523 = vpop.f32.mrb[0].mxu0
          %2524 = vdwg.mxu0
          %v2525 = vadd.f32 %v2034, %v2517
          %v2526 = vadd.f32 %v2035, %v2522
          %v2527 = vld [vmem:[%s23] sm:$0x1]
          %v2529 = vlaneseq
          %v2530 = vshrl.u32 %v2529, 7
          %v2531 = vsub.s32 0, %v2530
          %v2532 = vrot.slane %v2527, %v2531
          %v2534 = vadd.f32 %v2525, %v2532
          %v2535 = vadd.f32 %v2526, %v2532
          %2536 = vst.msk [vmem:[#allocation4] sm:$0xff] %vm1031, %v2534
          %2537 = vst.msk [vmem:[#allocation4 + $0x8] sm:$0xff] %vm1031, %v2535
        $region124: #{e_gcl_vel_forward.1} parent=115 // pred_fallthru
          _
        // Predicated region
        $region125: #{e_gcl_vel_forward.1} parent=115 // pred_check
          %p2538 = pneg %p572
        $region126: #{e_gcl_vel_forward.1} parent=115 // pred_check_branch
          %2540 = sbr.rel (%p2538) target = $region128
        $region127: #{e_gcl_vel_forward.1} parent=115 // pred_region
          %s2542 = ssub.s32 256, 256
          %2543 = vsyncadd [#allocation5], %s2542
          %s2544 = sshll.u32 [#allocation4], 4
          %s2545 = int_to_ptr.vmem [resolvable:$true] %s2544
          %2550 = dma.vmem_to_hbm [thread:$0]  %s2545, 256, %s24, [#allocation5], 128, 128, 8
        $region128: #{e_gcl_vel_forward.1} parent=115 // pred_fallthru
          _
        // Predicated region
        $region129: #{e_gcl_vel_forward.1} parent=115 // pred_check
          %p2551 = pneg %p593
        $region130: #{e_gcl_vel_forward.1} parent=115 // pred_check_branch
          %2553 = sbr.rel (%p2551) target = $region132
        $region131: #{e_gcl_vel_forward.1} parent=115 // pred_region
          _
        $region132: #{e_gcl_vel_forward.1} parent=115 // pred_fallthru
          _
        // Predicated region
        $region133: #{e_gcl_vel_forward.1} parent=115 // pred_check
          %p2554 = pneg %p572
        $region134: #{e_gcl_vel_forward.1} parent=115 // pred_check_branch
          %2556 = sbr.rel (%p2554) target = $region136
        $region135: #{e_gcl_vel_forward.1} parent=115 // pred_region
          %2557 = dma.done [#allocation5], 256
        $region136: #{e_gcl_vel_forward.1} parent=115 // pred_fallthru
          _
        // Predicated region
        $region137: #{e_gcl_vel_forward.1} parent=115 // pred_check
          %p2558 = pneg %p593
        $region138: #{e_gcl_vel_forward.1} parent=115 // pred_check_branch
          %2560 = sbr.rel (%p2558) target = $region140
        $region139: #{e_gcl_vel_forward.1} parent=115 // pred_region
          _
        $region140: #{e_gcl_vel_forward.1} parent=115 // pred_fallthru
          _
      $region116: #{e_gcl_vel_forward.1} parent=5 // pred_fallthru
        _
      %p2561 = scmp.le.s32.totalorder 2, %s35
      // Predicated region
      $region141: #{e_gcl_vel_forward.1} parent=5 // pred_check
        %p2562 = pneg %p2561
      $region142: #{e_gcl_vel_forward.1} parent=5 // pred_check_branch
        %2564 = sbr.rel (%p2562) target = $region144
      $region143: #{e_gcl_vel_forward.1} parent=5 // pred_region
        %s2565 = ssub.s32 %s35, 2
      $region144: #{e_gcl_vel_forward.1} parent=5 // pred_fallthru
        _
    $region6: #{e_gcl_vel_forward.1} parent=1 // loop_footer
      %s39 = sadd.s32 1, %s35
    $region7: #{e_gcl_vel_forward.1} parent=1 // loop_footer_branch
      %34 = sbr.rel target = $region3
    $region8: #{e_gcl_vel_forward.1} parent=1 // loop_exit
      _
    %2566 = vsyncpa [#allocation5], 1
    %s2567 = scalar_lea.sflag [#allocation5], 1
    %2568 = vsyncpa %s2567, 1

</llo_original>
